<compile_context>
chip_gen: v7x
topology: tpu7x:2x2x1
jax: 0.10.0
libtpu: 0.0.40
codegen_flags: <defaults>
</compile_context>

<pallas_src>
import functools

import jax
import jax.numpy as jnp
from jax.experimental import pallas as pl
from jax.experimental.pallas import tpu as pltpu

# ----------------------------- model hyper-params (small, runnable) -----------------
VOCAB_SIZE = 65
VOCAB_PAD = 128          # LM-head output padded to a full vreg lane width
NUM_EMBEDDINGS = 128     # n_embd (384 in the original; shrunk for a small demo run)
NUM_HEADS = 4            # head_size = 128 // 4 = 32
NUM_LAYERS = 2
BLOCK_SIZE = 32          # max context length (multiple of 8)
HEAD_SIZE = NUM_EMBEDDINGS // NUM_HEADS


# ----------------------------- kernel helpers ---------------------------------------
def _layernorm(x, g, b):
    # x: (M, C) f32; g/b: (1, C) f32. Biased variance, eps=1e-5 (matches nn.LayerNorm).
    mean = jnp.mean(x, axis=-1, keepdims=True)
    var = jnp.mean((x - mean) ** 2, axis=-1, keepdims=True)
    return (x - mean) * jax.lax.rsqrt(var + 1e-5) * g + b


# ----------------------------- fused forward kernel ---------------------------------
def _xpt_fused_kernel(x_ref, pos_ref,
                      ln1g_ref, ln1b_ref, wqkv_ref,
                      ln2g_ref, ln2b_ref, w1_ref, b1_ref, w2_ref, b2_ref,
                      lnfg_ref, lnfb_ref, lmw_ref, lmb_ref,
                      o_ref, *, num_heads, num_layers):
    xb = x_ref[...]                                      # (Bblk, T, C) f32
    Bblk, T, C = xb.shape
    hs = C // num_heads

    # token + positional embedding, then row-stack the batch block for all matmuls.
    x = (xb + pos_ref[...][None, :, :]).reshape(Bblk * T, C)     # (M, C) f32

    row = jax.lax.broadcasted_iota(jnp.int32, (T, T), 0)
    col = jax.lax.broadcasted_iota(jnp.int32, (T, T), 1)
    causal = (col <= row)[None, :, :]                    # (1, T, T), broadcast over heads
    scale = hs ** -0.5

    for l in range(num_layers):                          # static unroll; weights resident
        # ---------------- x = x + MultiHeadAttention(LN1(x)) ----------------
        xn = _layernorm(x, ln1g_ref[l], ln1b_ref[l])
        # One lane-dense (M, 3C) matmul for Q, K, V of all heads (bf16 in, f32 acc).
        qkv = jnp.dot(xn.astype(jnp.bfloat16), wqkv_ref[l],
                      preferred_element_type=jnp.float32)         # (M, 3C) f32

        sa_parts = []
        for b in range(Bblk):                            # static per-sample loop (small)
            qkv_b = qkv[b * T:(b + 1) * T]               # (T, 3C)
            # heads -> leading batch axis: (H, T, hs)
            q = jnp.stack([qkv_b[:, h * hs:(h + 1) * hs]
                           for h in range(num_heads)], axis=0)
            k = jnp.stack([qkv_b[:, C + h * hs:C + (h + 1) * hs]
                           for h in range(num_heads)], axis=0)
            v = jnp.stack([qkv_b[:, 2 * C + h * hs:2 * C + (h + 1) * hs]
                           for h in range(num_heads)], axis=0)
            # Batched NT-form dots: contract over hs, no explicit k.T, one push per batch.
            s = jnp.einsum("htd,hsd->hts",
                           q.astype(jnp.bfloat16), k.astype(jnp.bfloat16),
                           preferred_element_type=jnp.float32) * scale     # (H, T, T) f32
            s = jnp.where(causal, s, -1e30)              # causal mask (finite, NaN-safe)
            p = jax.nn.softmax(s, axis=-1)               # f32 statistics
            o = jnp.einsum("hts,hsd->htd",
                           p.astype(jnp.bfloat16), v.astype(jnp.bfloat16),
                           preferred_element_type=jnp.float32)             # (H, T, hs)
            # torch.cat(heads, dim=-1): heads concatenated back onto the lane dim.
            sa_parts.append(jnp.concatenate([o[h] for h in range(num_heads)], axis=-1))
        sa = sa_parts[0] if Bblk == 1 else jnp.concatenate(sa_parts, axis=0)   # (M, C)

        # NOTE: reference MultiHeadAttention.forward never applies its output projection
        # (self.ln); dropout is identity in eval -> direct residual add.
        x = x + sa

        # ---------------- x = x + FeedForward(LN2(x)) ----------------
        xn2 = _layernorm(x, ln2g_ref[l], ln2b_ref[l])
        h1 = jnp.dot(xn2.astype(jnp.bfloat16), w1_ref[l],
                     preferred_element_type=jnp.float32) + b1_ref[l]
        h1 = jnp.maximum(h1, 0.0)                        # ReLU (f32)
        h2 = jnp.dot(h1.astype(jnp.bfloat16), w2_ref[l],
                     preferred_element_type=jnp.float32) + b2_ref[l]
        x = x + h2

    # ---------------- final LayerNorm + LM head (vocab padded to 128 lanes) ----------
    xn = _layernorm(x, lnfg_ref[...], lnfb_ref[...])
    logits = jnp.dot(xn.astype(jnp.bfloat16), lmw_ref[...],
                     preferred_element_type=jnp.float32) + lmb_ref[...]    # (M, 128)
    o_ref[...] = logits.reshape(o_ref.shape)             # lane-dense 128-wide store


# ----------------------------- wrapper -----------------------------------------------
def _resident_spec(a):
    # Full-array block with a constant index_map -> loaded once, resident across steps.
    if a.ndim == 2:
        return pl.BlockSpec(a.shape, lambda i: (0, 0))
    return pl.BlockSpec(a.shape, lambda i: (0, 0, 0))


def _xpt_fused_call(tok, pos, p):
    B, T, C = tok.shape
    H = NUM_HEADS
    # 2-way batch split keeps both v7x TensorCores busy; the single extra grid step is
    # negligible on single-TC v5e/v6e (all weights stay resident either way).
    nb = 2 if (B % 2 == 0 and B >= 2) else 1
    Bblk = B // nb

    weights = (p["ln1_g"], p["ln1_b"], p["wqkv"],
               p["ln2_g"], p["ln2_b"], p["w1"], p["b1"], p["w2"], p["b2"],
               p["lnf_g"], p["lnf_b"], p["lm_w"], p["lm_b"])

    in_specs = ([pl.BlockSpec((Bblk, T, C), lambda i: (i, 0, 0)),
                 pl.BlockSpec((T, C), lambda i: (0, 0))]
                + [_resident_spec(a) for a in weights])

    # Advisory cost estimate so XLA schedules the surrounding gather / slice sensibly.
    M = B * T
    flops = NUM_LAYERS * (2 * M * C * 3 * C          # stacked QKV
                          + 4 * M * T * C            # Q@K^T and P@V over all heads
                          + 16 * M * C * C)          # FFN (C->4C->C)
    flops += 2 * M * C * VOCAB_PAD                   # LM head
    transcendentals = NUM_LAYERS * B * H * T * T + (2 * NUM_LAYERS + 1) * M
    bytes_accessed = (tok.size * 4 + pos.size * 4 + B * T * VOCAB_PAD * 4
                      + sum(int(a.size) * a.dtype.itemsize for a in weights))

    kernel = functools.partial(_xpt_fused_kernel,
                               num_heads=H, num_layers=NUM_LAYERS)
    return pl.pallas_call(
        kernel,
        out_shape=jax.ShapeDtypeStruct((B, T, VOCAB_PAD), jnp.float32),
        grid=(nb,),
        in_specs=in_specs,
        out_specs=pl.BlockSpec((Bblk, T, VOCAB_PAD), lambda i: (i, 0, 0)),
        compiler_params=pltpu.CompilerParams(dimension_semantics=("parallel",)),
        cost_estimate=pl.CostEstimate(flops=int(flops),
                                      transcendentals=int(transcendentals),
                                      bytes_accessed=int(bytes_accessed)),
    )(tok, pos, *weights)


# ----------------------------- parameter init (deterministic, synthetic) ------------
def init_params(key):
    def nrm(k, shape, scale=0.02):
        return scale * jax.random.normal(k, shape, dtype=jnp.float32)

    C, L = NUM_EMBEDDINGS, NUM_LAYERS
    ks = jax.random.split(key, 6)
    lm_w = jnp.zeros((C, VOCAB_PAD), jnp.float32)
    lm_w = lm_w.at[:, :VOCAB_SIZE].set(nrm(ks[2], (C, VOCAB_SIZE)))
    return {
        "embed": jax.random.normal(ks[0], (VOCAB_SIZE, C), jnp.float32),
        "pos_embed": jax.random.normal(ks[1], (BLOCK_SIZE, C), jnp.float32),
        # Per-layer weights stacked on a leading layer axis; bf16 MXU inputs (documented
        # precision deviation from the f32 PyTorch reference).
        "ln1_g": jnp.ones((L, 1, C), jnp.float32),
        "ln1_b": jnp.zeros((L, 1, C), jnp.float32),
        # Stacked [Q | K | V] projection; within each, columns are head-major
        # (head0 cols, head1 cols, ...) == per-head bias-free Linear layers.
        "wqkv": nrm(ks[3], (L, C, 3 * C)).astype(jnp.bfloat16),
        "ln2_g": jnp.ones((L, 1, C), jnp.float32),
        "ln2_b": jnp.zeros((L, 1, C), jnp.float32),
        "w1": nrm(ks[4], (L, C, 4 * C)).astype(jnp.bfloat16),
        "b1": jnp.zeros((L, 1, 4 * C), jnp.float32),
        "w2": nrm(ks[5], (L, 4 * C, C)).astype(jnp.bfloat16),
        "b2": jnp.zeros((L, 1, C), jnp.float32),
        "lnf_g": jnp.ones((1, C), jnp.float32),
        "lnf_b": jnp.zeros((1, C), jnp.float32),
        "lm_w": lm_w.astype(jnp.bfloat16),
        "lm_b": jnp.zeros((1, VOCAB_PAD), jnp.float32),
    }


# ----------------------------- forward pass ------------------------------------------
def xpt_forward(params, idx):
    """idx: (B, T) int32 token ids -> (logits (B, T, VOCAB_SIZE), None)."""
    B, T = idx.shape
    tok = jnp.take(params["embed"], idx, axis=0)          # (B, T, C) gather (XLA glue)

    # Pad T to a sublane multiple (safe: causal mask means real queries never attend
    # padded key positions; padded rows are sliced off below).  T <= BLOCK_SIZE (mult of 8).
    T_pad = max(8, -(-T // 8) * 8)
    if T_pad != T:
        tok = jnp.pad(tok, ((0, 0), (0, T_pad - T), (0, 0)))
    pos = params["pos_embed"][:T_pad]                     # (T_pad, C)

    logits_padded = _xpt_fused_call(tok, pos, params)     # (B, T_pad, 128) lane-dense
    # Slice back to the reference output contract; for a fused loss/sampler this slice
    # could be deferred (mask the padded vocab lanes instead) to keep stores lane-dense.
    logits = logits_padded[:, :T, :VOCAB_SIZE]
    # targets=None path: loss is None
    return logits, None
    # TODO(synk): F.cross_entropy (training loss) and generate()'s multinomial sampling
    # are host/JAX-level ops, not part of the kernel hot path; not implemented here.


if __name__ == "__main__":
    key = jax.random.PRNGKey(0)
    pkey, ikey = jax.random.split(key)
    params = init_params(pkey)

    B, T = 2, 8
    idx = jax.random.randint(ikey, (B, T), 0, VOCAB_SIZE, dtype=jnp.int32)

    logits, loss = jax.jit(xpt_forward)(params, idx)
    logits = jax.block_until_ready(logits)

    assert logits.shape == (B, T, VOCAB_SIZE)
    assert logits.dtype == jnp.float32
    assert bool(jnp.all(jnp.isfinite(logits)))
    assert loss is None
    print("KERNEL_OK")
</pallas_src>

<mosaic_0001>
module attributes {stable_mosaic.version = 11 : i64} {
  func.func @_xpt_fused_kernel(%arg0: i32, %arg1: memref<1x8x128xf32, #tpu.memory_space<vmem>>, %arg2: memref<8x128xf32, #tpu.memory_space<vmem>>, %arg3: memref<2x1x128xf32, #tpu.memory_space<vmem>>, %arg4: memref<2x1x128xf32, #tpu.memory_space<vmem>>, %arg5: memref<2x128x384xbf16, #tpu.memory_space<vmem>>, %arg6: memref<2x1x128xf32, #tpu.memory_space<vmem>>, %arg7: memref<2x1x128xf32, #tpu.memory_space<vmem>>, %arg8: memref<2x128x512xbf16, #tpu.memory_space<vmem>>, %arg9: memref<2x1x512xf32, #tpu.memory_space<vmem>>, %arg10: memref<2x512x128xbf16, #tpu.memory_space<vmem>>, %arg11: memref<2x1x128xf32, #tpu.memory_space<vmem>>, %arg12: memref<1x128xf32, #tpu.memory_space<vmem>>, %arg13: memref<1x128xf32, #tpu.memory_space<vmem>>, %arg14: memref<128x128xbf16, #tpu.memory_space<vmem>>, %arg15: memref<1x128xf32, #tpu.memory_space<vmem>>, %arg16: memref<1x8x128xf32, #tpu.memory_space<vmem>>) attributes {dimension_semantics = [#tpu.dimension_semantics<parallel>], iteration_bounds = array<i64: 2>, scalar_prefetch = 0 : i64, scratch_operands = 0 : i64, tpu.core_type = #tpu.core_type<tc>, window_params = [{transform_indices = @transform_0, window_bounds = array<i64: 1, 8, 128>}, {pipeline_mode = #tpu.pipeline_mode<synchronous>, transform_indices = @transform_1, window_bounds = array<i64: 8, 128>}, {pipeline_mode = #tpu.pipeline_mode<synchronous>, transform_indices = @transform_2, window_bounds = array<i64: 2, 1, 128>}, {pipeline_mode = #tpu.pipeline_mode<synchronous>, transform_indices = @transform_3, window_bounds = array<i64: 2, 1, 128>}, {pipeline_mode = #tpu.pipeline_mode<synchronous>, transform_indices = @transform_4, window_bounds = array<i64: 2, 128, 384>}, {pipeline_mode = #tpu.pipeline_mode<synchronous>, transform_indices = @transform_5, window_bounds = array<i64: 2, 1, 128>}, {pipeline_mode = #tpu.pipeline_mode<synchronous>, transform_indices = @transform_6, window_bounds = array<i64: 2, 1, 128>}, {pipeline_mode = #tpu.pipeline_mode<synchronous>, transform_indices = @transform_7, window_bounds = array<i64: 2, 128, 512>}, {pipeline_mode = #tpu.pipeline_mode<synchronous>, transform_indices = @transform_8, window_bounds = array<i64: 2, 1, 512>}, {pipeline_mode = #tpu.pipeline_mode<synchronous>, transform_indices = @transform_9, window_bounds = array<i64: 2, 512, 128>}, {pipeline_mode = #tpu.pipeline_mode<synchronous>, transform_indices = @transform_10, window_bounds = array<i64: 2, 1, 128>}, {pipeline_mode = #tpu.pipeline_mode<synchronous>, transform_indices = @transform_11, window_bounds = array<i64: 1, 128>}, {pipeline_mode = #tpu.pipeline_mode<synchronous>, transform_indices = @transform_12, window_bounds = array<i64: 1, 128>}, {pipeline_mode = #tpu.pipeline_mode<synchronous>, transform_indices = @transform_13, window_bounds = array<i64: 128, 128>}, {pipeline_mode = #tpu.pipeline_mode<synchronous>, transform_indices = @transform_14, window_bounds = array<i64: 1, 128>}, {transform_indices = @transform_15, window_bounds = array<i64: 1, 8, 128>}]} {
    %c0 = arith.constant 0 : index
    %c0_0 = arith.constant 0 : index
    %c0_1 = arith.constant 0 : index
    %0 = vector.load %arg1[%c0, %c0_0, %c0_1] : memref<1x8x128xf32, #tpu.memory_space<vmem>>, vector<1x8x128xf32>
    %c0_2 = arith.constant 0 : index
    %c0_3 = arith.constant 0 : index
    %1 = vector.load %arg2[%c0_2, %c0_3] : memref<8x128xf32, #tpu.memory_space<vmem>>, vector<8x128xf32>
    %2 = vector.shape_cast %1 : vector<8x128xf32> to vector<1x8x128xf32>
    %3 = arith.addf %0, %2 : vector<1x8x128xf32>
    %4 = vector.shape_cast %3 : vector<1x8x128xf32> to vector<8x128xf32>
    %5 = tpu.iota {dimensions = array<i32: 0>} : vector<8x8xi32>
    %6 = tpu.iota {dimensions = array<i32: 1>} : vector<8x8xi32>
    %7 = arith.cmpi sle, %6, %5 : vector<8x8xi32>
    %8 = vector.shape_cast %7 : vector<8x8xi1> to vector<1x8x8xi1>
    %c0_4 = arith.constant 0 : index
    %c0_5 = arith.constant 0 : index
    %c0_6 = arith.constant 0 : index
    %9 = vector.load %arg3[%c0_4, %c0_5, %c0_6] : memref<2x1x128xf32, #tpu.memory_space<vmem>>, vector<1x1x128xf32>
    %10 = vector.shape_cast %9 : vector<1x1x128xf32> to vector<1x128xf32>
    %c0_7 = arith.constant 0 : index
    %c0_8 = arith.constant 0 : index
    %c0_9 = arith.constant 0 : index
    %11 = vector.load %arg4[%c0_7, %c0_8, %c0_9] : memref<2x1x128xf32, #tpu.memory_space<vmem>>, vector<1x1x128xf32>
    %12 = vector.shape_cast %11 : vector<1x1x128xf32> to vector<1x128xf32>
    %cst = arith.constant dense<0.000000e+00> : vector<8xf32>
    %13 = vector.multi_reduction <add>, %4, %cst [1] : vector<8x128xf32> to vector<8xf32>
    %14 = vector.shape_cast %13 : vector<8xf32> to vector<8x1xf32>
    %cst_10 = arith.constant 1.280000e+02 : f32
    %15 = vector.broadcast %cst_10 : f32 to vector<8x1xf32>
    %16 = arith.divf %14, %15 : vector<8x1xf32>
    %17 = vector.broadcast %16 : vector<8x1xf32> to vector<8x128xf32>
    %18 = arith.subf %4, %17 : vector<8x128xf32>
    %19 = arith.mulf %18, %18 : vector<8x128xf32>
    %cst_11 = arith.constant dense<0.000000e+00> : vector<8xf32>
    %20 = vector.multi_reduction <add>, %19, %cst_11 [1] : vector<8x128xf32> to vector<8xf32>
    %21 = vector.shape_cast %20 : vector<8xf32> to vector<8x1xf32>
    %cst_12 = arith.constant 1.280000e+02 : f32
    %22 = vector.broadcast %cst_12 : f32 to vector<8x1xf32>
    %23 = arith.divf %21, %22 : vector<8x1xf32>
    %24 = vector.broadcast %16 : vector<8x1xf32> to vector<8x128xf32>
    %25 = arith.subf %4, %24 : vector<8x128xf32>
    %cst_13 = arith.constant 9.99999974E-6 : f32
    %26 = vector.broadcast %cst_13 : f32 to vector<8x1xf32>
    %27 = arith.addf %23, %26 : vector<8x1xf32>
    %28 = math.rsqrt %27 : vector<8x1xf32>
    %29 = vector.broadcast %28 : vector<8x1xf32> to vector<8x128xf32>
    %30 = arith.mulf %25, %29 : vector<8x128xf32>
    %31 = vector.broadcast %10 : vector<1x128xf32> to vector<8x128xf32>
    %32 = arith.mulf %30, %31 : vector<8x128xf32>
    %33 = vector.broadcast %12 : vector<1x128xf32> to vector<8x128xf32>
    %34 = arith.addf %32, %33 : vector<8x128xf32>
    %35 = arith.truncf %34 : vector<8x128xf32> to vector<8x128xbf16>
    %c0_14 = arith.constant 0 : index
    %c0_15 = arith.constant 0 : index
    %c0_16 = arith.constant 0 : index
    %36 = vector.load %arg5[%c0_14, %c0_15, %c0_16] : memref<2x128x384xbf16, #tpu.memory_space<vmem>>, vector<1x128x384xbf16>
    %37 = vector.shape_cast %36 : vector<1x128x384xbf16> to vector<128x384xbf16>
    %cst_17 = arith.constant dense<0.000000e+00> : vector<8x384xf32>
    %38 = tpu.matmul %35, %37, %cst_17 {dimension_numbers = #tpu.dot_dimension_numbers<[1], [0], [0], [1], [0, 0, 1, 1], [], []>} : vector<8x128xbf16>, vector<128x384xbf16>, vector<8x384xf32> -> vector<8x384xf32>
    %39 = vector.extract_strided_slice %38 {offsets = [0, 0], sizes = [8, 32], strides = [1, 1]} : vector<8x384xf32> to vector<8x32xf32>
    %40 = vector.extract_strided_slice %38 {offsets = [0, 32], sizes = [8, 32], strides = [1, 1]} : vector<8x384xf32> to vector<8x32xf32>
    %41 = vector.extract_strided_slice %38 {offsets = [0, 64], sizes = [8, 32], strides = [1, 1]} : vector<8x384xf32> to vector<8x32xf32>
    %42 = vector.extract_strided_slice %38 {offsets = [0, 96], sizes = [8, 32], strides = [1, 1]} : vector<8x384xf32> to vector<8x32xf32>
    %43 = vector.shape_cast %39 : vector<8x32xf32> to vector<1x8x32xf32>
    %44 = vector.shape_cast %40 : vector<8x32xf32> to vector<1x8x32xf32>
    %45 = vector.shape_cast %41 : vector<8x32xf32> to vector<1x8x32xf32>
    %46 = vector.shape_cast %42 : vector<8x32xf32> to vector<1x8x32xf32>
    %47 = tpu.concatenate %43, %44, %45, %46 in 0 : vector<1x8x32xf32>, vector<1x8x32xf32>, vector<1x8x32xf32>, vector<1x8x32xf32> -> vector<4x8x32xf32>
    %48 = vector.extract_strided_slice %38 {offsets = [0, 128], sizes = [8, 32], strides = [1, 1]} : vector<8x384xf32> to vector<8x32xf32>
    %49 = vector.extract_strided_slice %38 {offsets = [0, 160], sizes = [8, 32], strides = [1, 1]} : vector<8x384xf32> to vector<8x32xf32>
    %50 = vector.extract_strided_slice %38 {offsets = [0, 192], sizes = [8, 32], strides = [1, 1]} : vector<8x384xf32> to vector<8x32xf32>
    %51 = vector.extract_strided_slice %38 {offsets = [0, 224], sizes = [8, 32], strides = [1, 1]} : vector<8x384xf32> to vector<8x32xf32>
    %52 = vector.shape_cast %48 : vector<8x32xf32> to vector<1x8x32xf32>
    %53 = vector.shape_cast %49 : vector<8x32xf32> to vector<1x8x32xf32>
    %54 = vector.shape_cast %50 : vector<8x32xf32> to vector<1x8x32xf32>
    %55 = vector.shape_cast %51 : vector<8x32xf32> to vector<1x8x32xf32>
    %56 = tpu.concatenate %52, %53, %54, %55 in 0 : vector<1x8x32xf32>, vector<1x8x32xf32>, vector<1x8x32xf32>, vector<1x8x32xf32> -> vector<4x8x32xf32>
    %57 = vector.extract_strided_slice %38 {offsets = [0, 256], sizes = [8, 32], strides = [1, 1]} : vector<8x384xf32> to vector<8x32xf32>
    %58 = vector.extract_strided_slice %38 {offsets = [0, 288], sizes = [8, 32], strides = [1, 1]} : vector<8x384xf32> to vector<8x32xf32>
    %59 = vector.extract_strided_slice %38 {offsets = [0, 320], sizes = [8, 32], strides = [1, 1]} : vector<8x384xf32> to vector<8x32xf32>
    %60 = vector.extract_strided_slice %38 {offsets = [0, 352], sizes = [8, 32], strides = [1, 1]} : vector<8x384xf32> to vector<8x32xf32>
    %61 = vector.shape_cast %57 : vector<8x32xf32> to vector<1x8x32xf32>
    %62 = vector.shape_cast %58 : vector<8x32xf32> to vector<1x8x32xf32>
    %63 = vector.shape_cast %59 : vector<8x32xf32> to vector<1x8x32xf32>
    %64 = vector.shape_cast %60 : vector<8x32xf32> to vector<1x8x32xf32>
    %65 = tpu.concatenate %61, %62, %63, %64 in 0 : vector<1x8x32xf32>, vector<1x8x32xf32>, vector<1x8x32xf32>, vector<1x8x32xf32> -> vector<4x8x32xf32>
    %66 = arith.truncf %47 : vector<4x8x32xf32> to vector<4x8x32xbf16>
    %67 = arith.truncf %56 : vector<4x8x32xf32> to vector<4x8x32xbf16>
    "tpu.trace_start"() <{level = 10 : i32, message = "htd,hsd->hts"}> : () -> ()
    %cst_18 = arith.constant dense<0.000000e+00> : vector<4x8x8xf32>
    %68 = tpu.matmul %66, %67, %cst_18 {dimension_numbers = #tpu.dot_dimension_numbers<[2], [2], [1], [1], [0, 0, 0, 1, 1, 1], [0], [0]>} : vector<4x8x32xbf16>, vector<4x8x32xbf16>, vector<4x8x8xf32> -> vector<4x8x8xf32>
    "tpu.trace_stop"() : () -> ()
    %cst_19 = arith.constant 0.176776692 : f32
    %69 = vector.broadcast %cst_19 : f32 to vector<4x8x8xf32>
    %70 = arith.mulf %68, %69 : vector<4x8x8xf32>
    %cst_20 = arith.constant -1.000000e+30 : f32
    %71 = vector.shape_cast %8 : vector<1x8x8xi1> to vector<1x8x8xi1>
    %72 = vector.broadcast %71 : vector<1x8x8xi1> to vector<4x8x8xi1>
    %73 = vector.broadcast %cst_20 : f32 to vector<4x8x8xf32>
    %74 = arith.select %72, %70, %73 : vector<4x8x8xi1>, vector<4x8x8xf32>
    %cst_21 = arith.constant dense<0xFF800000> : vector<4x8xf32>
    %75 = vector.multi_reduction <maximumf>, %74, %cst_21 [2] : vector<4x8x8xf32> to vector<4x8xf32>
    %cst_22 = arith.constant 0xFF800000 : f32
    %76 = vector.broadcast %cst_22 : f32 to vector<4x8xf32>
    %77 = arith.maximumf %76, %75 : vector<4x8xf32>
    %78 = vector.shape_cast %77 : vector<4x8xf32> to vector<4x8x1xf32>
    %79 = vector.broadcast %78 : vector<4x8x1xf32> to vector<4x8x8xf32>
    %80 = arith.subf %74, %79 : vector<4x8x8xf32>
    %81 = math.exp %80 : vector<4x8x8xf32>
    %cst_23 = arith.constant dense<0.000000e+00> : vector<4x8xf32>
    %82 = vector.multi_reduction <add>, %81, %cst_23 [2] : vector<4x8x8xf32> to vector<4x8xf32>
    %83 = vector.shape_cast %82 : vector<4x8xf32> to vector<4x8x1xf32>
    %84 = vector.broadcast %83 : vector<4x8x1xf32> to vector<4x8x8xf32>
    %85 = arith.divf %81, %84 : vector<4x8x8xf32>
    %86 = arith.truncf %85 : vector<4x8x8xf32> to vector<4x8x8xbf16>
    %87 = arith.truncf %65 : vector<4x8x32xf32> to vector<4x8x32xbf16>
    "tpu.trace_start"() <{level = 10 : i32, message = "hts,hsd->htd"}> : () -> ()
    %cst_24 = arith.constant dense<0.000000e+00> : vector<4x8x32xf32>
    %88 = tpu.matmul %86, %87, %cst_24 {dimension_numbers = #tpu.dot_dimension_numbers<[2], [1], [1], [2], [0, 0, 0, 1, 1, 2], [0], [0]>} : vector<4x8x8xbf16>, vector<4x8x32xbf16>, vector<4x8x32xf32> -> vector<4x8x32xf32>
    "tpu.trace_stop"() : () -> ()
    %89 = vector.extract_strided_slice %88 {offsets = [0, 0, 0], sizes = [1, 8, 32], strides = [1, 1, 1]} : vector<4x8x32xf32> to vector<1x8x32xf32>
    %90 = vector.shape_cast %89 : vector<1x8x32xf32> to vector<8x32xf32>
    %91 = vector.extract_strided_slice %88 {offsets = [1, 0, 0], sizes = [1, 8, 32], strides = [1, 1, 1]} : vector<4x8x32xf32> to vector<1x8x32xf32>
    %92 = vector.shape_cast %91 : vector<1x8x32xf32> to vector<8x32xf32>
    %93 = vector.extract_strided_slice %88 {offsets = [2, 0, 0], sizes = [1, 8, 32], strides = [1, 1, 1]} : vector<4x8x32xf32> to vector<1x8x32xf32>
    %94 = vector.shape_cast %93 : vector<1x8x32xf32> to vector<8x32xf32>
    %95 = vector.extract_strided_slice %88 {offsets = [3, 0, 0], sizes = [1, 8, 32], strides = [1, 1, 1]} : vector<4x8x32xf32> to vector<1x8x32xf32>
    %96 = vector.shape_cast %95 : vector<1x8x32xf32> to vector<8x32xf32>
    %97 = tpu.concatenate %90, %92, %94, %96 in 1 : vector<8x32xf32>, vector<8x32xf32>, vector<8x32xf32>, vector<8x32xf32> -> vector<8x128xf32>
    %98 = arith.addf %4, %97 : vector<8x128xf32>
    %c0_25 = arith.constant 0 : index
    %c0_26 = arith.constant 0 : index
    %c0_27 = arith.constant 0 : index
    %99 = vector.load %arg6[%c0_25, %c0_26, %c0_27] : memref<2x1x128xf32, #tpu.memory_space<vmem>>, vector<1x1x128xf32>
    %100 = vector.shape_cast %99 : vector<1x1x128xf32> to vector<1x128xf32>
    %c0_28 = arith.constant 0 : index
    %c0_29 = arith.constant 0 : index
    %c0_30 = arith.constant 0 : index
    %101 = vector.load %arg7[%c0_28, %c0_29, %c0_30] : memref<2x1x128xf32, #tpu.memory_space<vmem>>, vector<1x1x128xf32>
    %102 = vector.shape_cast %101 : vector<1x1x128xf32> to vector<1x128xf32>
    %cst_31 = arith.constant dense<0.000000e+00> : vector<8xf32>
    %103 = vector.multi_reduction <add>, %98, %cst_31 [1] : vector<8x128xf32> to vector<8xf32>
    %104 = vector.shape_cast %103 : vector<8xf32> to vector<8x1xf32>
    %cst_32 = arith.constant 1.280000e+02 : f32
    %105 = vector.broadcast %cst_32 : f32 to vector<8x1xf32>
    %106 = arith.divf %104, %105 : vector<8x1xf32>
    %107 = vector.broadcast %106 : vector<8x1xf32> to vector<8x128xf32>
    %108 = arith.subf %98, %107 : vector<8x128xf32>
    %109 = arith.mulf %108, %108 : vector<8x128xf32>
    %cst_33 = arith.constant dense<0.000000e+00> : vector<8xf32>
    %110 = vector.multi_reduction <add>, %109, %cst_33 [1] : vector<8x128xf32> to vector<8xf32>
    %111 = vector.shape_cast %110 : vector<8xf32> to vector<8x1xf32>
    %cst_34 = arith.constant 1.280000e+02 : f32
    %112 = vector.broadcast %cst_34 : f32 to vector<8x1xf32>
    %113 = arith.divf %111, %112 : vector<8x1xf32>
    %114 = vector.broadcast %106 : vector<8x1xf32> to vector<8x128xf32>
    %115 = arith.subf %98, %114 : vector<8x128xf32>
    %cst_35 = arith.constant 9.99999974E-6 : f32
    %116 = vector.broadcast %cst_35 : f32 to vector<8x1xf32>
    %117 = arith.addf %113, %116 : vector<8x1xf32>
    %118 = math.rsqrt %117 : vector<8x1xf32>
    %119 = vector.broadcast %118 : vector<8x1xf32> to vector<8x128xf32>
    %120 = arith.mulf %115, %119 : vector<8x128xf32>
    %121 = vector.broadcast %100 : vector<1x128xf32> to vector<8x128xf32>
    %122 = arith.mulf %120, %121 : vector<8x128xf32>
    %123 = vector.broadcast %102 : vector<1x128xf32> to vector<8x128xf32>
    %124 = arith.addf %122, %123 : vector<8x128xf32>
    %125 = arith.truncf %124 : vector<8x128xf32> to vector<8x128xbf16>
    %c0_36 = arith.constant 0 : index
    %c0_37 = arith.constant 0 : index
    %c0_38 = arith.constant 0 : index
    %126 = vector.load %arg8[%c0_36, %c0_37, %c0_38] : memref<2x128x512xbf16, #tpu.memory_space<vmem>>, vector<1x128x512xbf16>
    %127 = vector.shape_cast %126 : vector<1x128x512xbf16> to vector<128x512xbf16>
    %cst_39 = arith.constant dense<0.000000e+00> : vector<8x512xf32>
    %128 = tpu.matmul %125, %127, %cst_39 {dimension_numbers = #tpu.dot_dimension_numbers<[1], [0], [0], [1], [0, 0, 1, 1], [], []>} : vector<8x128xbf16>, vector<128x512xbf16>, vector<8x512xf32> -> vector<8x512xf32>
    %c0_40 = arith.constant 0 : index
    %c0_41 = arith.constant 0 : index
    %c0_42 = arith.constant 0 : index
    %129 = vector.load %arg9[%c0_40, %c0_41, %c0_42] : memref<2x1x512xf32, #tpu.memory_space<vmem>>, vector<1x1x512xf32>
    %130 = vector.shape_cast %129 : vector<1x1x512xf32> to vector<1x512xf32>
    %131 = vector.broadcast %130 : vector<1x512xf32> to vector<8x512xf32>
    %132 = arith.addf %128, %131 : vector<8x512xf32>
    %cst_43 = arith.constant 0.000000e+00 : f32
    %133 = vector.broadcast %cst_43 : f32 to vector<8x512xf32>
    %134 = arith.maximumf %132, %133 : vector<8x512xf32>
    %135 = arith.truncf %134 : vector<8x512xf32> to vector<8x512xbf16>
    %c0_44 = arith.constant 0 : index
    %c0_45 = arith.constant 0 : index
    %c0_46 = arith.constant 0 : index
    %136 = vector.load %arg10[%c0_44, %c0_45, %c0_46] : memref<2x512x128xbf16, #tpu.memory_space<vmem>>, vector<1x512x128xbf16>
    %137 = vector.shape_cast %136 : vector<1x512x128xbf16> to vector<512x128xbf16>
    %cst_47 = arith.constant dense<0.000000e+00> : vector<8x128xf32>
    %138 = tpu.matmul %135, %137, %cst_47 {dimension_numbers = #tpu.dot_dimension_numbers<[1], [0], [0], [1], [0, 0, 1, 1], [], []>} : vector<8x512xbf16>, vector<512x128xbf16>, vector<8x128xf32> -> vector<8x128xf32>
    %c0_48 = arith.constant 0 : index
    %c0_49 = arith.constant 0 : index
    %c0_50 = arith.constant 0 : index
    %139 = vector.load %arg11[%c0_48, %c0_49, %c0_50] : memref<2x1x128xf32, #tpu.memory_space<vmem>>, vector<1x1x128xf32>
    %140 = vector.shape_cast %139 : vector<1x1x128xf32> to vector<1x128xf32>
    %141 = vector.broadcast %140 : vector<1x128xf32> to vector<8x128xf32>
    %142 = arith.addf %138, %141 : vector<8x128xf32>
    %143 = arith.addf %98, %142 : vector<8x128xf32>
    %c1 = arith.constant 1 : index
    %c0_51 = arith.constant 0 : index
    %c0_52 = arith.constant 0 : index
    %144 = vector.load %arg3[%c1, %c0_51, %c0_52] : memref<2x1x128xf32, #tpu.memory_space<vmem>>, vector<1x1x128xf32>
    %145 = vector.shape_cast %144 : vector<1x1x128xf32> to vector<1x128xf32>
    %c1_53 = arith.constant 1 : index
    %c0_54 = arith.constant 0 : index
    %c0_55 = arith.constant 0 : index
    %146 = vector.load %arg4[%c1_53, %c0_54, %c0_55] : memref<2x1x128xf32, #tpu.memory_space<vmem>>, vector<1x1x128xf32>
    %147 = vector.shape_cast %146 : vector<1x1x128xf32> to vector<1x128xf32>
    %cst_56 = arith.constant dense<0.000000e+00> : vector<8xf32>
    %148 = vector.multi_reduction <add>, %143, %cst_56 [1] : vector<8x128xf32> to vector<8xf32>
    %149 = vector.shape_cast %148 : vector<8xf32> to vector<8x1xf32>
    %cst_57 = arith.constant 1.280000e+02 : f32
    %150 = vector.broadcast %cst_57 : f32 to vector<8x1xf32>
    %151 = arith.divf %149, %150 : vector<8x1xf32>
    %152 = vector.broadcast %151 : vector<8x1xf32> to vector<8x128xf32>
    %153 = arith.subf %143, %152 : vector<8x128xf32>
    %154 = arith.mulf %153, %153 : vector<8x128xf32>
    %cst_58 = arith.constant dense<0.000000e+00> : vector<8xf32>
    %155 = vector.multi_reduction <add>, %154, %cst_58 [1] : vector<8x128xf32> to vector<8xf32>
    %156 = vector.shape_cast %155 : vector<8xf32> to vector<8x1xf32>
    %cst_59 = arith.constant 1.280000e+02 : f32
    %157 = vector.broadcast %cst_59 : f32 to vector<8x1xf32>
    %158 = arith.divf %156, %157 : vector<8x1xf32>
    %159 = vector.broadcast %151 : vector<8x1xf32> to vector<8x128xf32>
    %160 = arith.subf %143, %159 : vector<8x128xf32>
    %cst_60 = arith.constant 9.99999974E-6 : f32
    %161 = vector.broadcast %cst_60 : f32 to vector<8x1xf32>
    %162 = arith.addf %158, %161 : vector<8x1xf32>
    %163 = math.rsqrt %162 : vector<8x1xf32>
    %164 = vector.broadcast %163 : vector<8x1xf32> to vector<8x128xf32>
    %165 = arith.mulf %160, %164 : vector<8x128xf32>
    %166 = vector.broadcast %145 : vector<1x128xf32> to vector<8x128xf32>
    %167 = arith.mulf %165, %166 : vector<8x128xf32>
    %168 = vector.broadcast %147 : vector<1x128xf32> to vector<8x128xf32>
    %169 = arith.addf %167, %168 : vector<8x128xf32>
    %170 = arith.truncf %169 : vector<8x128xf32> to vector<8x128xbf16>
    %c1_61 = arith.constant 1 : index
    %c0_62 = arith.constant 0 : index
    %c0_63 = arith.constant 0 : index
    %171 = vector.load %arg5[%c1_61, %c0_62, %c0_63] : memref<2x128x384xbf16, #tpu.memory_space<vmem>>, vector<1x128x384xbf16>
    %172 = vector.shape_cast %171 : vector<1x128x384xbf16> to vector<128x384xbf16>
    %cst_64 = arith.constant dense<0.000000e+00> : vector<8x384xf32>
    %173 = tpu.matmul %170, %172, %cst_64 {dimension_numbers = #tpu.dot_dimension_numbers<[1], [0], [0], [1], [0, 0, 1, 1], [], []>} : vector<8x128xbf16>, vector<128x384xbf16>, vector<8x384xf32> -> vector<8x384xf32>
    %174 = vector.extract_strided_slice %173 {offsets = [0, 0], sizes = [8, 32], strides = [1, 1]} : vector<8x384xf32> to vector<8x32xf32>
    %175 = vector.extract_strided_slice %173 {offsets = [0, 32], sizes = [8, 32], strides = [1, 1]} : vector<8x384xf32> to vector<8x32xf32>
    %176 = vector.extract_strided_slice %173 {offsets = [0, 64], sizes = [8, 32], strides = [1, 1]} : vector<8x384xf32> to vector<8x32xf32>
    %177 = vector.extract_strided_slice %173 {offsets = [0, 96], sizes = [8, 32], strides = [1, 1]} : vector<8x384xf32> to vector<8x32xf32>
    %178 = vector.shape_cast %174 : vector<8x32xf32> to vector<1x8x32xf32>
    %179 = vector.shape_cast %175 : vector<8x32xf32> to vector<1x8x32xf32>
    %180 = vector.shape_cast %176 : vector<8x32xf32> to vector<1x8x32xf32>
    %181 = vector.shape_cast %177 : vector<8x32xf32> to vector<1x8x32xf32>
    %182 = tpu.concatenate %178, %179, %180, %181 in 0 : vector<1x8x32xf32>, vector<1x8x32xf32>, vector<1x8x32xf32>, vector<1x8x32xf32> -> vector<4x8x32xf32>
    %183 = vector.extract_strided_slice %173 {offsets = [0, 128], sizes = [8, 32], strides = [1, 1]} : vector<8x384xf32> to vector<8x32xf32>
    %184 = vector.extract_strided_slice %173 {offsets = [0, 160], sizes = [8, 32], strides = [1, 1]} : vector<8x384xf32> to vector<8x32xf32>
    %185 = vector.extract_strided_slice %173 {offsets = [0, 192], sizes = [8, 32], strides = [1, 1]} : vector<8x384xf32> to vector<8x32xf32>
    %186 = vector.extract_strided_slice %173 {offsets = [0, 224], sizes = [8, 32], strides = [1, 1]} : vector<8x384xf32> to vector<8x32xf32>
    %187 = vector.shape_cast %183 : vector<8x32xf32> to vector<1x8x32xf32>
    %188 = vector.shape_cast %184 : vector<8x32xf32> to vector<1x8x32xf32>
    %189 = vector.shape_cast %185 : vector<8x32xf32> to vector<1x8x32xf32>
    %190 = vector.shape_cast %186 : vector<8x32xf32> to vector<1x8x32xf32>
    %191 = tpu.concatenate %187, %188, %189, %190 in 0 : vector<1x8x32xf32>, vector<1x8x32xf32>, vector<1x8x32xf32>, vector<1x8x32xf32> -> vector<4x8x32xf32>
    %192 = vector.extract_strided_slice %173 {offsets = [0, 256], sizes = [8, 32], strides = [1, 1]} : vector<8x384xf32> to vector<8x32xf32>
    %193 = vector.extract_strided_slice %173 {offsets = [0, 288], sizes = [8, 32], strides = [1, 1]} : vector<8x384xf32> to vector<8x32xf32>
    %194 = vector.extract_strided_slice %173 {offsets = [0, 320], sizes = [8, 32], strides = [1, 1]} : vector<8x384xf32> to vector<8x32xf32>
    %195 = vector.extract_strided_slice %173 {offsets = [0, 352], sizes = [8, 32], strides = [1, 1]} : vector<8x384xf32> to vector<8x32xf32>
    %196 = vector.shape_cast %192 : vector<8x32xf32> to vector<1x8x32xf32>
    %197 = vector.shape_cast %193 : vector<8x32xf32> to vector<1x8x32xf32>
    %198 = vector.shape_cast %194 : vector<8x32xf32> to vector<1x8x32xf32>
    %199 = vector.shape_cast %195 : vector<8x32xf32> to vector<1x8x32xf32>
    %200 = tpu.concatenate %196, %197, %198, %199 in 0 : vector<1x8x32xf32>, vector<1x8x32xf32>, vector<1x8x32xf32>, vector<1x8x32xf32> -> vector<4x8x32xf32>
    %201 = arith.truncf %182 : vector<4x8x32xf32> to vector<4x8x32xbf16>
    %202 = arith.truncf %191 : vector<4x8x32xf32> to vector<4x8x32xbf16>
    "tpu.trace_start"() <{level = 10 : i32, message = "htd,hsd->hts"}> : () -> ()
    %cst_65 = arith.constant dense<0.000000e+00> : vector<4x8x8xf32>
    %203 = tpu.matmul %201, %202, %cst_65 {dimension_numbers = #tpu.dot_dimension_numbers<[2], [2], [1], [1], [0, 0, 0, 1, 1, 1], [0], [0]>} : vector<4x8x32xbf16>, vector<4x8x32xbf16>, vector<4x8x8xf32> -> vector<4x8x8xf32>
    "tpu.trace_stop"() : () -> ()
    %cst_66 = arith.constant 0.176776692 : f32
    %204 = vector.broadcast %cst_66 : f32 to vector<4x8x8xf32>
    %205 = arith.mulf %203, %204 : vector<4x8x8xf32>
    %cst_67 = arith.constant -1.000000e+30 : f32
    %206 = vector.shape_cast %8 : vector<1x8x8xi1> to vector<1x8x8xi1>
    %207 = vector.broadcast %206 : vector<1x8x8xi1> to vector<4x8x8xi1>
    %208 = vector.broadcast %cst_67 : f32 to vector<4x8x8xf32>
    %209 = arith.select %207, %205, %208 : vector<4x8x8xi1>, vector<4x8x8xf32>
    %cst_68 = arith.constant dense<0xFF800000> : vector<4x8xf32>
    %210 = vector.multi_reduction <maximumf>, %209, %cst_68 [2] : vector<4x8x8xf32> to vector<4x8xf32>
    %cst_69 = arith.constant 0xFF800000 : f32
    %211 = vector.broadcast %cst_69 : f32 to vector<4x8xf32>
    %212 = arith.maximumf %211, %210 : vector<4x8xf32>
    %213 = vector.shape_cast %212 : vector<4x8xf32> to vector<4x8x1xf32>
    %214 = vector.broadcast %213 : vector<4x8x1xf32> to vector<4x8x8xf32>
    %215 = arith.subf %209, %214 : vector<4x8x8xf32>
    %216 = math.exp %215 : vector<4x8x8xf32>
    %cst_70 = arith.constant dense<0.000000e+00> : vector<4x8xf32>
    %217 = vector.multi_reduction <add>, %216, %cst_70 [2] : vector<4x8x8xf32> to vector<4x8xf32>
    %218 = vector.shape_cast %217 : vector<4x8xf32> to vector<4x8x1xf32>
    %219 = vector.broadcast %218 : vector<4x8x1xf32> to vector<4x8x8xf32>
    %220 = arith.divf %216, %219 : vector<4x8x8xf32>
    %221 = arith.truncf %220 : vector<4x8x8xf32> to vector<4x8x8xbf16>
    %222 = arith.truncf %200 : vector<4x8x32xf32> to vector<4x8x32xbf16>
    "tpu.trace_start"() <{level = 10 : i32, message = "hts,hsd->htd"}> : () -> ()
    %cst_71 = arith.constant dense<0.000000e+00> : vector<4x8x32xf32>
    %223 = tpu.matmul %221, %222, %cst_71 {dimension_numbers = #tpu.dot_dimension_numbers<[2], [1], [1], [2], [0, 0, 0, 1, 1, 2], [0], [0]>} : vector<4x8x8xbf16>, vector<4x8x32xbf16>, vector<4x8x32xf32> -> vector<4x8x32xf32>
    "tpu.trace_stop"() : () -> ()
    %224 = vector.extract_strided_slice %223 {offsets = [0, 0, 0], sizes = [1, 8, 32], strides = [1, 1, 1]} : vector<4x8x32xf32> to vector<1x8x32xf32>
    %225 = vector.shape_cast %224 : vector<1x8x32xf32> to vector<8x32xf32>
    %226 = vector.extract_strided_slice %223 {offsets = [1, 0, 0], sizes = [1, 8, 32], strides = [1, 1, 1]} : vector<4x8x32xf32> to vector<1x8x32xf32>
    %227 = vector.shape_cast %226 : vector<1x8x32xf32> to vector<8x32xf32>
    %228 = vector.extract_strided_slice %223 {offsets = [2, 0, 0], sizes = [1, 8, 32], strides = [1, 1, 1]} : vector<4x8x32xf32> to vector<1x8x32xf32>
    %229 = vector.shape_cast %228 : vector<1x8x32xf32> to vector<8x32xf32>
    %230 = vector.extract_strided_slice %223 {offsets = [3, 0, 0], sizes = [1, 8, 32], strides = [1, 1, 1]} : vector<4x8x32xf32> to vector<1x8x32xf32>
    %231 = vector.shape_cast %230 : vector<1x8x32xf32> to vector<8x32xf32>
    %232 = tpu.concatenate %225, %227, %229, %231 in 1 : vector<8x32xf32>, vector<8x32xf32>, vector<8x32xf32>, vector<8x32xf32> -> vector<8x128xf32>
    %233 = arith.addf %143, %232 : vector<8x128xf32>
    %c1_72 = arith.constant 1 : index
    %c0_73 = arith.constant 0 : index
    %c0_74 = arith.constant 0 : index
    %234 = vector.load %arg6[%c1_72, %c0_73, %c0_74] : memref<2x1x128xf32, #tpu.memory_space<vmem>>, vector<1x1x128xf32>
    %235 = vector.shape_cast %234 : vector<1x1x128xf32> to vector<1x128xf32>
    %c1_75 = arith.constant 1 : index
    %c0_76 = arith.constant 0 : index
    %c0_77 = arith.constant 0 : index
    %236 = vector.load %arg7[%c1_75, %c0_76, %c0_77] : memref<2x1x128xf32, #tpu.memory_space<vmem>>, vector<1x1x128xf32>
    %237 = vector.shape_cast %236 : vector<1x1x128xf32> to vector<1x128xf32>
    %cst_78 = arith.constant dense<0.000000e+00> : vector<8xf32>
    %238 = vector.multi_reduction <add>, %233, %cst_78 [1] : vector<8x128xf32> to vector<8xf32>
    %239 = vector.shape_cast %238 : vector<8xf32> to vector<8x1xf32>
    %cst_79 = arith.constant 1.280000e+02 : f32
    %240 = vector.broadcast %cst_79 : f32 to vector<8x1xf32>
    %241 = arith.divf %239, %240 : vector<8x1xf32>
    %242 = vector.broadcast %241 : vector<8x1xf32> to vector<8x128xf32>
    %243 = arith.subf %233, %242 : vector<8x128xf32>
    %244 = arith.mulf %243, %243 : vector<8x128xf32>
    %cst_80 = arith.constant dense<0.000000e+00> : vector<8xf32>
    %245 = vector.multi_reduction <add>, %244, %cst_80 [1] : vector<8x128xf32> to vector<8xf32>
    %246 = vector.shape_cast %245 : vector<8xf32> to vector<8x1xf32>
    %cst_81 = arith.constant 1.280000e+02 : f32
    %247 = vector.broadcast %cst_81 : f32 to vector<8x1xf32>
    %248 = arith.divf %246, %247 : vector<8x1xf32>
    %249 = vector.broadcast %241 : vector<8x1xf32> to vector<8x128xf32>
    %250 = arith.subf %233, %249 : vector<8x128xf32>
    %cst_82 = arith.constant 9.99999974E-6 : f32
    %251 = vector.broadcast %cst_82 : f32 to vector<8x1xf32>
    %252 = arith.addf %248, %251 : vector<8x1xf32>
    %253 = math.rsqrt %252 : vector<8x1xf32>
    %254 = vector.broadcast %253 : vector<8x1xf32> to vector<8x128xf32>
    %255 = arith.mulf %250, %254 : vector<8x128xf32>
    %256 = vector.broadcast %235 : vector<1x128xf32> to vector<8x128xf32>
    %257 = arith.mulf %255, %256 : vector<8x128xf32>
    %258 = vector.broadcast %237 : vector<1x128xf32> to vector<8x128xf32>
    %259 = arith.addf %257, %258 : vector<8x128xf32>
    %260 = arith.truncf %259 : vector<8x128xf32> to vector<8x128xbf16>
    %c1_83 = arith.constant 1 : index
    %c0_84 = arith.constant 0 : index
    %c0_85 = arith.constant 0 : index
    %261 = vector.load %arg8[%c1_83, %c0_84, %c0_85] : memref<2x128x512xbf16, #tpu.memory_space<vmem>>, vector<1x128x512xbf16>
    %262 = vector.shape_cast %261 : vector<1x128x512xbf16> to vector<128x512xbf16>
    %cst_86 = arith.constant dense<0.000000e+00> : vector<8x512xf32>
    %263 = tpu.matmul %260, %262, %cst_86 {dimension_numbers = #tpu.dot_dimension_numbers<[1], [0], [0], [1], [0, 0, 1, 1], [], []>} : vector<8x128xbf16>, vector<128x512xbf16>, vector<8x512xf32> -> vector<8x512xf32>
    %c1_87 = arith.constant 1 : index
    %c0_88 = arith.constant 0 : index
    %c0_89 = arith.constant 0 : index
    %264 = vector.load %arg9[%c1_87, %c0_88, %c0_89] : memref<2x1x512xf32, #tpu.memory_space<vmem>>, vector<1x1x512xf32>
    %265 = vector.shape_cast %264 : vector<1x1x512xf32> to vector<1x512xf32>
    %266 = vector.broadcast %265 : vector<1x512xf32> to vector<8x512xf32>
    %267 = arith.addf %263, %266 : vector<8x512xf32>
    %cst_90 = arith.constant 0.000000e+00 : f32
    %268 = vector.broadcast %cst_90 : f32 to vector<8x512xf32>
    %269 = arith.maximumf %267, %268 : vector<8x512xf32>
    %270 = arith.truncf %269 : vector<8x512xf32> to vector<8x512xbf16>
    %c1_91 = arith.constant 1 : index
    %c0_92 = arith.constant 0 : index
    %c0_93 = arith.constant 0 : index
    %271 = vector.load %arg10[%c1_91, %c0_92, %c0_93] : memref<2x512x128xbf16, #tpu.memory_space<vmem>>, vector<1x512x128xbf16>
    %272 = vector.shape_cast %271 : vector<1x512x128xbf16> to vector<512x128xbf16>
    %cst_94 = arith.constant dense<0.000000e+00> : vector<8x128xf32>
    %273 = tpu.matmul %270, %272, %cst_94 {dimension_numbers = #tpu.dot_dimension_numbers<[1], [0], [0], [1], [0, 0, 1, 1], [], []>} : vector<8x512xbf16>, vector<512x128xbf16>, vector<8x128xf32> -> vector<8x128xf32>
    %c1_95 = arith.constant 1 : index
    %c0_96 = arith.constant 0 : index
    %c0_97 = arith.constant 0 : index
    %274 = vector.load %arg11[%c1_95, %c0_96, %c0_97] : memref<2x1x128xf32, #tpu.memory_space<vmem>>, vector<1x1x128xf32>
    %275 = vector.shape_cast %274 : vector<1x1x128xf32> to vector<1x128xf32>
    %276 = vector.broadcast %275 : vector<1x128xf32> to vector<8x128xf32>
    %277 = arith.addf %273, %276 : vector<8x128xf32>
    %278 = arith.addf %233, %277 : vector<8x128xf32>
    %c0_98 = arith.constant 0 : index
    %c0_99 = arith.constant 0 : index
    %279 = vector.load %arg12[%c0_98, %c0_99] : memref<1x128xf32, #tpu.memory_space<vmem>>, vector<1x128xf32>
    %c0_100 = arith.constant 0 : index
    %c0_101 = arith.constant 0 : index
    %280 = vector.load %arg13[%c0_100, %c0_101] : memref<1x128xf32, #tpu.memory_space<vmem>>, vector<1x128xf32>
    %cst_102 = arith.constant dense<0.000000e+00> : vector<8xf32>
    %281 = vector.multi_reduction <add>, %278, %cst_102 [1] : vector<8x128xf32> to vector<8xf32>
    %282 = vector.shape_cast %281 : vector<8xf32> to vector<8x1xf32>
    %cst_103 = arith.constant 1.280000e+02 : f32
    %283 = vector.broadcast %cst_103 : f32 to vector<8x1xf32>
    %284 = arith.divf %282, %283 : vector<8x1xf32>
    %285 = vector.broadcast %284 : vector<8x1xf32> to vector<8x128xf32>
    %286 = arith.subf %278, %285 : vector<8x128xf32>
    %287 = arith.mulf %286, %286 : vector<8x128xf32>
    %cst_104 = arith.constant dense<0.000000e+00> : vector<8xf32>
    %288 = vector.multi_reduction <add>, %287, %cst_104 [1] : vector<8x128xf32> to vector<8xf32>
    %289 = vector.shape_cast %288 : vector<8xf32> to vector<8x1xf32>
    %cst_105 = arith.constant 1.280000e+02 : f32
    %290 = vector.broadcast %cst_105 : f32 to vector<8x1xf32>
    %291 = arith.divf %289, %290 : vector<8x1xf32>
    %292 = vector.broadcast %284 : vector<8x1xf32> to vector<8x128xf32>
    %293 = arith.subf %278, %292 : vector<8x128xf32>
    %cst_106 = arith.constant 9.99999974E-6 : f32
    %294 = vector.broadcast %cst_106 : f32 to vector<8x1xf32>
    %295 = arith.addf %291, %294 : vector<8x1xf32>
    %296 = math.rsqrt %295 : vector<8x1xf32>
    %297 = vector.broadcast %296 : vector<8x1xf32> to vector<8x128xf32>
    %298 = arith.mulf %293, %297 : vector<8x128xf32>
    %299 = vector.broadcast %279 : vector<1x128xf32> to vector<8x128xf32>
    %300 = arith.mulf %298, %299 : vector<8x128xf32>
    %301 = vector.broadcast %280 : vector<1x128xf32> to vector<8x128xf32>
    %302 = arith.addf %300, %301 : vector<8x128xf32>
    %303 = arith.truncf %302 : vector<8x128xf32> to vector<8x128xbf16>
    %c0_107 = arith.constant 0 : index
    %c0_108 = arith.constant 0 : index
    %304 = vector.load %arg14[%c0_107, %c0_108] : memref<128x128xbf16, #tpu.memory_space<vmem>>, vector<128x128xbf16>
    %cst_109 = arith.constant dense<0.000000e+00> : vector<8x128xf32>
    %305 = tpu.matmul %303, %304, %cst_109 {dimension_numbers = #tpu.dot_dimension_numbers<[1], [0], [0], [1], [0, 0, 1, 1], [], []>} : vector<8x128xbf16>, vector<128x128xbf16>, vector<8x128xf32> -> vector<8x128xf32>
    %c0_110 = arith.constant 0 : index
    %c0_111 = arith.constant 0 : index
    %306 = vector.load %arg15[%c0_110, %c0_111] : memref<1x128xf32, #tpu.memory_space<vmem>>, vector<1x128xf32>
    %307 = vector.broadcast %306 : vector<1x128xf32> to vector<8x128xf32>
    %308 = arith.addf %305, %307 : vector<8x128xf32>
    %309 = vector.shape_cast %308 : vector<8x128xf32> to vector<1x8x128xf32>
    %c0_112 = arith.constant 0 : index
    %c0_113 = arith.constant 0 : index
    %c0_114 = arith.constant 0 : index
    %310 = vector.load %arg16[%c0_112, %c0_113, %c0_114] : memref<1x8x128xf32, #tpu.memory_space<vmem>>, vector<1x8x128xf32>
    tpu.vector_store %arg16[%c0_112, %c0_113, %c0_114], %309 {strides = array<i32>} : memref<1x8x128xf32, #tpu.memory_space<vmem>>, vector<1x8x128xf32>,
    return
  }
  func.func @transform_0(%arg0: i32) -> (i32, i32, i32) {
    %c0_i32 = arith.constant 0 : i32
    %c0_i32_0 = arith.constant 0 : i32
    %c0_i32_1 = arith.constant 0 : i32
    return %arg0, %c0_i32, %c0_i32_0 : i32, i32, i32
  }
  func.func @transform_1(%arg0: i32) -> (i32, i32) {
    %c0_i32 = arith.constant 0 : i32
    %c0_i32_0 = arith.constant 0 : i32
    %c0_i32_1 = arith.constant 0 : i32
    return %c0_i32, %c0_i32_0 : i32, i32
  }
  func.func @transform_2(%arg0: i32) -> (i32, i32, i32) {
    %c0_i32 = arith.constant 0 : i32
    %c0_i32_0 = arith.constant 0 : i32
    %c0_i32_1 = arith.constant 0 : i32
    %c0_i32_2 = arith.constant 0 : i32
    return %c0_i32, %c0_i32_0, %c0_i32_1 : i32, i32, i32
  }
  func.func @transform_3(%arg0: i32) -> (i32, i32, i32) {
    %c0_i32 = arith.constant 0 : i32
    %c0_i32_0 = arith.constant 0 : i32
    %c0_i32_1 = arith.constant 0 : i32
    %c0_i32_2 = arith.constant 0 : i32
    return %c0_i32, %c0_i32_0, %c0_i32_1 : i32, i32, i32
  }
  func.func @transform_4(%arg0: i32) -> (i32, i32, i32) {
    %c0_i32 = arith.constant 0 : i32
    %c0_i32_0 = arith.constant 0 : i32
    %c0_i32_1 = arith.constant 0 : i32
    %c0_i32_2 = arith.constant 0 : i32
    return %c0_i32, %c0_i32_0, %c0_i32_1 : i32, i32, i32
  }
  func.func @transform_5(%arg0: i32) -> (i32, i32, i32) {
    %c0_i32 = arith.constant 0 : i32
    %c0_i32_0 = arith.constant 0 : i32
    %c0_i32_1 = arith.constant 0 : i32
    %c0_i32_2 = arith.constant 0 : i32
    return %c0_i32, %c0_i32_0, %c0_i32_1 : i32, i32, i32
  }
  func.func @transform_6(%arg0: i32) -> (i32, i32, i32) {
    %c0_i32 = arith.constant 0 : i32
    %c0_i32_0 = arith.constant 0 : i32
    %c0_i32_1 = arith.constant 0 : i32
    %c0_i32_2 = arith.constant 0 : i32
    return %c0_i32, %c0_i32_0, %c0_i32_1 : i32, i32, i32
  }
  func.func @transform_7(%arg0: i32) -> (i32, i32, i32) {
    %c0_i32 = arith.constant 0 : i32
    %c0_i32_0 = arith.constant 0 : i32
    %c0_i32_1 = arith.constant 0 : i32
    %c0_i32_2 = arith.constant 0 : i32
    return %c0_i32, %c0_i32_0, %c0_i32_1 : i32, i32, i32
  }
  func.func @transform_8(%arg0: i32) -> (i32, i32, i32) {
    %c0_i32 = arith.constant 0 : i32
    %c0_i32_0 = arith.constant 0 : i32
    %c0_i32_1 = arith.constant 0 : i32
    %c0_i32_2 = arith.constant 0 : i32
    return %c0_i32, %c0_i32_0, %c0_i32_1 : i32, i32, i32
  }
  func.func @transform_9(%arg0: i32) -> (i32, i32, i32) {
    %c0_i32 = arith.constant 0 : i32
    %c0_i32_0 = arith.constant 0 : i32
    %c0_i32_1 = arith.constant 0 : i32
    %c0_i32_2 = arith.constant 0 : i32
    return %c0_i32, %c0_i32_0, %c0_i32_1 : i32, i32, i32
  }
  func.func @transform_10(%arg0: i32) -> (i32, i32, i32) {
    %c0_i32 = arith.constant 0 : i32
    %c0_i32_0 = arith.constant 0 : i32
    %c0_i32_1 = arith.constant 0 : i32
    %c0_i32_2 = arith.constant 0 : i32
    return %c0_i32, %c0_i32_0, %c0_i32_1 : i32, i32, i32
  }
  func.func @transform_11(%arg0: i32) -> (i32, i32) {
    %c0_i32 = arith.constant 0 : i32
    %c0_i32_0 = arith.constant 0 : i32
    %c0_i32_1 = arith.constant 0 : i32
    return %c0_i32, %c0_i32_0 : i32, i32
  }
  func.func @transform_12(%arg0: i32) -> (i32, i32) {
    %c0_i32 = arith.constant 0 : i32
    %c0_i32_0 = arith.constant 0 : i32
    %c0_i32_1 = arith.constant 0 : i32
    return %c0_i32, %c0_i32_0 : i32, i32
  }
  func.func @transform_13(%arg0: i32) -> (i32, i32) {
    %c0_i32 = arith.constant 0 : i32
    %c0_i32_0 = arith.constant 0 : i32
    %c0_i32_1 = arith.constant 0 : i32
    return %c0_i32, %c0_i32_0 : i32, i32
  }
  func.func @transform_14(%arg0: i32) -> (i32, i32) {
    %c0_i32 = arith.constant 0 : i32
    %c0_i32_0 = arith.constant 0 : i32
    %c0_i32_1 = arith.constant 0 : i32
    return %c0_i32, %c0_i32_0 : i32, i32
  }
  func.func @transform_15(%arg0: i32) -> (i32, i32, i32) {
    %c0_i32 = arith.constant 0 : i32
    %c0_i32_0 = arith.constant 0 : i32
    %c0_i32_1 = arith.constant 0 : i32
    return %arg0, %c0_i32, %c0_i32_0 : i32, i32, i32
  }
}

</mosaic_0001>

<llo_original>
// kernel: xpt_forward.1
$region0: #{xpt_forward.1}
  #allocation0 [shape = 'u32[]', space=smem, size = 0x4, offset = 0x4, fixed_abs, tag = 'smem constant byte address 0x4 - core index']
  #allocation1 [shape = 'u32[144,128]{1,0:T(1,128)}', space=vmem, size = 0x12000, scoped, tag = 'internal scratch']
  %s0 = inlined_call_operand.vmem [shape: f32[2,8,128], index: 0, kind: input, shape index: {}]
  %s1 = inlined_call_operand.vmem [shape: f32[8,128], index: 1, kind: input, shape index: {}]
  %s2 = inlined_call_operand.vmem [shape: f32[2,1,128], index: 2, kind: input, shape index: {}]
  %s3 = inlined_call_operand.vmem [shape: f32[2,1,128], index: 3, kind: input, shape index: {}]
  %s4 = inlined_call_operand.hbm [shape: bf16[2,128,384], index: 4, kind: input, shape index: {}]
  %s5 = inlined_call_operand.vmem [shape: f32[2,1,128], index: 5, kind: input, shape index: {}]
  %s6 = inlined_call_operand.vmem [shape: f32[2,1,128], index: 6, kind: input, shape index: {}]
  %s7 = inlined_call_operand.hbm [shape: bf16[2,128,512], index: 7, kind: input, shape index: {}]
  %s8 = inlined_call_operand.vmem [shape: f32[2,1,512], index: 8, kind: input, shape index: {}]
  %s9 = inlined_call_operand.hbm [shape: bf16[2,512,128], index: 9, kind: input, shape index: {}]
  %s10 = inlined_call_operand.vmem [shape: f32[2,1,128], index: 10, kind: input, shape index: {}]
  %s11 = inlined_call_operand.vmem [shape: f32[1,128], index: 11, kind: input, shape index: {}]
  %s12 = inlined_call_operand.vmem [shape: f32[1,128], index: 12, kind: input, shape index: {}]
  %s13 = inlined_call_operand.vmem [shape: bf16[128,128], index: 13, kind: input, shape index: {}]
  %s14 = inlined_call_operand.vmem [shape: f32[1,128], index: 14, kind: input, shape index: {}]
  %s15 = inlined_call_operand.hbm [shape: f32[2,8,128], index: 15, kind: output, shape index: {}]
  %s16 = sld [smem:[#allocation0]]
  $region105: #{xpt_forward.1} parent=0
    _
  %s18 = ssub.s32 1, %s16
  %s19 = scalar_select 0, %s18, %s16
  $region1: #{xpt_forward.1} parent=0
    #allocation2 [shape = 'u8[196608]{0}', space=vmem, size = 0x30000, scoped, tag = 'input window, operand 4, single buffered']
    #allocation3 [shape = 's32[2]{0}', space=sflag, size = 0x8, scoped, tag = 'scoped memory for xpt_forward.1']
    #allocation4 [shape = 's32[2]{0}', space=sflag, size = 0x8, scoped, tag = 'scoped memory for xpt_forward.1']
    #allocation5 [shape = 'u8[262144]{0}', space=vmem, size = 0x40000, scoped, tag = 'input window, operand 7, single buffered']
    #allocation6 [shape = 's32[1]{0}', space=sflag, size = 0x4, scoped, tag = 'scoped memory for xpt_forward.1']
    #allocation7 [shape = 'u8[262144]{0}', space=vmem, size = 0x40000, scoped, tag = 'input window, operand 9, single buffered']
    #allocation8 [shape = 'u8[8192]{0}', space=vmem, size = 0x2000, scoped, tag = 'output window, operand 0']
    %20 = vsyncpa [#allocation3], 0
    %21 = vsyncpa [#allocation6], 0
    %22 = vsyncpa [#allocation4], 0
    %s23 = scalar_lea.sflag [#allocation4], 1
    %24 = vsyncpa %s23, 0
    loop: start=0, step=1, limit=4
    $region2: #{xpt_forward.1} parent=1 // loop_pre_header
      _
    $region3: #{xpt_forward.1} parent=1 // loop_header
      %s26 = sphi 0, %s30
      %p27 = scmp.ge.s32.totalorder %s26, 4
      %s36 = sphi 0, %s38
      %s39 = sphi 0, %s36
      %s40 = sphi 0, %s39
      %s56 = sphi 0, %s40
      %s60 = sphi 0, %s60
      %s62 = sphi 0, %s60
      %s63 = sphi 0, %s62
      %s77 = sphi 0, %s63
      %s81 = sphi 0, %s81
      %s83 = sphi 0, %s81
      %s84 = sphi 0, %s83
      %s98 = sphi 0, %s84
      %s102 = sphi 0, %s102
      %s104 = sphi 0, %s102
      %s105 = sphi 0, %s104
      %s119 = sphi 0, %s105
      %s123 = sphi 0, %s123
      %s125 = sphi 0, %s123
      %s126 = sphi 0, %s125
      %s140 = sphi 0, %s126
      %s144 = sphi 0, %s144
      %s146 = sphi 0, %s144
      %s147 = sphi 0, %s146
      %s161 = sphi 0, %s147
      %s165 = sphi 0, %s165
      %s167 = sphi 0, %s165
      %s168 = sphi 0, %s167
      %s182 = sphi 0, %s168
      %s186 = sphi 0, %s186
      %s188 = sphi 0, %s186
      %s189 = sphi 0, %s188
      %s203 = sphi 0, %s189
      %s207 = sphi 0, %s207
      %s209 = sphi 0, %s207
      %s210 = sphi 0, %s209
      %s224 = sphi 0, %s210
      %s228 = sphi 0, %s228
      %s230 = sphi 0, %s228
      %s231 = sphi 0, %s230
      %s245 = sphi 0, %s231
      %s249 = sphi 0, %s249
      %s251 = sphi 0, %s249
      %s252 = sphi 0, %s251
      %s266 = sphi 0, %s252
      %s270 = sphi 0, %s270
      %s272 = sphi 0, %s270
      %s273 = sphi 0, %s272
      %s287 = sphi 0, %s273
      %s291 = sphi 0, %s291
      %s293 = sphi 0, %s291
      %s294 = sphi 0, %s293
      %s308 = sphi 0, %s294
      %s312 = sphi 0, %s312
      %s314 = sphi 0, %s312
      %s315 = sphi 0, %s314
      %s329 = sphi 0, %s315
      %s333 = sphi 0, %s333
      %s335 = sphi 0, %s333
      %s336 = sphi 0, %s335
      %s350 = sphi 0, %s336
      %s356 = sphi 0, %s358
      %s359 = sphi 0, %s356
      %s360 = sphi 0, %s359
      %s376 = sphi 0, %s360
    $region4: #{xpt_forward.1} parent=1 // loop_header_branch
      %29 = sbr.rel (%p27) target = $region8
    $region5: #{xpt_forward.1} parent=1 // loop_body
      %s31 = ssub.s32 %s26, 1
      %s32 = ssub.s32 %s26, 2
      %s33 = sadd.s32 %s26, 1
      %s34 = ssub.s32 %s26, %s33
      %p35 = scmp.eq.s32.totalorder %s34, 0
      %s37 = sadd.s32 %s36, 1
      %s38 = scalar_select %p35, %s36, %s37
      %p41 = pneg %p35
      %p42 = scmp.eq.s32.totalorder %s26, 1
      %p43 = por %p41, %p42
      %p44 = scmp.ne.s32.totalorder %s36, %s39
      %p45 = scmp.eq.s32.totalorder %s26, 0
      %p46 = por %p44, %p45
      %p47 = scmp.ne.s32.totalorder %s36, %s39
      %p48 = scmp.eq.s32.totalorder %s31, 1
      %p49 = por %p47, %p48
      %p50 = scmp.ne.s32.totalorder %s39, %s40
      %p51 = scmp.eq.s32.totalorder %s31, 0
      %p52 = por %p50, %p51
      %p53 = scmp.ne.s32.totalorder %s39, %s40
      %p54 = scmp.eq.s32.totalorder %s32, 1
      %p55 = por %p53, %p54
      %p57 = scmp.ne.s32.totalorder %s40, %s56
      %p58 = scmp.eq.s32.totalorder %s32, 0
      %p59 = por %p57, %p58
      %s61 = sadd.s32 %s60, 1
      %p64 = scmp.eq.s32.totalorder %s26, 1
      %p65 = scmp.ne.s32.totalorder %s60, %s62
      %p66 = scmp.eq.s32.totalorder %s26, 0
      %p67 = por %p65, %p66
      %p68 = scmp.ne.s32.totalorder %s60, %s62
      %p69 = scmp.eq.s32.totalorder %s31, 1
      %p70 = por %p68, %p69
      %p71 = scmp.ne.s32.totalorder %s62, %s63
      %p72 = scmp.eq.s32.totalorder %s31, 0
      %p73 = por %p71, %p72
      %p74 = scmp.ne.s32.totalorder %s62, %s63
      %p75 = scmp.eq.s32.totalorder %s32, 1
      %p76 = por %p74, %p75
      %p78 = scmp.ne.s32.totalorder %s63, %s77
      %p79 = scmp.eq.s32.totalorder %s32, 0
      %p80 = por %p78, %p79
      %s82 = sadd.s32 %s81, 1
      %p85 = scmp.eq.s32.totalorder %s26, 1
      %p86 = scmp.ne.s32.totalorder %s81, %s83
      %p87 = scmp.eq.s32.totalorder %s26, 0
      %p88 = por %p86, %p87
      %p89 = scmp.ne.s32.totalorder %s81, %s83
      %p90 = scmp.eq.s32.totalorder %s31, 1
      %p91 = por %p89, %p90
      %p92 = scmp.ne.s32.totalorder %s83, %s84
      %p93 = scmp.eq.s32.totalorder %s31, 0
      %p94 = por %p92, %p93
      %p95 = scmp.ne.s32.totalorder %s83, %s84
      %p96 = scmp.eq.s32.totalorder %s32, 1
      %p97 = por %p95, %p96
      %p99 = scmp.ne.s32.totalorder %s84, %s98
      %p100 = scmp.eq.s32.totalorder %s32, 0
      %p101 = por %p99, %p100
      %s103 = sadd.s32 %s102, 1
      %p106 = scmp.eq.s32.totalorder %s26, 1
      %p107 = scmp.ne.s32.totalorder %s102, %s104
      %p108 = scmp.eq.s32.totalorder %s26, 0
      %p109 = por %p107, %p108
      %p110 = scmp.ne.s32.totalorder %s102, %s104
      %p111 = scmp.eq.s32.totalorder %s31, 1
      %p112 = por %p110, %p111
      %p113 = scmp.ne.s32.totalorder %s104, %s105
      %p114 = scmp.eq.s32.totalorder %s31, 0
      %p115 = por %p113, %p114
      %p116 = scmp.ne.s32.totalorder %s104, %s105
      %p117 = scmp.eq.s32.totalorder %s32, 1
      %p118 = por %p116, %p117
      %p120 = scmp.ne.s32.totalorder %s105, %s119
      %p121 = scmp.eq.s32.totalorder %s32, 0
      %p122 = por %p120, %p121
      %s124 = sadd.s32 %s123, 1
      %p127 = scmp.eq.s32.totalorder %s26, 1
      %p128 = scmp.ne.s32.totalorder %s123, %s125
      %p129 = scmp.eq.s32.totalorder %s26, 0
      %p130 = por %p128, %p129
      %p131 = scmp.ne.s32.totalorder %s123, %s125
      %p132 = scmp.eq.s32.totalorder %s31, 1
      %p133 = por %p131, %p132
      %p134 = scmp.ne.s32.totalorder %s125, %s126
      %p135 = scmp.eq.s32.totalorder %s31, 0
      %p136 = por %p134, %p135
      %p137 = scmp.ne.s32.totalorder %s125, %s126
      %p138 = scmp.eq.s32.totalorder %s32, 1
      %p139 = por %p137, %p138
      %p141 = scmp.ne.s32.totalorder %s126, %s140
      %p142 = scmp.eq.s32.totalorder %s32, 0
      %p143 = por %p141, %p142
      %s145 = sadd.s32 %s144, 1
      %p148 = scmp.eq.s32.totalorder %s26, 1
      %p149 = scmp.ne.s32.totalorder %s144, %s146
      %p150 = scmp.eq.s32.totalorder %s26, 0
      %p151 = por %p149, %p150
      %p152 = scmp.ne.s32.totalorder %s144, %s146
      %p153 = scmp.eq.s32.totalorder %s31, 1
      %p154 = por %p152, %p153
      %p155 = scmp.ne.s32.totalorder %s146, %s147
      %p156 = scmp.eq.s32.totalorder %s31, 0
      %p157 = por %p155, %p156
      %p158 = scmp.ne.s32.totalorder %s146, %s147
      %p159 = scmp.eq.s32.totalorder %s32, 1
      %p160 = por %p158, %p159
      %p162 = scmp.ne.s32.totalorder %s147, %s161
      %p163 = scmp.eq.s32.totalorder %s32, 0
      %p164 = por %p162, %p163
      %s166 = sadd.s32 %s165, 1
      %p169 = scmp.eq.s32.totalorder %s26, 1
      %p170 = scmp.ne.s32.totalorder %s165, %s167
      %p171 = scmp.eq.s32.totalorder %s26, 0
      %p172 = por %p170, %p171
      %p173 = scmp.ne.s32.totalorder %s165, %s167
      %p174 = scmp.eq.s32.totalorder %s31, 1
      %p175 = por %p173, %p174
      %p176 = scmp.ne.s32.totalorder %s167, %s168
      %p177 = scmp.eq.s32.totalorder %s31, 0
      %p178 = por %p176, %p177
      %p179 = scmp.ne.s32.totalorder %s167, %s168
      %p180 = scmp.eq.s32.totalorder %s32, 1
      %p181 = por %p179, %p180
      %p183 = scmp.ne.s32.totalorder %s168, %s182
      %p184 = scmp.eq.s32.totalorder %s32, 0
      %p185 = por %p183, %p184
      %s187 = sadd.s32 %s186, 1
      %p190 = scmp.eq.s32.totalorder %s26, 1
      %p191 = scmp.ne.s32.totalorder %s186, %s188
      %p192 = scmp.eq.s32.totalorder %s26, 0
      %p193 = por %p191, %p192
      %p194 = scmp.ne.s32.totalorder %s186, %s188
      %p195 = scmp.eq.s32.totalorder %s31, 1
      %p196 = por %p194, %p195
      %p197 = scmp.ne.s32.totalorder %s188, %s189
      %p198 = scmp.eq.s32.totalorder %s31, 0
      %p199 = por %p197, %p198
      %p200 = scmp.ne.s32.totalorder %s188, %s189
      %p201 = scmp.eq.s32.totalorder %s32, 1
      %p202 = por %p200, %p201
      %p204 = scmp.ne.s32.totalorder %s189, %s203
      %p205 = scmp.eq.s32.totalorder %s32, 0
      %p206 = por %p204, %p205
      %s208 = sadd.s32 %s207, 1
      %p211 = scmp.eq.s32.totalorder %s26, 1
      %p212 = scmp.ne.s32.totalorder %s207, %s209
      %p213 = scmp.eq.s32.totalorder %s26, 0
      %p214 = por %p212, %p213
      %p215 = scmp.ne.s32.totalorder %s207, %s209
      %p216 = scmp.eq.s32.totalorder %s31, 1
      %p217 = por %p215, %p216
      %p218 = scmp.ne.s32.totalorder %s209, %s210
      %p219 = scmp.eq.s32.totalorder %s31, 0
      %p220 = por %p218, %p219
      %p221 = scmp.ne.s32.totalorder %s209, %s210
      %p222 = scmp.eq.s32.totalorder %s32, 1
      %p223 = por %p221, %p222
      %p225 = scmp.ne.s32.totalorder %s210, %s224
      %p226 = scmp.eq.s32.totalorder %s32, 0
      %p227 = por %p225, %p226
      %s229 = sadd.s32 %s228, 1
      %p232 = scmp.eq.s32.totalorder %s26, 1
      %p233 = scmp.ne.s32.totalorder %s228, %s230
      %p234 = scmp.eq.s32.totalorder %s26, 0
      %p235 = por %p233, %p234
      %p236 = scmp.ne.s32.totalorder %s228, %s230
      %p237 = scmp.eq.s32.totalorder %s31, 1
      %p238 = por %p236, %p237
      %p239 = scmp.ne.s32.totalorder %s230, %s231
      %p240 = scmp.eq.s32.totalorder %s31, 0
      %p241 = por %p239, %p240
      %p242 = scmp.ne.s32.totalorder %s230, %s231
      %p243 = scmp.eq.s32.totalorder %s32, 1
      %p244 = por %p242, %p243
      %p246 = scmp.ne.s32.totalorder %s231, %s245
      %p247 = scmp.eq.s32.totalorder %s32, 0
      %p248 = por %p246, %p247
      %s250 = sadd.s32 %s249, 1
      %p253 = scmp.eq.s32.totalorder %s26, 1
      %p254 = scmp.ne.s32.totalorder %s249, %s251
      %p255 = scmp.eq.s32.totalorder %s26, 0
      %p256 = por %p254, %p255
      %p257 = scmp.ne.s32.totalorder %s249, %s251
      %p258 = scmp.eq.s32.totalorder %s31, 1
      %p259 = por %p257, %p258
      %p260 = scmp.ne.s32.totalorder %s251, %s252
      %p261 = scmp.eq.s32.totalorder %s31, 0
      %p262 = por %p260, %p261
      %p263 = scmp.ne.s32.totalorder %s251, %s252
      %p264 = scmp.eq.s32.totalorder %s32, 1
      %p265 = por %p263, %p264
      %p267 = scmp.ne.s32.totalorder %s252, %s266
      %p268 = scmp.eq.s32.totalorder %s32, 0
      %p269 = por %p267, %p268
      %s271 = sadd.s32 %s270, 1
      %p274 = scmp.eq.s32.totalorder %s26, 1
      %p275 = scmp.ne.s32.totalorder %s270, %s272
      %p276 = scmp.eq.s32.totalorder %s26, 0
      %p277 = por %p275, %p276
      %p278 = scmp.ne.s32.totalorder %s270, %s272
      %p279 = scmp.eq.s32.totalorder %s31, 1
      %p280 = por %p278, %p279
      %p281 = scmp.ne.s32.totalorder %s272, %s273
      %p282 = scmp.eq.s32.totalorder %s31, 0
      %p283 = por %p281, %p282
      %p284 = scmp.ne.s32.totalorder %s272, %s273
      %p285 = scmp.eq.s32.totalorder %s32, 1
      %p286 = por %p284, %p285
      %p288 = scmp.ne.s32.totalorder %s273, %s287
      %p289 = scmp.eq.s32.totalorder %s32, 0
      %p290 = por %p288, %p289
      %s292 = sadd.s32 %s291, 1
      %p295 = scmp.eq.s32.totalorder %s26, 1
      %p296 = scmp.ne.s32.totalorder %s291, %s293
      %p297 = scmp.eq.s32.totalorder %s26, 0
      %p298 = por %p296, %p297
      %p299 = scmp.ne.s32.totalorder %s291, %s293
      %p300 = scmp.eq.s32.totalorder %s31, 1
      %p301 = por %p299, %p300
      %p302 = scmp.ne.s32.totalorder %s293, %s294
      %p303 = scmp.eq.s32.totalorder %s31, 0
      %p304 = por %p302, %p303
      %p305 = scmp.ne.s32.totalorder %s293, %s294
      %p306 = scmp.eq.s32.totalorder %s32, 1
      %p307 = por %p305, %p306
      %p309 = scmp.ne.s32.totalorder %s294, %s308
      %p310 = scmp.eq.s32.totalorder %s32, 0
      %p311 = por %p309, %p310
      %s313 = sadd.s32 %s312, 1
      %p316 = scmp.eq.s32.totalorder %s26, 1
      %p317 = scmp.ne.s32.totalorder %s312, %s314
      %p318 = scmp.eq.s32.totalorder %s26, 0
      %p319 = por %p317, %p318
      %p320 = scmp.ne.s32.totalorder %s312, %s314
      %p321 = scmp.eq.s32.totalorder %s31, 1
      %p322 = por %p320, %p321
      %p323 = scmp.ne.s32.totalorder %s314, %s315
      %p324 = scmp.eq.s32.totalorder %s31, 0
      %p325 = por %p323, %p324
      %p326 = scmp.ne.s32.totalorder %s314, %s315
      %p327 = scmp.eq.s32.totalorder %s32, 1
      %p328 = por %p326, %p327
      %p330 = scmp.ne.s32.totalorder %s315, %s329
      %p331 = scmp.eq.s32.totalorder %s32, 0
      %p332 = por %p330, %p331
      %s334 = sadd.s32 %s333, 1
      %p337 = scmp.eq.s32.totalorder %s26, 1
      %p338 = scmp.ne.s32.totalorder %s333, %s335
      %p339 = scmp.eq.s32.totalorder %s26, 0
      %p340 = por %p338, %p339
      %p341 = scmp.ne.s32.totalorder %s333, %s335
      %p342 = scmp.eq.s32.totalorder %s31, 1
      %p343 = por %p341, %p342
      %p344 = scmp.ne.s32.totalorder %s335, %s336
      %p345 = scmp.eq.s32.totalorder %s31, 0
      %p346 = por %p344, %p345
      %p347 = scmp.ne.s32.totalorder %s335, %s336
      %p348 = scmp.eq.s32.totalorder %s32, 1
      %p349 = por %p347, %p348
      %p351 = scmp.ne.s32.totalorder %s336, %s350
      %p352 = scmp.eq.s32.totalorder %s32, 0
      %p353 = por %p351, %p352
      %s354 = ssub.s32 %s26, %s33
      %p355 = scmp.eq.s32.totalorder %s354, 0
      %s357 = sadd.s32 %s356, 1
      %s358 = scalar_select %p355, %s356, %s357
      %p361 = pneg %p355
      %p362 = scmp.eq.s32.totalorder %s26, 1
      %p363 = por %p361, %p362
      %p364 = scmp.ne.s32.totalorder %s356, %s359
      %p365 = scmp.eq.s32.totalorder %s26, 0
      %p366 = por %p364, %p365
      %p367 = scmp.ne.s32.totalorder %s356, %s359
      %p368 = scmp.eq.s32.totalorder %s31, 1
      %p369 = por %p367, %p368
      %p370 = scmp.ne.s32.totalorder %s359, %s360
      %p371 = scmp.eq.s32.totalorder %s31, 0
      %p372 = por %p370, %p371
      %p373 = scmp.ne.s32.totalorder %s359, %s360
      %p374 = scmp.eq.s32.totalorder %s32, 1
      %p375 = por %p373, %p374
      %p377 = scmp.ne.s32.totalorder %s360, %s376
      %p378 = scmp.eq.s32.totalorder %s32, 0
      %p379 = por %p377, %p378
      %p380 = scmp.le.s32.totalorder 1, %s26
      %p381 = scmp.lt.s32.totalorder %s26, 3
      %p382 = pnand %p380, %p381
      %p383 = pneg %p382
      // Predicated region
      $region9: #{xpt_forward.1} parent=5 // pred_check
        _
      $region10: #{xpt_forward.1} parent=5 // pred_check_branch
        %385 = sbr.rel (%p382) target = $region12
      $region11: #{xpt_forward.1} parent=5 // pred_region
        %s386 = ssub.s32 %s26, 1
        // Predicated region
        $region13: #{xpt_forward.1} parent=11 // pred_check
          %p387 = pneg %p73
        $region14: #{xpt_forward.1} parent=11 // pred_check_branch
          %389 = sbr.rel (%p387) target = $region16
        $region15: #{xpt_forward.1} parent=11 // pred_region
          _
        $region16: #{xpt_forward.1} parent=11 // pred_fallthru
          _
        // Predicated region
        $region17: #{xpt_forward.1} parent=11 // pred_check
          %p390 = pneg %p94
        $region18: #{xpt_forward.1} parent=11 // pred_check_branch
          %392 = sbr.rel (%p390) target = $region20
        $region19: #{xpt_forward.1} parent=11 // pred_region
          _
        $region20: #{xpt_forward.1} parent=11 // pred_fallthru
          _
        // Predicated region
        $region21: #{xpt_forward.1} parent=11 // pred_check
          %p393 = pneg %p115
        $region22: #{xpt_forward.1} parent=11 // pred_check_branch
          %395 = sbr.rel (%p393) target = $region24
        $region23: #{xpt_forward.1} parent=11 // pred_region
          _
        $region24: #{xpt_forward.1} parent=11 // pred_fallthru
          _
        // Predicated region
        $region25: #{xpt_forward.1} parent=11 // pred_check
          %p396 = pneg %p136
        $region26: #{xpt_forward.1} parent=11 // pred_check_branch
          %398 = sbr.rel (%p396) target = $region28
        $region27: #{xpt_forward.1} parent=11 // pred_region
          %s400 = ssub.s32 6144, 6144
          %401 = vsyncadd [#allocation3], %s400
          %s402 = sshll.u32 [#allocation2], 4
          %s403 = int_to_ptr.vmem [resolvable:$true] %s402
          %408 = dma.hbm_to_vmem [thread:$0]  %s4, 6144, %s403, [#allocation3], 192, 192, 12
        $region28: #{xpt_forward.1} parent=11 // pred_fallthru
          _
        // Predicated region
        $region29: #{xpt_forward.1} parent=11 // pred_check
          %p409 = pneg %p157
        $region30: #{xpt_forward.1} parent=11 // pred_check_branch
          %411 = sbr.rel (%p409) target = $region32
        $region31: #{xpt_forward.1} parent=11 // pred_region
          _
        $region32: #{xpt_forward.1} parent=11 // pred_fallthru
          _
        // Predicated region
        $region33: #{xpt_forward.1} parent=11 // pred_check
          %p412 = pneg %p178
        $region34: #{xpt_forward.1} parent=11 // pred_check_branch
          %414 = sbr.rel (%p412) target = $region36
        $region35: #{xpt_forward.1} parent=11 // pred_region
          _
        $region36: #{xpt_forward.1} parent=11 // pred_fallthru
          _
        // Predicated region
        $region37: #{xpt_forward.1} parent=11 // pred_check
          %p415 = pneg %p199
        $region38: #{xpt_forward.1} parent=11 // pred_check_branch
          %417 = sbr.rel (%p415) target = $region40
        $region39: #{xpt_forward.1} parent=11 // pred_region
          %s419 = ssub.s32 8192, 8192
          %420 = vsyncadd [#allocation6], %s419
          %s421 = sshll.u32 [#allocation5], 4
          %s422 = int_to_ptr.vmem [resolvable:$true] %s421
          %427 = dma.hbm_to_vmem [thread:$0]  %s7, 8192, %s422, [#allocation6], 256, 256, 16
        $region40: #{xpt_forward.1} parent=11 // pred_fallthru
          _
        // Predicated region
        $region41: #{xpt_forward.1} parent=11 // pred_check
          %p428 = pneg %p220
        $region42: #{xpt_forward.1} parent=11 // pred_check_branch
          %430 = sbr.rel (%p428) target = $region44
        $region43: #{xpt_forward.1} parent=11 // pred_region
          _
        $region44: #{xpt_forward.1} parent=11 // pred_fallthru
          _
        // Predicated region
        $region45: #{xpt_forward.1} parent=11 // pred_check
          %p431 = pneg %p241
        $region46: #{xpt_forward.1} parent=11 // pred_check_branch
          %433 = sbr.rel (%p431) target = $region48
        $region47: #{xpt_forward.1} parent=11 // pred_region
          %s435 = ssub.s32 8192, 8192
          %436 = vsyncadd [#allocation6], %s435
          %s437 = sshll.u32 [#allocation7], 4
          %s438 = int_to_ptr.vmem [resolvable:$true] %s437
          %443 = dma.hbm_to_vmem [thread:$0]  %s9, 8192, %s438, [#allocation6], 64, 64, 4
        $region48: #{xpt_forward.1} parent=11 // pred_fallthru
          _
        // Predicated region
        $region49: #{xpt_forward.1} parent=11 // pred_check
          %p444 = pneg %p262
        $region50: #{xpt_forward.1} parent=11 // pred_check_branch
          %446 = sbr.rel (%p444) target = $region52
        $region51: #{xpt_forward.1} parent=11 // pred_region
          _
        $region52: #{xpt_forward.1} parent=11 // pred_fallthru
          _
        // Predicated region
        $region53: #{xpt_forward.1} parent=11 // pred_check
          %p447 = pneg %p283
        $region54: #{xpt_forward.1} parent=11 // pred_check_branch
          %449 = sbr.rel (%p447) target = $region56
        $region55: #{xpt_forward.1} parent=11 // pred_region
          _
        $region56: #{xpt_forward.1} parent=11 // pred_fallthru
          _
        // Predicated region
        $region57: #{xpt_forward.1} parent=11 // pred_check
          %p450 = pneg %p304
        $region58: #{xpt_forward.1} parent=11 // pred_check_branch
          %452 = sbr.rel (%p450) target = $region60
        $region59: #{xpt_forward.1} parent=11 // pred_region
          _
        $region60: #{xpt_forward.1} parent=11 // pred_fallthru
          _
        // Predicated region
        $region61: #{xpt_forward.1} parent=11 // pred_check
          %p453 = pneg %p325
        $region62: #{xpt_forward.1} parent=11 // pred_check_branch
          %455 = sbr.rel (%p453) target = $region64
        $region63: #{xpt_forward.1} parent=11 // pred_region
          _
        $region64: #{xpt_forward.1} parent=11 // pred_fallthru
          _
        // Predicated region
        $region65: #{xpt_forward.1} parent=11 // pred_check
          %p456 = pneg %p346
        $region66: #{xpt_forward.1} parent=11 // pred_check_branch
          %458 = sbr.rel (%p456) target = $region68
        $region67: #{xpt_forward.1} parent=11 // pred_region
          _
        $region68: #{xpt_forward.1} parent=11 // pred_fallthru
          _
      $region12: #{xpt_forward.1} parent=5 // pred_fallthru
        _
      %p459 = scmp.lt.s32.totalorder %s26, 2
      // Predicated region
      $region69: #{xpt_forward.1} parent=5 // pred_check
        %p460 = pneg %p459
      $region70: #{xpt_forward.1} parent=5 // pred_check_branch
        %462 = sbr.rel (%p460) target = $region72
      $region71: #{xpt_forward.1} parent=5 // pred_region
        // Predicated region
        $region73: #{xpt_forward.1} parent=71 // pred_check
          %p463 = pneg %p46
        $region74: #{xpt_forward.1} parent=71 // pred_check_branch
          %465 = sbr.rel (%p463) target = $region76
        $region75: #{xpt_forward.1} parent=71 // pred_region
          %p466 = scmp.lt.s32.totalorder %s26, 1
          %s467 = scalar_select %p466, %s26, 1
          %s468 = smul.addr %s467, 8
          %s469 = scalar_lea.vmem %s0, %s468
        $region76: #{xpt_forward.1} parent=71 // pred_fallthru
          _
      $region72: #{xpt_forward.1} parent=5 // pred_fallthru
        _
      %p470 = scmp.le.s32.totalorder 1, %s26
      %p471 = scmp.lt.s32.totalorder %s26, 3
      %p472 = pnand %p470, %p471
      %p473 = pneg %p472
      // Predicated region
      $region77: #{xpt_forward.1} parent=5 // pred_check
        _
      $region78: #{xpt_forward.1} parent=5 // pred_check_branch
        %475 = sbr.rel (%p472) target = $region80
      $region79: #{xpt_forward.1} parent=5 // pred_region
        %s476 = ssub.s32 %s26, 1
        // Predicated region
        $region81: #{xpt_forward.1} parent=79 // pred_check
          %p477 = pneg %p136
        $region82: #{xpt_forward.1} parent=79 // pred_check_branch
          %479 = sbr.rel (%p477) target = $region84
        $region83: #{xpt_forward.1} parent=79 // pred_region
          %480 = dma.done [#allocation3], 6144
        $region84: #{xpt_forward.1} parent=79 // pred_fallthru
          _
        // Predicated region
        $region85: #{xpt_forward.1} parent=79 // pred_check
          %p481 = pneg %p199
        $region86: #{xpt_forward.1} parent=79 // pred_check_branch
          %483 = sbr.rel (%p481) target = $region88
        $region87: #{xpt_forward.1} parent=79 // pred_region
          %484 = dma.done [#allocation6], 8192
        $region88: #{xpt_forward.1} parent=79 // pred_fallthru
          _
        // Predicated region
        $region89: #{xpt_forward.1} parent=79 // pred_check
          %p485 = pneg %p241
        $region90: #{xpt_forward.1} parent=79 // pred_check_branch
          %487 = sbr.rel (%p485) target = $region92
        $region91: #{xpt_forward.1} parent=79 // pred_region
          %488 = dma.done [#allocation6], 8192
        $region92: #{xpt_forward.1} parent=79 // pred_fallthru
          _
        %p489 = scmp.lt.s32.totalorder %s31, 1
        %s490 = scalar_select %p489, %s31, 1
        %s491 = smul.addr %s490, 8
        %s492 = scalar_lea.vmem %s0, %s491
        %p493 = pneg %p52
        %p494 = pneg %p49
        %p495 = pneg %p73
        %p496 = pneg %p70
        %p497 = pneg %p94
        %p498 = pneg %p91
        %p499 = pneg %p115
        %p500 = pneg %p112
        %p501 = pneg %p136
        %p502 = pneg %p133
        %p503 = pneg %p157
        %p504 = pneg %p154
        %p505 = pneg %p178
        %p506 = pneg %p175
        %p507 = pneg %p199
        %p508 = pneg %p196
        %p509 = pneg %p220
        %p510 = pneg %p217
        %p511 = pneg %p241
        %p512 = pneg %p238
        %p513 = pneg %p262
        %p514 = pneg %p259
        %p515 = pneg %p283
        %p516 = pneg %p280
        %p517 = pneg %p304
        %p518 = pneg %p301
        %p519 = pneg %p325
        %p520 = pneg %p322
        %p521 = pneg %p346
        %p522 = pneg %p343
        %p523 = pneg %p372
        %p524 = pneg %p369
        %s525 = sand.u32 %s359, 1
        %s526 = scalar_lea.sflag [#allocation4], %s525
        %s527 = sand.u32 %s359, 1
        %s528 = smul.addr %s527, 8
        %s529 = scalar_lea.vmem [#allocation8], %s528
        %p530 = scmp.lt.s32.totalorder %s31, 1
        %s531 = scalar_select %p530, %s31, 1
        %s532 = smul.addr %s531, 8
        %s533 = scalar_lea.vmem %s0, %s532
        %v535 = vld [vmem:[%s533] sm:$0xff]
        %v536 = vld [vmem:[%s1] sm:$0xff]
        %v537 = vadd.f32 %v535, %v536
        %v538 = vlaneseq
        %v539 = vshrl.u32 %v538, 7
        %v540 = vlaneseq
        %v541 = vand.u32 %v540, 127
        %vm542 = vcmp.le.s32.totalorder %v541, %v539
        %v543 = vld [vmem:[%s2] sm:$0x1]
        %v544 = vld [vmem:[%s3] sm:$0x1]
        %545 = vadd.xlane.f32.xlu0 %v537
        %v546 = vpop.xlane.xlu0 %545
        %v547 = vrcp.pop 128.0
        %v548 = vmul.f32 %v546, %v547
        %v549 = vsub.f32 %v537, %v548
        %v550 = vmul.f32 %v549, %v549
        %551 = vadd.xlane.f32.xlu0 %v550
        %v552 = vpop.xlane.xlu0 %551
        %v553 = vmul.f32 %v552, %v547
        %v554 = vadd.f32 %v553, 1e-05
        %v555 = vrsqrt.pop %v554
        %v556 = vmul.f32 %v549, %v555
        %v558 = vlaneseq
        %v559 = vshrl.u32 %v558, 7
        %v560 = vsub.s32 0, %v559
        %v561 = vrot.slane %v543, %v560
        %v563 = vmul.f32 %v556, %v561
        %v565 = vlaneseq
        %v566 = vshrl.u32 %v565, 7
        %v567 = vsub.s32 0, %v566
        %v568 = vrot.slane %v544, %v567
        %v570 = vadd.f32 %v563, %v568
        %v571 = vpack.c.bf16 %v570, %v570
        %v572 = vld [vmem:[#allocation2] sm:$0xff]
        %v573 = vld [vmem:[#allocation2 + $0x8] sm:$0xf]
        %v574 = vld [vmem:[#allocation2 + $0xc] sm:$0xff]
        %v575 = vld [vmem:[#allocation2 + $0x14] sm:$0xf]
        %v576 = vld [vmem:[#allocation2 + $0x18] sm:$0xff]
        %v577 = vld [vmem:[#allocation2 + $0x20] sm:$0xf]
        %v578 = vld [vmem:[#allocation2 + $0x24] sm:$0xff]
        %v579 = vld [vmem:[#allocation2 + $0x2c] sm:$0xf]
        %v580 = vld [vmem:[#allocation2 + $0x30] sm:$0xff]
        %v581 = vld [vmem:[#allocation2 + $0x38] sm:$0xf]
        %v582 = vld [vmem:[#allocation2 + $0x3c] sm:$0xff]
        %v583 = vld [vmem:[#allocation2 + $0x44] sm:$0xf]
        %v584 = vld [vmem:[#allocation2 + $0x48] sm:$0xff]
        %v585 = vld [vmem:[#allocation2 + $0x50] sm:$0xf]
        %v586 = vld [vmem:[#allocation2 + $0x54] sm:$0xff]
        %v587 = vld [vmem:[#allocation2 + $0x5c] sm:$0xf]
        %v588 = vld [vmem:[#allocation2 + $0x60] sm:$0xff]
        %v589 = vld [vmem:[#allocation2 + $0x68] sm:$0xf]
        %v590 = vld [vmem:[#allocation2 + $0x6c] sm:$0xff]
        %v591 = vld [vmem:[#allocation2 + $0x74] sm:$0xf]
        %v592 = vld [vmem:[#allocation2 + $0x78] sm:$0xff]
        %v593 = vld [vmem:[#allocation2 + $0x80] sm:$0xf]
        %v594 = vld [vmem:[#allocation2 + $0x84] sm:$0xff]
        %v595 = vld [vmem:[#allocation2 + $0x8c] sm:$0xf]
        %v596 = vld [vmem:[#allocation2 + $0x90] sm:$0xff]
        %v597 = vld [vmem:[#allocation2 + $0x98] sm:$0xf]
        %v598 = vld [vmem:[#allocation2 + $0x9c] sm:$0xff]
        %v599 = vld [vmem:[#allocation2 + $0xa4] sm:$0xf]
        %v600 = vld [vmem:[#allocation2 + $0xa8] sm:$0xff]
        %v601 = vld [vmem:[#allocation2 + $0xb0] sm:$0xf]
        %v602 = vld [vmem:[#allocation2 + $0xb4] sm:$0xff]
        %v603 = vld [vmem:[#allocation2 + $0xbc] sm:$0xf]
        %v636 = vunpack.c.l.b16 %v572
        %v637 = vunpack.c.h.b16 %v572
        %v638 = vunpack.c.l.b16 %v573
        %v639 = vunpack.c.l.b16 %v574
        %v640 = vunpack.c.h.b16 %v574
        %v641 = vunpack.c.l.b16 %v575
        %v642 = vunpack.c.l.b16 %v576
        %v643 = vunpack.c.h.b16 %v576
        %v644 = vunpack.c.l.b16 %v577
        %v645 = vunpack.c.l.b16 %v578
        %v646 = vunpack.c.h.b16 %v578
        %v647 = vunpack.c.l.b16 %v579
        %v648 = vunpack.c.l.b16 %v580
        %v649 = vunpack.c.h.b16 %v580
        %v650 = vunpack.c.l.b16 %v581
        %v651 = vunpack.c.l.b16 %v582
        %v652 = vunpack.c.h.b16 %v582
        %v653 = vunpack.c.l.b16 %v583
        %v654 = vunpack.c.l.b16 %v584
        %v655 = vunpack.c.h.b16 %v584
        %v656 = vunpack.c.l.b16 %v585
        %v657 = vunpack.c.l.b16 %v586
        %v658 = vunpack.c.h.b16 %v586
        %v659 = vunpack.c.l.b16 %v587
        %v660 = vunpack.c.l.b16 %v588
        %v661 = vunpack.c.h.b16 %v588
        %v662 = vunpack.c.l.b16 %v589
        %v663 = vunpack.c.l.b16 %v590
        %v664 = vunpack.c.h.b16 %v590
        %v665 = vunpack.c.l.b16 %v591
        %v666 = vunpack.c.l.b16 %v592
        %v667 = vunpack.c.h.b16 %v592
        %v668 = vunpack.c.l.b16 %v593
        %v669 = vunpack.c.l.b16 %v594
        %v670 = vunpack.c.h.b16 %v594
        %v671 = vunpack.c.l.b16 %v595
        %v672 = vunpack.c.l.b16 %v596
        %v673 = vunpack.c.h.b16 %v596
        %v674 = vunpack.c.l.b16 %v597
        %v675 = vunpack.c.l.b16 %v598
        %v676 = vunpack.c.h.b16 %v598
        %v677 = vunpack.c.l.b16 %v599
        %v678 = vunpack.c.l.b16 %v600
        %v679 = vunpack.c.h.b16 %v600
        %v680 = vunpack.c.l.b16 %v601
        %v681 = vunpack.c.l.b16 %v602
        %v682 = vunpack.c.h.b16 %v602
        %v683 = vunpack.c.l.b16 %v603
        %v684 = vpack.c.b16 %v639, %v636
        %v685 = vpack.c.b16 %v640, %v637
        %v686 = vpack.c.b16 %v641, %v638
        %v687 = vpack.c.b16 %v645, %v642
        %v688 = vpack.c.b16 %v646, %v643
        %v689 = vpack.c.b16 %v647, %v644
        %v690 = vpack.c.b16 %v651, %v648
        %v691 = vpack.c.b16 %v652, %v649
        %v692 = vpack.c.b16 %v653, %v650
        %v693 = vpack.c.b16 %v657, %v654
        %v694 = vpack.c.b16 %v658, %v655
        %v695 = vpack.c.b16 %v659, %v656
        %v696 = vpack.c.b16 %v663, %v660
        %v697 = vpack.c.b16 %v664, %v661
        %v698 = vpack.c.b16 %v665, %v662
        %v699 = vpack.c.b16 %v669, %v666
        %v700 = vpack.c.b16 %v670, %v667
        %v701 = vpack.c.b16 %v671, %v668
        %v702 = vpack.c.b16 %v675, %v672
        %v703 = vpack.c.b16 %v676, %v673
        %v704 = vpack.c.b16 %v677, %v674
        %v705 = vpack.c.b16 %v681, %v678
        %v706 = vpack.c.b16 %v682, %v679
        %v707 = vpack.c.b16 %v683, %v680
        %732 = vmatprep.subr.bf16.mxu0 %v685
        %733 = vmatpush1.bf16.msra.mxu0 %v684
        %734 = vmatprep.subr.bf16.mxu0 %v688
        %735 = vmatpush1.bf16.msra.mxu0 %v687
        %736 = vmatprep.subr.bf16.mxu0 %v691
        %737 = vmatpush1.bf16.msra.mxu0 %v690
        %738 = vmatprep.subr.bf16.mxu0 %v694
        %739 = vmatpush1.bf16.msra.mxu0 %v693
        %740 = vmatprep.subr.bf16.mxu0 %v697
        %741 = vmatpush1.bf16.msra.mxu0 %v696
        %742 = vmatprep.subr.bf16.mxu0 %v700
        %743 = vmatpush1.bf16.msra.mxu0 %v699
        %744 = vmatprep.subr.bf16.mxu0 %v703
        %745 = vmatpush1.bf16.msra.mxu0 %v702
        %746 = vmatprep.subr.bf16.mxu0 %v706
        %747 = vmatpush1.bf16.msra.mxu0 %v705
        %748 = vmatprep.subr.bf16.mxu0 0
        %749 = vmatpush1.bf16.msra.mxu0 0
        %750 = vmatprep.subr.bf16.mxu0 0
        %751 = vmatpush1.bf16.msra.mxu0 0
        %752 = vmatprep.subr.bf16.mxu0 0
        %753 = vmatpush1.bf16.msra.mxu0 0
        %754 = vmatprep.subr.bf16.mxu0 0
        %755 = vmatpush1.bf16.msra.mxu0 0
        %756 = vmatprep.subr.bf16.mxu0 0
        %757 = vmatpush1.bf16.msra.mxu0 0
        %758 = vmatprep.subr.bf16.mxu0 0
        %759 = vmatpush1.bf16.msra.mxu0 0
        %760 = vmatprep.subr.bf16.mxu0 0
        %761 = vmatpush1.bf16.msra.mxu0 0
        %762 = vmatprep.subr.bf16.mxu0 0
        %763 = vmatpush1.bf16.msra.mxu0 0
        %764 = vmatprep.mubr.bf16.mxu0 0
        %765 = vmatmul.mubr.bf16.gmra.mrb[0].mxu0 %v571
        %v766 = vpop.f32.mrb[0].mxu0
        %v767 = vadd.f32 0.0, %v766
        %v768 = vpop.f32.mrb[0].mxu0
        %v769 = vadd.f32 0.0, %v768
        %v770 = vpop.f32.mrb[0].mxu0
        %v771 = vpop.f32.mrb[0].mxu0
        %772 = vdwg.mxu0
        %773 = vmatprep.subr.bf16.mxu0 0
        %774 = vmatpush1.bf16.msra.mxu0 %v686
        %775 = vmatprep.subr.bf16.mxu0 0
        %776 = vmatpush1.bf16.msra.mxu0 %v689
        %777 = vmatprep.subr.bf16.mxu0 0
        %778 = vmatpush1.bf16.msra.mxu0 %v692
        %779 = vmatprep.subr.bf16.mxu0 0
        %780 = vmatpush1.bf16.msra.mxu0 %v695
        %781 = vmatprep.subr.bf16.mxu0 0
        %782 = vmatpush1.bf16.msra.mxu0 %v698
        %783 = vmatprep.subr.bf16.mxu0 0
        %784 = vmatpush1.bf16.msra.mxu0 %v701
        %785 = vmatprep.subr.bf16.mxu0 0
        %786 = vmatpush1.bf16.msra.mxu0 %v704
        %787 = vmatprep.subr.bf16.mxu0 0
        %788 = vmatpush1.bf16.msra.mxu0 %v707
        %789 = vmatprep.subr.bf16.mxu0 0
        %790 = vmatpush1.bf16.msra.mxu0 0
        %791 = vmatprep.subr.bf16.mxu0 0
        %792 = vmatpush1.bf16.msra.mxu0 0
        %793 = vmatprep.subr.bf16.mxu0 0
        %794 = vmatpush1.bf16.msra.mxu0 0
        %795 = vmatprep.subr.bf16.mxu0 0
        %796 = vmatpush1.bf16.msra.mxu0 0
        %797 = vmatprep.subr.bf16.mxu0 0
        %798 = vmatpush1.bf16.msra.mxu0 0
        %799 = vmatprep.subr.bf16.mxu0 0
        %800 = vmatpush1.bf16.msra.mxu0 0
        %801 = vmatprep.subr.bf16.mxu0 0
        %802 = vmatpush1.bf16.msra.mxu0 0
        %803 = vmatprep.subr.bf16.mxu0 0
        %804 = vmatpush1.bf16.msra.mxu0 0
        %805 = vmatprep.mubr.bf16.mxu0 0
        %806 = vmatmul.mubr.bf16.gmra.mrb[0].mxu0 %v571
        %v807 = vpop.f32.mrb[0].mxu0
        %v808 = vadd.f32 0.0, %v807
        %v809 = vpop.f32.mrb[0].mxu0
        %v810 = vpop.f32.mrb[0].mxu0
        %v811 = vpop.f32.mrb[0].mxu0
        %812 = vdwg.mxu0
        %814 = vrot.lane.b32.xlu0 %v767, 96
        %v815 = vpop.permute.xlu0 %814
        %817 = vrot.lane.b32.xlu0 %v767, 64
        %v818 = vpop.permute.xlu0 %817
        %820 = vrot.lane.b32.xlu0 %v767, 32
        %v821 = vpop.permute.xlu0 %820
        %824 = vrot.lane.b32.xlu0 %v769, 96
        %v825 = vpop.permute.xlu0 %824
        %827 = vrot.lane.b32.xlu0 %v769, 64
        %v828 = vpop.permute.xlu0 %827
        %830 = vrot.lane.b32.xlu0 %v769, 32
        %v831 = vpop.permute.xlu0 %830
        %834 = vrot.lane.b32.xlu0 %v808, 96
        %v835 = vpop.permute.xlu0 %834
        %837 = vrot.lane.b32.xlu0 %v808, 64
        %v838 = vpop.permute.xlu0 %837
        %840 = vrot.lane.b32.xlu0 %v808, 32
        %v841 = vpop.permute.xlu0 %840
        %v843 = vpack.c.bf16 %v767, %v767
        %v844 = vpack.c.bf16 %v815, %v815
        %v845 = vpack.c.bf16 %v818, %v818
        %v846 = vpack.c.bf16 %v821, %v821
        %v847 = vpack.c.bf16 %v769, %v769
        %v848 = vpack.c.bf16 %v825, %v825
        %v849 = vpack.c.bf16 %v828, %v828
        %v850 = vpack.c.bf16 %v831, %v831
        %vm851 = vcmask 261120
        %v853 = vsel %vm851, %v843, 0
        %v856 = vsel %vm851, %v847, 0
        %858 = vmatprep.subr.bf16.mxu0 0
        %859 = vmatpush1.bf16.xpose.msra.mxu0 %v856
        %860 = vmatprep.subr.bf16.mxu0 0
        %861 = vmatpush1.bf16.xpose.msra.mxu0 0
        %862 = vmatprep.subr.bf16.mxu0 0
        %863 = vmatpush1.bf16.xpose.msra.mxu0 0
        %864 = vmatprep.subr.bf16.mxu0 0
        %865 = vmatpush1.bf16.xpose.msra.mxu0 0
        %866 = vmatprep.subr.bf16.mxu0 0
        %867 = vmatpush1.bf16.xpose.msra.mxu0 0
        %868 = vmatprep.subr.bf16.mxu0 0
        %869 = vmatpush1.bf16.xpose.msra.mxu0 0
        %870 = vmatprep.subr.bf16.mxu0 0
        %871 = vmatpush1.bf16.xpose.msra.mxu0 0
        %872 = vmatprep.subr.bf16.mxu0 0
        %873 = vmatpush1.bf16.xpose.msra.mxu0 0
        %874 = vmatprep.subr.bf16.mxu0 0
        %875 = vmatpush1.bf16.xpose.msra.mxu0 0
        %876 = vmatprep.subr.bf16.mxu0 0
        %877 = vmatpush1.bf16.xpose.msra.mxu0 0
        %878 = vmatprep.subr.bf16.mxu0 0
        %879 = vmatpush1.bf16.xpose.msra.mxu0 0
        %880 = vmatprep.subr.bf16.mxu0 0
        %881 = vmatpush1.bf16.xpose.msra.mxu0 0
        %882 = vmatprep.subr.bf16.mxu0 0
        %883 = vmatpush1.bf16.xpose.msra.mxu0 0
        %884 = vmatprep.subr.bf16.mxu0 0
        %885 = vmatpush1.bf16.xpose.msra.mxu0 0
        %886 = vmatprep.subr.bf16.mxu0 0
        %887 = vmatpush1.bf16.xpose.msra.mxu0 0
        %888 = vmatprep.subr.bf16.mxu0 0
        %889 = vmatpush1.bf16.xpose.msra.mxu0 0
        %890 = vmatprep.mubr.bf16.mxu0 0
        %891 = vmatmul.mubr.bf16.gmra.mrb[0].mxu0 %v853
        %v892 = vpop.f32.mrb[0].mxu0
        %v893 = vadd.f32 0.0, %v892
        %v894 = vpop.f32.mrb[0].mxu0
        %v895 = vpop.f32.mrb[0].mxu0
        %v896 = vpop.f32.mrb[0].mxu0
        %897 = vdwg.mxu0
        %v899 = vsel %vm851, %v844, 0
        %v902 = vsel %vm851, %v848, 0
        %904 = vmatprep.subr.bf16.mxu0 0
        %905 = vmatpush1.bf16.xpose.msra.mxu0 %v902
        %906 = vmatprep.subr.bf16.mxu0 0
        %907 = vmatpush1.bf16.xpose.msra.mxu0 0
        %908 = vmatprep.subr.bf16.mxu0 0
        %909 = vmatpush1.bf16.xpose.msra.mxu0 0
        %910 = vmatprep.subr.bf16.mxu0 0
        %911 = vmatpush1.bf16.xpose.msra.mxu0 0
        %912 = vmatprep.subr.bf16.mxu0 0
        %913 = vmatpush1.bf16.xpose.msra.mxu0 0
        %914 = vmatprep.subr.bf16.mxu0 0
        %915 = vmatpush1.bf16.xpose.msra.mxu0 0
        %916 = vmatprep.subr.bf16.mxu0 0
        %917 = vmatpush1.bf16.xpose.msra.mxu0 0
        %918 = vmatprep.subr.bf16.mxu0 0
        %919 = vmatpush1.bf16.xpose.msra.mxu0 0
        %920 = vmatprep.subr.bf16.mxu0 0
        %921 = vmatpush1.bf16.xpose.msra.mxu0 0
        %922 = vmatprep.subr.bf16.mxu0 0
        %923 = vmatpush1.bf16.xpose.msra.mxu0 0
        %924 = vmatprep.subr.bf16.mxu0 0
        %925 = vmatpush1.bf16.xpose.msra.mxu0 0
        %926 = vmatprep.subr.bf16.mxu0 0
        %927 = vmatpush1.bf16.xpose.msra.mxu0 0
        %928 = vmatprep.subr.bf16.mxu0 0
        %929 = vmatpush1.bf16.xpose.msra.mxu0 0
        %930 = vmatprep.subr.bf16.mxu0 0
        %931 = vmatpush1.bf16.xpose.msra.mxu0 0
        %932 = vmatprep.subr.bf16.mxu0 0
        %933 = vmatpush1.bf16.xpose.msra.mxu0 0
        %934 = vmatprep.subr.bf16.mxu0 0
        %935 = vmatpush1.bf16.xpose.msra.mxu0 0
        %936 = vmatprep.mubr.bf16.mxu0 0
        %937 = vmatmul.mubr.bf16.gmra.mrb[0].mxu0 %v899
        %v938 = vpop.f32.mrb[0].mxu0
        %v939 = vadd.f32 0.0, %v938
        %v940 = vpop.f32.mrb[0].mxu0
        %v941 = vpop.f32.mrb[0].mxu0
        %v942 = vpop.f32.mrb[0].mxu0
        %943 = vdwg.mxu0
        %v945 = vsel %vm851, %v845, 0
        %v948 = vsel %vm851, %v849, 0
        %950 = vmatprep.subr.bf16.mxu0 0
        %951 = vmatpush1.bf16.xpose.msra.mxu0 %v948
        %952 = vmatprep.subr.bf16.mxu0 0
        %953 = vmatpush1.bf16.xpose.msra.mxu0 0
        %954 = vmatprep.subr.bf16.mxu0 0
        %955 = vmatpush1.bf16.xpose.msra.mxu0 0
        %956 = vmatprep.subr.bf16.mxu0 0
        %957 = vmatpush1.bf16.xpose.msra.mxu0 0
        %958 = vmatprep.subr.bf16.mxu0 0
        %959 = vmatpush1.bf16.xpose.msra.mxu0 0
        %960 = vmatprep.subr.bf16.mxu0 0
        %961 = vmatpush1.bf16.xpose.msra.mxu0 0
        %962 = vmatprep.subr.bf16.mxu0 0
        %963 = vmatpush1.bf16.xpose.msra.mxu0 0
        %964 = vmatprep.subr.bf16.mxu0 0
        %965 = vmatpush1.bf16.xpose.msra.mxu0 0
        %966 = vmatprep.subr.bf16.mxu0 0
        %967 = vmatpush1.bf16.xpose.msra.mxu0 0
        %968 = vmatprep.subr.bf16.mxu0 0
        %969 = vmatpush1.bf16.xpose.msra.mxu0 0
        %970 = vmatprep.subr.bf16.mxu0 0
        %971 = vmatpush1.bf16.xpose.msra.mxu0 0
        %972 = vmatprep.subr.bf16.mxu0 0
        %973 = vmatpush1.bf16.xpose.msra.mxu0 0
        %974 = vmatprep.subr.bf16.mxu0 0
        %975 = vmatpush1.bf16.xpose.msra.mxu0 0
        %976 = vmatprep.subr.bf16.mxu0 0
        %977 = vmatpush1.bf16.xpose.msra.mxu0 0
        %978 = vmatprep.subr.bf16.mxu0 0
        %979 = vmatpush1.bf16.xpose.msra.mxu0 0
        %980 = vmatprep.subr.bf16.mxu0 0
        %981 = vmatpush1.bf16.xpose.msra.mxu0 0
        %982 = vmatprep.mubr.bf16.mxu0 0
        %983 = vmatmul.mubr.bf16.gmra.mrb[0].mxu0 %v945
        %v984 = vpop.f32.mrb[0].mxu0
        %v985 = vadd.f32 0.0, %v984
        %v986 = vpop.f32.mrb[0].mxu0
        %v987 = vpop.f32.mrb[0].mxu0
        %v988 = vpop.f32.mrb[0].mxu0
        %989 = vdwg.mxu0
        %v991 = vsel %vm851, %v846, 0
        %v994 = vsel %vm851, %v850, 0
        %996 = vmatprep.subr.bf16.mxu0 0
        %997 = vmatpush1.bf16.xpose.msra.mxu0 %v994
        %998 = vmatprep.subr.bf16.mxu0 0
        %999 = vmatpush1.bf16.xpose.msra.mxu0 0
        %1000 = vmatprep.subr.bf16.mxu0 0
        %1001 = vmatpush1.bf16.xpose.msra.mxu0 0
        %1002 = vmatprep.subr.bf16.mxu0 0
        %1003 = vmatpush1.bf16.xpose.msra.mxu0 0
        %1004 = vmatprep.subr.bf16.mxu0 0
        %1005 = vmatpush1.bf16.xpose.msra.mxu0 0
        %1006 = vmatprep.subr.bf16.mxu0 0
        %1007 = vmatpush1.bf16.xpose.msra.mxu0 0
        %1008 = vmatprep.subr.bf16.mxu0 0
        %1009 = vmatpush1.bf16.xpose.msra.mxu0 0
        %1010 = vmatprep.subr.bf16.mxu0 0
        %1011 = vmatpush1.bf16.xpose.msra.mxu0 0
        %1012 = vmatprep.subr.bf16.mxu0 0
        %1013 = vmatpush1.bf16.xpose.msra.mxu0 0
        %1014 = vmatprep.subr.bf16.mxu0 0
        %1015 = vmatpush1.bf16.xpose.msra.mxu0 0
        %1016 = vmatprep.subr.bf16.mxu0 0
        %1017 = vmatpush1.bf16.xpose.msra.mxu0 0
        %1018 = vmatprep.subr.bf16.mxu0 0
        %1019 = vmatpush1.bf16.xpose.msra.mxu0 0
        %1020 = vmatprep.subr.bf16.mxu0 0
        %1021 = vmatpush1.bf16.xpose.msra.mxu0 0
        %1022 = vmatprep.subr.bf16.mxu0 0
        %1023 = vmatpush1.bf16.xpose.msra.mxu0 0
        %1024 = vmatprep.subr.bf16.mxu0 0
        %1025 = vmatpush1.bf16.xpose.msra.mxu0 0
        %1026 = vmatprep.subr.bf16.mxu0 0
        %1027 = vmatpush1.bf16.xpose.msra.mxu0 0
        %1028 = vmatprep.mubr.bf16.mxu0 0
        %1029 = vmatmul.mubr.bf16.gmra.mrb[0].mxu0 %v991
        %v1030 = vpop.f32.mrb[0].mxu0
        %v1031 = vadd.f32 0.0, %v1030
        %v1032 = vpop.f32.mrb[0].mxu0
        %v1033 = vpop.f32.mrb[0].mxu0
        %v1034 = vpop.f32.mrb[0].mxu0
        %1035 = vdwg.mxu0
        %v1036 = vmul.f32 %v893, 0.17677669
        %v1037 = vmul.f32 %v939, 0.17677669
        %v1038 = vmul.f32 %v985, 0.17677669
        %v1039 = vmul.f32 %v1031, 0.17677669
        %v1040 = vsel %vm542, 1, 0
        %vm1041 = vcmp.eq.s32.totalorder %v1040, 1
        %v1042 = vsel %vm1041, %v1036, -1e+30
        %v1043 = vsel %vm1041, %v1037, -1e+30
        %v1044 = vsel %vm1041, %v1038, -1e+30
        %v1045 = vsel %vm1041, %v1039, -1e+30
        %vm1046 = vcmask 64512
        %v1047 = vsel %vm1046, %v1042, -inf
        %1048 = vmax.xlane.f32.xlu0 %v1047
        %v1049 = vpop.xlane.xlu0 %1048
        %v1050 = vsel %vm1046, %v1043, -inf
        %1051 = vmax.xlane.f32.xlu0 %v1050
        %v1052 = vpop.xlane.xlu0 %1051
        %v1053 = vsel %vm1046, %v1044, -inf
        %1054 = vmax.xlane.f32.xlu0 %v1053
        %v1055 = vpop.xlane.xlu0 %1054
        %v1056 = vsel %vm1046, %v1045, -inf
        %1057 = vmax.xlane.f32.xlu0 %v1056
        %v1058 = vpop.xlane.xlu0 %1057
        %v1059 = vsub.f32 %v1042, %v1049
        %v1060 = vsub.f32 %v1043, %v1052
        %v1061 = vsub.f32 %v1044, %v1055
        %v1062 = vsub.f32 %v1045, %v1058
        %v1063 = vmul.f32 %v1059, 1.442695
        %v1064 = vpow.pop %v1063
        %v1065 = vmul.f32 %v1060, 1.442695
        %v1066 = vpow.pop %v1065
        %v1067 = vmul.f32 %v1061, 1.442695
        %v1068 = vpow.pop %v1067
        %v1069 = vmul.f32 %v1062, 1.442695
        %v1070 = vpow.pop %v1069
        %v1071 = vsel %vm1046, %v1064, 0.0
        %1072 = vadd.xlane.f32.xlu0 %v1071
        %v1073 = vpop.xlane.xlu0 %1072
        %v1074 = vsel %vm1046, %v1066, 0.0
        %1075 = vadd.xlane.f32.xlu0 %v1074
        %v1076 = vpop.xlane.xlu0 %1075
        %v1077 = vsel %vm1046, %v1068, 0.0
        %1078 = vadd.xlane.f32.xlu0 %v1077
        %v1079 = vpop.xlane.xlu0 %1078
        %v1080 = vsel %vm1046, %v1070, 0.0
        %1081 = vadd.xlane.f32.xlu0 %v1080
        %v1082 = vpop.xlane.xlu0 %1081
        %v1083 = vrcp.pop %v1073
        %v1084 = vmul.f32 %v1064, %v1083
        %v1085 = vrcp.pop %v1076
        %v1086 = vmul.f32 %v1066, %v1085
        %v1087 = vrcp.pop %v1079
        %v1088 = vmul.f32 %v1068, %v1087
        %v1089 = vrcp.pop %v1082
        %v1090 = vmul.f32 %v1070, %v1089
        %v1091 = vpack.c.bf16 %v1084, %v1084
        %v1092 = vpack.c.bf16 %v1086, %v1086
        %v1093 = vpack.c.bf16 %v1088, %v1088
        %v1094 = vpack.c.bf16 %v1090, %v1090
        %v1095 = vpack.c.bf16 %v808, %v808
        %v1096 = vpack.c.bf16 %v835, %v835
        %v1097 = vpack.c.bf16 %v838, %v838
        %v1098 = vpack.c.bf16 %v841, %v841
        %v1100 = vsel %vm1046, %v1091, 0
        %vm1102 = vcmask 1043456
        %v1104 = vsel %vm1102, %v1095, 0
        %1106 = vmatprep.subr.bf16.mxu0 0
        %1107 = vmatpush1.bf16.msra.mxu0 %v1104
        %1108 = vmatprep.subr.bf16.mxu0 0
        %1109 = vmatpush1.bf16.msra.mxu0 0
        %1110 = vmatprep.subr.bf16.mxu0 0
        %1111 = vmatpush1.bf16.msra.mxu0 0
        %1112 = vmatprep.subr.bf16.mxu0 0
        %1113 = vmatpush1.bf16.msra.mxu0 0
        %1114 = vmatprep.subr.bf16.mxu0 0
        %1115 = vmatpush1.bf16.msra.mxu0 0
        %1116 = vmatprep.subr.bf16.mxu0 0
        %1117 = vmatpush1.bf16.msra.mxu0 0
        %1118 = vmatprep.subr.bf16.mxu0 0
        %1119 = vmatpush1.bf16.msra.mxu0 0
        %1120 = vmatprep.subr.bf16.mxu0 0
        %1121 = vmatpush1.bf16.msra.mxu0 0
        %1122 = vmatprep.subr.bf16.mxu0 0
        %1123 = vmatpush1.bf16.msra.mxu0 0
        %1124 = vmatprep.subr.bf16.mxu0 0
        %1125 = vmatpush1.bf16.msra.mxu0 0
        %1126 = vmatprep.subr.bf16.mxu0 0
        %1127 = vmatpush1.bf16.msra.mxu0 0
        %1128 = vmatprep.subr.bf16.mxu0 0
        %1129 = vmatpush1.bf16.msra.mxu0 0
        %1130 = vmatprep.subr.bf16.mxu0 0
        %1131 = vmatpush1.bf16.msra.mxu0 0
        %1132 = vmatprep.subr.bf16.mxu0 0
        %1133 = vmatpush1.bf16.msra.mxu0 0
        %1134 = vmatprep.subr.bf16.mxu0 0
        %1135 = vmatpush1.bf16.msra.mxu0 0
        %1136 = vmatprep.subr.bf16.mxu0 0
        %1137 = vmatpush1.bf16.msra.mxu0 0
        %1138 = vmatprep.mubr.bf16.mxu0 0
        %1139 = vmatmul.mubr.bf16.gmra.mrb[0].mxu0 %v1100
        %v1140 = vpop.f32.mrb[0].mxu0
        %v1141 = vadd.f32 0.0, %v1140
        %v1142 = vpop.f32.mrb[0].mxu0
        %v1143 = vpop.f32.mrb[0].mxu0
        %v1144 = vpop.f32.mrb[0].mxu0
        %1145 = vdwg.mxu0
        %v1147 = vsel %vm1046, %v1092, 0
        %v1150 = vsel %vm1102, %v1096, 0
        %1152 = vmatprep.subr.bf16.mxu0 0
        %1153 = vmatpush1.bf16.msra.mxu0 %v1150
        %1154 = vmatprep.subr.bf16.mxu0 0
        %1155 = vmatpush1.bf16.msra.mxu0 0
        %1156 = vmatprep.subr.bf16.mxu0 0
        %1157 = vmatpush1.bf16.msra.mxu0 0
        %1158 = vmatprep.subr.bf16.mxu0 0
        %1159 = vmatpush1.bf16.msra.mxu0 0
        %1160 = vmatprep.subr.bf16.mxu0 0
        %1161 = vmatpush1.bf16.msra.mxu0 0
        %1162 = vmatprep.subr.bf16.mxu0 0
        %1163 = vmatpush1.bf16.msra.mxu0 0
        %1164 = vmatprep.subr.bf16.mxu0 0
        %1165 = vmatpush1.bf16.msra.mxu0 0
        %1166 = vmatprep.subr.bf16.mxu0 0
        %1167 = vmatpush1.bf16.msra.mxu0 0
        %1168 = vmatprep.subr.bf16.mxu0 0
        %1169 = vmatpush1.bf16.msra.mxu0 0
        %1170 = vmatprep.subr.bf16.mxu0 0
        %1171 = vmatpush1.bf16.msra.mxu0 0
        %1172 = vmatprep.subr.bf16.mxu0 0
        %1173 = vmatpush1.bf16.msra.mxu0 0
        %1174 = vmatprep.subr.bf16.mxu0 0
        %1175 = vmatpush1.bf16.msra.mxu0 0
        %1176 = vmatprep.subr.bf16.mxu0 0
        %1177 = vmatpush1.bf16.msra.mxu0 0
        %1178 = vmatprep.subr.bf16.mxu0 0
        %1179 = vmatpush1.bf16.msra.mxu0 0
        %1180 = vmatprep.subr.bf16.mxu0 0
        %1181 = vmatpush1.bf16.msra.mxu0 0
        %1182 = vmatprep.subr.bf16.mxu0 0
        %1183 = vmatpush1.bf16.msra.mxu0 0
        %1184 = vmatprep.mubr.bf16.mxu0 0
        %1185 = vmatmul.mubr.bf16.gmra.mrb[0].mxu0 %v1147
        %v1186 = vpop.f32.mrb[0].mxu0
        %v1187 = vadd.f32 0.0, %v1186
        %v1188 = vpop.f32.mrb[0].mxu0
        %v1189 = vpop.f32.mrb[0].mxu0
        %v1190 = vpop.f32.mrb[0].mxu0
        %1191 = vdwg.mxu0
        %v1193 = vsel %vm1046, %v1093, 0
        %v1196 = vsel %vm1102, %v1097, 0
        %1198 = vmatprep.subr.bf16.mxu0 0
        %1199 = vmatpush1.bf16.msra.mxu0 %v1196
        %1200 = vmatprep.subr.bf16.mxu0 0
        %1201 = vmatpush1.bf16.msra.mxu0 0
        %1202 = vmatprep.subr.bf16.mxu0 0
        %1203 = vmatpush1.bf16.msra.mxu0 0
        %1204 = vmatprep.subr.bf16.mxu0 0
        %1205 = vmatpush1.bf16.msra.mxu0 0
        %1206 = vmatprep.subr.bf16.mxu0 0
        %1207 = vmatpush1.bf16.msra.mxu0 0
        %1208 = vmatprep.subr.bf16.mxu0 0
        %1209 = vmatpush1.bf16.msra.mxu0 0
        %1210 = vmatprep.subr.bf16.mxu0 0
        %1211 = vmatpush1.bf16.msra.mxu0 0
        %1212 = vmatprep.subr.bf16.mxu0 0
        %1213 = vmatpush1.bf16.msra.mxu0 0
        %1214 = vmatprep.subr.bf16.mxu0 0
        %1215 = vmatpush1.bf16.msra.mxu0 0
        %1216 = vmatprep.subr.bf16.mxu0 0
        %1217 = vmatpush1.bf16.msra.mxu0 0
        %1218 = vmatprep.subr.bf16.mxu0 0
        %1219 = vmatpush1.bf16.msra.mxu0 0
        %1220 = vmatprep.subr.bf16.mxu0 0
        %1221 = vmatpush1.bf16.msra.mxu0 0
        %1222 = vmatprep.subr.bf16.mxu0 0
        %1223 = vmatpush1.bf16.msra.mxu0 0
        %1224 = vmatprep.subr.bf16.mxu0 0
        %1225 = vmatpush1.bf16.msra.mxu0 0
        %1226 = vmatprep.subr.bf16.mxu0 0
        %1227 = vmatpush1.bf16.msra.mxu0 0
        %1228 = vmatprep.subr.bf16.mxu0 0
        %1229 = vmatpush1.bf16.msra.mxu0 0
        %1230 = vmatprep.mubr.bf16.mxu0 0
        %1231 = vmatmul.mubr.bf16.gmra.mrb[0].mxu0 %v1193
        %v1232 = vpop.f32.mrb[0].mxu0
        %v1233 = vadd.f32 0.0, %v1232
        %v1234 = vpop.f32.mrb[0].mxu0
        %v1235 = vpop.f32.mrb[0].mxu0
        %v1236 = vpop.f32.mrb[0].mxu0
        %1237 = vdwg.mxu0
        %v1239 = vsel %vm1046, %v1094, 0
        %v1242 = vsel %vm1102, %v1098, 0
        %1244 = vmatprep.subr.bf16.mxu0 0
        %1245 = vmatpush1.bf16.msra.mxu0 %v1242
        %1246 = vmatprep.subr.bf16.mxu0 0
        %1247 = vmatpush1.bf16.msra.mxu0 0
        %1248 = vmatprep.subr.bf16.mxu0 0
        %1249 = vmatpush1.bf16.msra.mxu0 0
        %1250 = vmatprep.subr.bf16.mxu0 0
        %1251 = vmatpush1.bf16.msra.mxu0 0
        %1252 = vmatprep.subr.bf16.mxu0 0
        %1253 = vmatpush1.bf16.msra.mxu0 0
        %1254 = vmatprep.subr.bf16.mxu0 0
        %1255 = vmatpush1.bf16.msra.mxu0 0
        %1256 = vmatprep.subr.bf16.mxu0 0
        %1257 = vmatpush1.bf16.msra.mxu0 0
        %1258 = vmatprep.subr.bf16.mxu0 0
        %1259 = vmatpush1.bf16.msra.mxu0 0
        %1260 = vmatprep.subr.bf16.mxu0 0
        %1261 = vmatpush1.bf16.msra.mxu0 0
        %1262 = vmatprep.subr.bf16.mxu0 0
        %1263 = vmatpush1.bf16.msra.mxu0 0
        %1264 = vmatprep.subr.bf16.mxu0 0
        %1265 = vmatpush1.bf16.msra.mxu0 0
        %1266 = vmatprep.subr.bf16.mxu0 0
        %1267 = vmatpush1.bf16.msra.mxu0 0
        %1268 = vmatprep.subr.bf16.mxu0 0
        %1269 = vmatpush1.bf16.msra.mxu0 0
        %1270 = vmatprep.subr.bf16.mxu0 0
        %1271 = vmatpush1.bf16.msra.mxu0 0
        %1272 = vmatprep.subr.bf16.mxu0 0
        %1273 = vmatpush1.bf16.msra.mxu0 0
        %1274 = vmatprep.subr.bf16.mxu0 0
        %1275 = vmatpush1.bf16.msra.mxu0 0
        %1276 = vmatprep.mubr.bf16.mxu0 0
        %1277 = vmatmul.mubr.bf16.gmra.mrb[0].mxu0 %v1239
        %v1278 = vpop.f32.mrb[0].mxu0
        %v1279 = vadd.f32 0.0, %v1278
        %v1280 = vpop.f32.mrb[0].mxu0
        %v1281 = vpop.f32.mrb[0].mxu0
        %v1282 = vpop.f32.mrb[0].mxu0
        %1283 = vdwg.mxu0
        %1285 = vrot.lane.b32.xlu0 %v1187, 32
        %v1286 = vpop.permute.xlu0 %1285
        %1289 = vrot.lane.b32.xlu0 %v1233, 64
        %v1290 = vpop.permute.xlu0 %1289
        %1293 = vrot.lane.b32.xlu0 %v1279, 96
        %v1294 = vpop.permute.xlu0 %1293
        %v1296 = vsel %vm851, %v1141, %v1286
        %vm1297 = vcmask 523264
        %v1298 = vsel %vm1297, %v1296, %v1290
        %vm1299 = vcmask 785408
        %v1300 = vsel %vm1299, %v1298, %v1294
        %v1301 = vadd.f32 %v537, %v1300
        %v1302 = vld [vmem:[%s5] sm:$0x1]
        %v1303 = vld [vmem:[%s6] sm:$0x1]
        %1304 = vadd.xlane.f32.xlu0 %v1301
        %v1305 = vpop.xlane.xlu0 %1304
        %v1306 = vmul.f32 %v1305, %v547
        %v1307 = vsub.f32 %v1301, %v1306
        %v1308 = vmul.f32 %v1307, %v1307
        %1309 = vadd.xlane.f32.xlu0 %v1308
        %v1310 = vpop.xlane.xlu0 %1309
        %v1311 = vmul.f32 %v1310, %v547
        %v1312 = vadd.f32 %v1311, 1e-05
        %v1313 = vrsqrt.pop %v1312
        %v1314 = vmul.f32 %v1307, %v1313
        %v1316 = vlaneseq
        %v1317 = vshrl.u32 %v1316, 7
        %v1318 = vsub.s32 0, %v1317
        %v1319 = vrot.slane %v1302, %v1318
        %v1321 = vmul.f32 %v1314, %v1319
        %v1323 = vlaneseq
        %v1324 = vshrl.u32 %v1323, 7
        %v1325 = vsub.s32 0, %v1324
        %v1326 = vrot.slane %v1303, %v1325
        %v1328 = vadd.f32 %v1321, %v1326
        %v1329 = vpack.c.bf16 %v1328, %v1328
        %v1330 = vld [vmem:[#allocation5] sm:$0xff]
        %v1331 = vld [vmem:[#allocation5 + $0x8] sm:$0xff]
        %v1332 = vld [vmem:[#allocation5 + $0x10] sm:$0xff]
        %v1333 = vld [vmem:[#allocation5 + $0x18] sm:$0xff]
        %v1334 = vld [vmem:[#allocation5 + $0x20] sm:$0xff]
        %v1335 = vld [vmem:[#allocation5 + $0x28] sm:$0xff]
        %v1336 = vld [vmem:[#allocation5 + $0x30] sm:$0xff]
        %v1337 = vld [vmem:[#allocation5 + $0x38] sm:$0xff]
        %v1338 = vld [vmem:[#allocation5 + $0x40] sm:$0xff]
        %v1339 = vld [vmem:[#allocation5 + $0x48] sm:$0xff]
        %v1340 = vld [vmem:[#allocation5 + $0x50] sm:$0xff]
        %v1341 = vld [vmem:[#allocation5 + $0x58] sm:$0xff]
        %v1342 = vld [vmem:[#allocation5 + $0x60] sm:$0xff]
        %v1343 = vld [vmem:[#allocation5 + $0x68] sm:$0xff]
        %v1344 = vld [vmem:[#allocation5 + $0x70] sm:$0xff]
        %v1345 = vld [vmem:[#allocation5 + $0x78] sm:$0xff]
        %v1346 = vld [vmem:[#allocation5 + $0x80] sm:$0xff]
        %v1347 = vld [vmem:[#allocation5 + $0x88] sm:$0xff]
        %v1348 = vld [vmem:[#allocation5 + $0x90] sm:$0xff]
        %v1349 = vld [vmem:[#allocation5 + $0x98] sm:$0xff]
        %v1350 = vld [vmem:[#allocation5 + $0xa0] sm:$0xff]
        %v1351 = vld [vmem:[#allocation5 + $0xa8] sm:$0xff]
        %v1352 = vld [vmem:[#allocation5 + $0xb0] sm:$0xff]
        %v1353 = vld [vmem:[#allocation5 + $0xb8] sm:$0xff]
        %v1354 = vld [vmem:[#allocation5 + $0xc0] sm:$0xff]
        %v1355 = vld [vmem:[#allocation5 + $0xc8] sm:$0xff]
        %v1356 = vld [vmem:[#allocation5 + $0xd0] sm:$0xff]
        %v1357 = vld [vmem:[#allocation5 + $0xd8] sm:$0xff]
        %v1358 = vld [vmem:[#allocation5 + $0xe0] sm:$0xff]
        %v1359 = vld [vmem:[#allocation5 + $0xe8] sm:$0xff]
        %v1360 = vld [vmem:[#allocation5 + $0xf0] sm:$0xff]
        %v1361 = vld [vmem:[#allocation5 + $0xf8] sm:$0xff]
        %v1362 = vld [vmem:[%s8] sm:$0xf]
        %v1364 = vlaneseq
        %v1365 = vshrl.u32 %v1364, 7
        %v1366 = vsub.s32 0, %v1365
        %v1367 = vrot.slane %v1362, %v1366
        %v1368 = vlaneseq
        %v1369 = vshrl.u32 %v1368, 7
        %v1370 = vsub.s32 1, %v1369
        %v1371 = vrot.slane %v1362, %v1370
        %v1372 = vlaneseq
        %v1373 = vshrl.u32 %v1372, 7
        %v1374 = vsub.s32 2, %v1373
        %v1375 = vrot.slane %v1362, %v1374
        %v1376 = vlaneseq
        %v1377 = vshrl.u32 %v1376, 7
        %v1378 = vsub.s32 3, %v1377
        %v1379 = vrot.slane %v1362, %v1378
        %v1416 = vunpack.c.l.b16 %v1330
        %v1417 = vunpack.c.h.b16 %v1330
        %v1418 = vunpack.c.l.b16 %v1331
        %v1419 = vunpack.c.h.b16 %v1331
        %v1420 = vunpack.c.l.b16 %v1332
        %v1421 = vunpack.c.h.b16 %v1332
        %v1422 = vunpack.c.l.b16 %v1333
        %v1423 = vunpack.c.h.b16 %v1333
        %v1424 = vunpack.c.l.b16 %v1334
        %v1425 = vunpack.c.h.b16 %v1334
        %v1426 = vunpack.c.l.b16 %v1335
        %v1427 = vunpack.c.h.b16 %v1335
        %v1428 = vunpack.c.l.b16 %v1336
        %v1429 = vunpack.c.h.b16 %v1336
        %v1430 = vunpack.c.l.b16 %v1337
        %v1431 = vunpack.c.h.b16 %v1337
        %v1432 = vunpack.c.l.b16 %v1338
        %v1433 = vunpack.c.h.b16 %v1338
        %v1434 = vunpack.c.l.b16 %v1339
        %v1435 = vunpack.c.h.b16 %v1339
        %v1436 = vunpack.c.l.b16 %v1340
        %v1437 = vunpack.c.h.b16 %v1340
        %v1438 = vunpack.c.l.b16 %v1341
        %v1439 = vunpack.c.h.b16 %v1341
        %v1440 = vunpack.c.l.b16 %v1342
        %v1441 = vunpack.c.h.b16 %v1342
        %v1442 = vunpack.c.l.b16 %v1343
        %v1443 = vunpack.c.h.b16 %v1343
        %v1444 = vunpack.c.l.b16 %v1344
        %v1445 = vunpack.c.h.b16 %v1344
        %v1446 = vunpack.c.l.b16 %v1345
        %v1447 = vunpack.c.h.b16 %v1345
        %v1448 = vunpack.c.l.b16 %v1346
        %v1449 = vunpack.c.h.b16 %v1346
        %v1450 = vunpack.c.l.b16 %v1347
        %v1451 = vunpack.c.h.b16 %v1347
        %v1452 = vunpack.c.l.b16 %v1348
        %v1453 = vunpack.c.h.b16 %v1348
        %v1454 = vunpack.c.l.b16 %v1349
        %v1455 = vunpack.c.h.b16 %v1349
        %v1456 = vunpack.c.l.b16 %v1350
        %v1457 = vunpack.c.h.b16 %v1350
        %v1458 = vunpack.c.l.b16 %v1351
        %v1459 = vunpack.c.h.b16 %v1351
        %v1460 = vunpack.c.l.b16 %v1352
        %v1461 = vunpack.c.h.b16 %v1352
        %v1462 = vunpack.c.l.b16 %v1353
        %v1463 = vunpack.c.h.b16 %v1353
        %v1464 = vunpack.c.l.b16 %v1354
        %v1465 = vunpack.c.h.b16 %v1354
        %v1466 = vunpack.c.l.b16 %v1355
        %v1467 = vunpack.c.h.b16 %v1355
        %v1468 = vunpack.c.l.b16 %v1356
        %v1469 = vunpack.c.h.b16 %v1356
        %v1470 = vunpack.c.l.b16 %v1357
        %v1471 = vunpack.c.h.b16 %v1357
        %v1472 = vunpack.c.l.b16 %v1358
        %v1473 = vunpack.c.h.b16 %v1358
        %v1474 = vunpack.c.l.b16 %v1359
        %v1475 = vunpack.c.h.b16 %v1359
        %v1476 = vunpack.c.l.b16 %v1360
        %v1477 = vunpack.c.h.b16 %v1360
        %v1478 = vunpack.c.l.b16 %v1361
        %v1479 = vunpack.c.h.b16 %v1361
        %v1480 = vpack.c.b16 %v1420, %v1416
        %v1481 = vpack.c.b16 %v1421, %v1417
        %v1482 = vpack.c.b16 %v1422, %v1418
        %v1483 = vpack.c.b16 %v1423, %v1419
        %v1484 = vpack.c.b16 %v1428, %v1424
        %v1485 = vpack.c.b16 %v1429, %v1425
        %v1486 = vpack.c.b16 %v1430, %v1426
        %v1487 = vpack.c.b16 %v1431, %v1427
        %v1488 = vpack.c.b16 %v1436, %v1432
        %v1489 = vpack.c.b16 %v1437, %v1433
        %v1490 = vpack.c.b16 %v1438, %v1434
        %v1491 = vpack.c.b16 %v1439, %v1435
        %v1492 = vpack.c.b16 %v1444, %v1440
        %v1493 = vpack.c.b16 %v1445, %v1441
        %v1494 = vpack.c.b16 %v1446, %v1442
        %v1495 = vpack.c.b16 %v1447, %v1443
        %v1496 = vpack.c.b16 %v1452, %v1448
        %v1497 = vpack.c.b16 %v1453, %v1449
        %v1498 = vpack.c.b16 %v1454, %v1450
        %v1499 = vpack.c.b16 %v1455, %v1451
        %v1500 = vpack.c.b16 %v1460, %v1456
        %v1501 = vpack.c.b16 %v1461, %v1457
        %v1502 = vpack.c.b16 %v1462, %v1458
        %v1503 = vpack.c.b16 %v1463, %v1459
        %v1504 = vpack.c.b16 %v1468, %v1464
        %v1505 = vpack.c.b16 %v1469, %v1465
        %v1506 = vpack.c.b16 %v1470, %v1466
        %v1507 = vpack.c.b16 %v1471, %v1467
        %v1508 = vpack.c.b16 %v1476, %v1472
        %v1509 = vpack.c.b16 %v1477, %v1473
        %v1510 = vpack.c.b16 %v1478, %v1474
        %v1511 = vpack.c.b16 %v1479, %v1475
        %1544 = vmatprep.subr.bf16.mxu0 %v1481
        %1545 = vmatpush1.bf16.msra.mxu0 %v1480
        %1546 = vmatprep.subr.bf16.mxu0 %v1485
        %1547 = vmatpush1.bf16.msra.mxu0 %v1484
        %1548 = vmatprep.subr.bf16.mxu0 %v1489
        %1549 = vmatpush1.bf16.msra.mxu0 %v1488
        %1550 = vmatprep.subr.bf16.mxu0 %v1493
        %1551 = vmatpush1.bf16.msra.mxu0 %v1492
        %1552 = vmatprep.subr.bf16.mxu0 %v1497
        %1553 = vmatpush1.bf16.msra.mxu0 %v1496
        %1554 = vmatprep.subr.bf16.mxu0 %v1501
        %1555 = vmatpush1.bf16.msra.mxu0 %v1500
        %1556 = vmatprep.subr.bf16.mxu0 %v1505
        %1557 = vmatpush1.bf16.msra.mxu0 %v1504
        %1558 = vmatprep.subr.bf16.mxu0 %v1509
        %1559 = vmatpush1.bf16.msra.mxu0 %v1508
        %1560 = vmatprep.subr.bf16.mxu0 0
        %1561 = vmatpush1.bf16.msra.mxu0 0
        %1562 = vmatprep.subr.bf16.mxu0 0
        %1563 = vmatpush1.bf16.msra.mxu0 0
        %1564 = vmatprep.subr.bf16.mxu0 0
        %1565 = vmatpush1.bf16.msra.mxu0 0
        %1566 = vmatprep.subr.bf16.mxu0 0
        %1567 = vmatpush1.bf16.msra.mxu0 0
        %1568 = vmatprep.subr.bf16.mxu0 0
        %1569 = vmatpush1.bf16.msra.mxu0 0
        %1570 = vmatprep.subr.bf16.mxu0 0
        %1571 = vmatpush1.bf16.msra.mxu0 0
        %1572 = vmatprep.subr.bf16.mxu0 0
        %1573 = vmatpush1.bf16.msra.mxu0 0
        %1574 = vmatprep.subr.bf16.mxu0 0
        %1575 = vmatpush1.bf16.msra.mxu0 0
        %1576 = vmatprep.mubr.bf16.mxu0 0
        %1577 = vmatmul.mubr.bf16.gmra.mrb[0].mxu0 %v1329
        %v1578 = vpop.f32.mrb[0].mxu0
        %v1579 = vadd.f32 %v1367, %v1578
        %v1580 = vpop.f32.mrb[0].mxu0
        %v1581 = vadd.f32 %v1371, %v1580
        %v1582 = vpop.f32.mrb[0].mxu0
        %v1583 = vpop.f32.mrb[0].mxu0
        %1584 = vdwg.mxu0
        %1585 = vmatprep.subr.bf16.mxu0 %v1483
        %1586 = vmatpush1.bf16.msra.mxu0 %v1482
        %1587 = vmatprep.subr.bf16.mxu0 %v1487
        %1588 = vmatpush1.bf16.msra.mxu0 %v1486
        %1589 = vmatprep.subr.bf16.mxu0 %v1491
        %1590 = vmatpush1.bf16.msra.mxu0 %v1490
        %1591 = vmatprep.subr.bf16.mxu0 %v1495
        %1592 = vmatpush1.bf16.msra.mxu0 %v1494
        %1593 = vmatprep.subr.bf16.mxu0 %v1499
        %1594 = vmatpush1.bf16.msra.mxu0 %v1498
        %1595 = vmatprep.subr.bf16.mxu0 %v1503
        %1596 = vmatpush1.bf16.msra.mxu0 %v1502
        %1597 = vmatprep.subr.bf16.mxu0 %v1507
        %1598 = vmatpush1.bf16.msra.mxu0 %v1506
        %1599 = vmatprep.subr.bf16.mxu0 %v1511
        %1600 = vmatpush1.bf16.msra.mxu0 %v1510
        %1601 = vmatprep.subr.bf16.mxu0 0
        %1602 = vmatpush1.bf16.msra.mxu0 0
        %1603 = vmatprep.subr.bf16.mxu0 0
        %1604 = vmatpush1.bf16.msra.mxu0 0
        %1605 = vmatprep.subr.bf16.mxu0 0
        %1606 = vmatpush1.bf16.msra.mxu0 0
        %1607 = vmatprep.subr.bf16.mxu0 0
        %1608 = vmatpush1.bf16.msra.mxu0 0
        %1609 = vmatprep.subr.bf16.mxu0 0
        %1610 = vmatpush1.bf16.msra.mxu0 0
        %1611 = vmatprep.subr.bf16.mxu0 0
        %1612 = vmatpush1.bf16.msra.mxu0 0
        %1613 = vmatprep.subr.bf16.mxu0 0
        %1614 = vmatpush1.bf16.msra.mxu0 0
        %1615 = vmatprep.subr.bf16.mxu0 0
        %1616 = vmatpush1.bf16.msra.mxu0 0
        %1617 = vmatprep.mubr.bf16.mxu0 0
        %1618 = vmatmul.mubr.bf16.gmra.mrb[0].mxu0 %v1329
        %v1619 = vpop.f32.mrb[0].mxu0
        %v1620 = vadd.f32 %v1375, %v1619
        %v1621 = vpop.f32.mrb[0].mxu0
        %v1622 = vadd.f32 %v1379, %v1621
        %v1623 = vpop.f32.mrb[0].mxu0
        %v1624 = vpop.f32.mrb[0].mxu0
        %1625 = vdwg.mxu0
        %v1626 = vmax.f32 %v1579, 0.0
        %v1627 = vmax.f32 %v1581, 0.0
        %v1628 = vmax.f32 %v1620, 0.0
        %v1629 = vmax.f32 %v1622, 0.0
        %v1630 = vpack.c.bf16 %v1626, %v1626
        %v1631 = vpack.c.bf16 %v1627, %v1627
        %v1632 = vpack.c.bf16 %v1628, %v1628
        %v1633 = vpack.c.bf16 %v1629, %v1629
        %v1634 = vld [vmem:[#allocation7] sm:$0xf]
        %v1635 = vld [vmem:[#allocation7 + $0x4] sm:$0xf]
        %v1636 = vld [vmem:[#allocation7 + $0x8] sm:$0xf]
        %v1637 = vld [vmem:[#allocation7 + $0xc] sm:$0xf]
        %v1638 = vld [vmem:[#allocation7 + $0x10] sm:$0xf]
        %v1639 = vld [vmem:[#allocation7 + $0x14] sm:$0xf]
        %v1640 = vld [vmem:[#allocation7 + $0x18] sm:$0xf]
        %v1641 = vld [vmem:[#allocation7 + $0x1c] sm:$0xf]
        %v1642 = vld [vmem:[#allocation7 + $0x20] sm:$0xf]
        %v1643 = vld [vmem:[#allocation7 + $0x24] sm:$0xf]
        %v1644 = vld [vmem:[#allocation7 + $0x28] sm:$0xf]
        %v1645 = vld [vmem:[#allocation7 + $0x2c] sm:$0xf]
        %v1646 = vld [vmem:[#allocation7 + $0x30] sm:$0xf]
        %v1647 = vld [vmem:[#allocation7 + $0x34] sm:$0xf]
        %v1648 = vld [vmem:[#allocation7 + $0x38] sm:$0xf]
        %v1649 = vld [vmem:[#allocation7 + $0x3c] sm:$0xf]
        %v1650 = vld [vmem:[#allocation7 + $0x40] sm:$0xf]
        %v1651 = vld [vmem:[#allocation7 + $0x44] sm:$0xf]
        %v1652 = vld [vmem:[#allocation7 + $0x48] sm:$0xf]
        %v1653 = vld [vmem:[#allocation7 + $0x4c] sm:$0xf]
        %v1654 = vld [vmem:[#allocation7 + $0x50] sm:$0xf]
        %v1655 = vld [vmem:[#allocation7 + $0x54] sm:$0xf]
        %v1656 = vld [vmem:[#allocation7 + $0x58] sm:$0xf]
        %v1657 = vld [vmem:[#allocation7 + $0x5c] sm:$0xf]
        %v1658 = vld [vmem:[#allocation7 + $0x60] sm:$0xf]
        %v1659 = vld [vmem:[#allocation7 + $0x64] sm:$0xf]
        %v1660 = vld [vmem:[#allocation7 + $0x68] sm:$0xf]
        %v1661 = vld [vmem:[#allocation7 + $0x6c] sm:$0xf]
        %v1662 = vld [vmem:[#allocation7 + $0x70] sm:$0xf]
        %v1663 = vld [vmem:[#allocation7 + $0x74] sm:$0xf]
        %v1664 = vld [vmem:[#allocation7 + $0x78] sm:$0xf]
        %v1665 = vld [vmem:[#allocation7 + $0x7c] sm:$0xf]
        %v1666 = vld [vmem:[#allocation7 + $0x80] sm:$0xf]
        %v1667 = vld [vmem:[#allocation7 + $0x84] sm:$0xf]
        %v1668 = vld [vmem:[#allocation7 + $0x88] sm:$0xf]
        %v1669 = vld [vmem:[#allocation7 + $0x8c] sm:$0xf]
        %v1670 = vld [vmem:[#allocation7 + $0x90] sm:$0xf]
        %v1671 = vld [vmem:[#allocation7 + $0x94] sm:$0xf]
        %v1672 = vld [vmem:[#allocation7 + $0x98] sm:$0xf]
        %v1673 = vld [vmem:[#allocation7 + $0x9c] sm:$0xf]
        %v1674 = vld [vmem:[#allocation7 + $0xa0] sm:$0xf]
        %v1675 = vld [vmem:[#allocation7 + $0xa4] sm:$0xf]
        %v1676 = vld [vmem:[#allocation7 + $0xa8] sm:$0xf]
        %v1677 = vld [vmem:[#allocation7 + $0xac] sm:$0xf]
        %v1678 = vld [vmem:[#allocation7 + $0xb0] sm:$0xf]
        %v1679 = vld [vmem:[#allocation7 + $0xb4] sm:$0xf]
        %v1680 = vld [vmem:[#allocation7 + $0xb8] sm:$0xf]
        %v1681 = vld [vmem:[#allocation7 + $0xbc] sm:$0xf]
        %v1682 = vld [vmem:[#allocation7 + $0xc0] sm:$0xf]
        %v1683 = vld [vmem:[#allocation7 + $0xc4] sm:$0xf]
        %v1684 = vld [vmem:[#allocation7 + $0xc8] sm:$0xf]
        %v1685 = vld [vmem:[#allocation7 + $0xcc] sm:$0xf]
        %v1686 = vld [vmem:[#allocation7 + $0xd0] sm:$0xf]
        %v1687 = vld [vmem:[#allocation7 + $0xd4] sm:$0xf]
        %v1688 = vld [vmem:[#allocation7 + $0xd8] sm:$0xf]
        %v1689 = vld [vmem:[#allocation7 + $0xdc] sm:$0xf]
        %v1690 = vld [vmem:[#allocation7 + $0xe0] sm:$0xf]
        %v1691 = vld [vmem:[#allocation7 + $0xe4] sm:$0xf]
        %v1692 = vld [vmem:[#allocation7 + $0xe8] sm:$0xf]
        %v1693 = vld [vmem:[#allocation7 + $0xec] sm:$0xf]
        %v1694 = vld [vmem:[#allocation7 + $0xf0] sm:$0xf]
        %v1695 = vld [vmem:[#allocation7 + $0xf4] sm:$0xf]
        %v1696 = vld [vmem:[#allocation7 + $0xf8] sm:$0xf]
        %v1697 = vld [vmem:[#allocation7 + $0xfc] sm:$0xf]
        %v1698 = vld [vmem:[%s10] sm:$0x1]
        %v1700 = vlaneseq
        %v1701 = vshrl.u32 %v1700, 7
        %v1702 = vsub.s32 0, %v1701
        %v1703 = vrot.slane %v1698, %v1702
        %v1769 = vunpack.c.l.b16 %v1634
        %v1770 = vunpack.c.l.b16 %v1635
        %v1771 = vunpack.c.l.b16 %v1636
        %v1772 = vunpack.c.l.b16 %v1637
        %v1773 = vunpack.c.l.b16 %v1638
        %v1774 = vunpack.c.l.b16 %v1639
        %v1775 = vunpack.c.l.b16 %v1640
        %v1776 = vunpack.c.l.b16 %v1641
        %v1777 = vunpack.c.l.b16 %v1642
        %v1778 = vunpack.c.l.b16 %v1643
        %v1779 = vunpack.c.l.b16 %v1644
        %v1780 = vunpack.c.l.b16 %v1645
        %v1781 = vunpack.c.l.b16 %v1646
        %v1782 = vunpack.c.l.b16 %v1647
        %v1783 = vunpack.c.l.b16 %v1648
        %v1784 = vunpack.c.l.b16 %v1649
        %v1785 = vunpack.c.l.b16 %v1650
        %v1786 = vunpack.c.l.b16 %v1651
        %v1787 = vunpack.c.l.b16 %v1652
        %v1788 = vunpack.c.l.b16 %v1653
        %v1789 = vunpack.c.l.b16 %v1654
        %v1790 = vunpack.c.l.b16 %v1655
        %v1791 = vunpack.c.l.b16 %v1656
        %v1792 = vunpack.c.l.b16 %v1657
        %v1793 = vunpack.c.l.b16 %v1658
        %v1794 = vunpack.c.l.b16 %v1659
        %v1795 = vunpack.c.l.b16 %v1660
        %v1796 = vunpack.c.l.b16 %v1661
        %v1797 = vunpack.c.l.b16 %v1662
        %v1798 = vunpack.c.l.b16 %v1663
        %v1799 = vunpack.c.l.b16 %v1664
        %v1800 = vunpack.c.l.b16 %v1665
        %v1801 = vunpack.c.l.b16 %v1666
        %v1802 = vunpack.c.l.b16 %v1667
        %v1803 = vunpack.c.l.b16 %v1668
        %v1804 = vunpack.c.l.b16 %v1669
        %v1805 = vunpack.c.l.b16 %v1670
        %v1806 = vunpack.c.l.b16 %v1671
        %v1807 = vunpack.c.l.b16 %v1672
        %v1808 = vunpack.c.l.b16 %v1673
        %v1809 = vunpack.c.l.b16 %v1674
        %v1810 = vunpack.c.l.b16 %v1675
        %v1811 = vunpack.c.l.b16 %v1676
        %v1812 = vunpack.c.l.b16 %v1677
        %v1813 = vunpack.c.l.b16 %v1678
        %v1814 = vunpack.c.l.b16 %v1679
        %v1815 = vunpack.c.l.b16 %v1680
        %v1816 = vunpack.c.l.b16 %v1681
        %v1817 = vunpack.c.l.b16 %v1682
        %v1818 = vunpack.c.l.b16 %v1683
        %v1819 = vunpack.c.l.b16 %v1684
        %v1820 = vunpack.c.l.b16 %v1685
        %v1821 = vunpack.c.l.b16 %v1686
        %v1822 = vunpack.c.l.b16 %v1687
        %v1823 = vunpack.c.l.b16 %v1688
        %v1824 = vunpack.c.l.b16 %v1689
        %v1825 = vunpack.c.l.b16 %v1690
        %v1826 = vunpack.c.l.b16 %v1691
        %v1827 = vunpack.c.l.b16 %v1692
        %v1828 = vunpack.c.l.b16 %v1693
        %v1829 = vunpack.c.l.b16 %v1694
        %v1830 = vunpack.c.l.b16 %v1695
        %v1831 = vunpack.c.l.b16 %v1696
        %v1832 = vunpack.c.l.b16 %v1697
        %v1833 = vpack.c.b16 %v1770, %v1769
        %v1834 = vpack.c.b16 %v1772, %v1771
        %v1835 = vpack.c.b16 %v1774, %v1773
        %v1836 = vpack.c.b16 %v1776, %v1775
        %v1837 = vpack.c.b16 %v1778, %v1777
        %v1838 = vpack.c.b16 %v1780, %v1779
        %v1839 = vpack.c.b16 %v1782, %v1781
        %v1840 = vpack.c.b16 %v1784, %v1783
        %v1841 = vpack.c.b16 %v1786, %v1785
        %v1842 = vpack.c.b16 %v1788, %v1787
        %v1843 = vpack.c.b16 %v1790, %v1789
        %v1844 = vpack.c.b16 %v1792, %v1791
        %v1845 = vpack.c.b16 %v1794, %v1793
        %v1846 = vpack.c.b16 %v1796, %v1795
        %v1847 = vpack.c.b16 %v1798, %v1797
        %v1848 = vpack.c.b16 %v1800, %v1799
        %v1849 = vpack.c.b16 %v1802, %v1801
        %v1850 = vpack.c.b16 %v1804, %v1803
        %v1851 = vpack.c.b16 %v1806, %v1805
        %v1852 = vpack.c.b16 %v1808, %v1807
        %v1853 = vpack.c.b16 %v1810, %v1809
        %v1854 = vpack.c.b16 %v1812, %v1811
        %v1855 = vpack.c.b16 %v1814, %v1813
        %v1856 = vpack.c.b16 %v1816, %v1815
        %v1857 = vpack.c.b16 %v1818, %v1817
        %v1858 = vpack.c.b16 %v1820, %v1819
        %v1859 = vpack.c.b16 %v1822, %v1821
        %v1860 = vpack.c.b16 %v1824, %v1823
        %v1861 = vpack.c.b16 %v1826, %v1825
        %v1862 = vpack.c.b16 %v1828, %v1827
        %v1863 = vpack.c.b16 %v1830, %v1829
        %v1864 = vpack.c.b16 %v1832, %v1831
        %1897 = vmatprep.subr.bf16.mxu0 0
        %1898 = vmatpush1.bf16.msra.mxu0 %v1833
        %1899 = vmatprep.subr.bf16.mxu0 0
        %1900 = vmatpush1.bf16.msra.mxu0 %v1834
        %1901 = vmatprep.subr.bf16.mxu0 0
        %1902 = vmatpush1.bf16.msra.mxu0 %v1835
        %1903 = vmatprep.subr.bf16.mxu0 0
        %1904 = vmatpush1.bf16.msra.mxu0 %v1836
        %1905 = vmatprep.subr.bf16.mxu0 0
        %1906 = vmatpush1.bf16.msra.mxu0 %v1837
        %1907 = vmatprep.subr.bf16.mxu0 0
        %1908 = vmatpush1.bf16.msra.mxu0 %v1838
        %1909 = vmatprep.subr.bf16.mxu0 0
        %1910 = vmatpush1.bf16.msra.mxu0 %v1839
        %1911 = vmatprep.subr.bf16.mxu0 0
        %1912 = vmatpush1.bf16.msra.mxu0 %v1840
        %1913 = vmatprep.subr.bf16.mxu0 0
        %1914 = vmatpush1.bf16.msra.mxu0 %v1841
        %1915 = vmatprep.subr.bf16.mxu0 0
        %1916 = vmatpush1.bf16.msra.mxu0 %v1842
        %1917 = vmatprep.subr.bf16.mxu0 0
        %1918 = vmatpush1.bf16.msra.mxu0 %v1843
        %1919 = vmatprep.subr.bf16.mxu0 0
        %1920 = vmatpush1.bf16.msra.mxu0 %v1844
        %1921 = vmatprep.subr.bf16.mxu0 0
        %1922 = vmatpush1.bf16.msra.mxu0 %v1845
        %1923 = vmatprep.subr.bf16.mxu0 0
        %1924 = vmatpush1.bf16.msra.mxu0 %v1846
        %1925 = vmatprep.subr.bf16.mxu0 0
        %1926 = vmatpush1.bf16.msra.mxu0 %v1847
        %1927 = vmatprep.subr.bf16.mxu0 0
        %1928 = vmatpush1.bf16.msra.mxu0 %v1848
        %1929 = vmatprep.mubr.bf16.mxu0 %v1631
        %1930 = vmatmul.mubr.bf16.gmra.mrb[0].mxu0 %v1630
        %v1931 = vpop.f32.mrb[0].mxu0
        %v1932 = vadd.f32 %v1703, %v1931
        %v1933 = vpop.f32.mrb[0].mxu0
        %v1934 = vpop.f32.mrb[0].mxu0
        %v1935 = vpop.f32.mrb[0].mxu0
        %1936 = vdwg.mxu0
        %1937 = vmatprep.subr.bf16.mxu0 0
        %1938 = vmatpush1.bf16.msra.mxu0 %v1849
        %1939 = vmatprep.subr.bf16.mxu0 0
        %1940 = vmatpush1.bf16.msra.mxu0 %v1850
        %1941 = vmatprep.subr.bf16.mxu0 0
        %1942 = vmatpush1.bf16.msra.mxu0 %v1851
        %1943 = vmatprep.subr.bf16.mxu0 0
        %1944 = vmatpush1.bf16.msra.mxu0 %v1852
        %1945 = vmatprep.subr.bf16.mxu0 0
        %1946 = vmatpush1.bf16.msra.mxu0 %v1853
        %1947 = vmatprep.subr.bf16.mxu0 0
        %1948 = vmatpush1.bf16.msra.mxu0 %v1854
        %1949 = vmatprep.subr.bf16.mxu0 0
        %1950 = vmatpush1.bf16.msra.mxu0 %v1855
        %1951 = vmatprep.subr.bf16.mxu0 0
        %1952 = vmatpush1.bf16.msra.mxu0 %v1856
        %1953 = vmatprep.subr.bf16.mxu0 0
        %1954 = vmatpush1.bf16.msra.mxu0 %v1857
        %1955 = vmatprep.subr.bf16.mxu0 0
        %1956 = vmatpush1.bf16.msra.mxu0 %v1858
        %1957 = vmatprep.subr.bf16.mxu0 0
        %1958 = vmatpush1.bf16.msra.mxu0 %v1859
        %1959 = vmatprep.subr.bf16.mxu0 0
        %1960 = vmatpush1.bf16.msra.mxu0 %v1860
        %1961 = vmatprep.subr.bf16.mxu0 0
        %1962 = vmatpush1.bf16.msra.mxu0 %v1861
        %1963 = vmatprep.subr.bf16.mxu0 0
        %1964 = vmatpush1.bf16.msra.mxu0 %v1862
        %1965 = vmatprep.subr.bf16.mxu0 0
        %1966 = vmatpush1.bf16.msra.mxu0 %v1863
        %1967 = vmatprep.subr.bf16.mxu0 0
        %1968 = vmatpush1.bf16.msra.mxu0 %v1864
        %1969 = vmatprep.mubr.bf16.mxu0 %v1633
        %1970 = vmatmul.mubr.bf16.gmra.mrb[0].mxu0 %v1632
        %v1971 = vpop.f32.mrb[0].mxu0
        %v1972 = vadd.f32 %v1932, %v1971
        %v1973 = vpop.f32.mrb[0].mxu0
        %v1974 = vpop.f32.mrb[0].mxu0
        %v1975 = vpop.f32.mrb[0].mxu0
        %1976 = vdwg.mxu0
        %v1977 = vadd.f32 %v1301, %v1972
        %s1978 = scalar_lea.vmem %s2, 1
        %v1979 = vld [vmem:[%s1978] sm:$0x1]
        %s1980 = scalar_lea.vmem %s3, 1
        %v1981 = vld [vmem:[%s1980] sm:$0x1]
        %1982 = vadd.xlane.f32.xlu0 %v1977
        %v1983 = vpop.xlane.xlu0 %1982
        %v1984 = vmul.f32 %v1983, %v547
        %v1985 = vsub.f32 %v1977, %v1984
        %v1986 = vmul.f32 %v1985, %v1985
        %1987 = vadd.xlane.f32.xlu0 %v1986
        %v1988 = vpop.xlane.xlu0 %1987
        %v1989 = vmul.f32 %v1988, %v547
        %v1990 = vadd.f32 %v1989, 1e-05
        %v1991 = vrsqrt.pop %v1990
        %v1992 = vmul.f32 %v1985, %v1991
        %v1994 = vlaneseq
        %v1995 = vshrl.u32 %v1994, 7
        %v1996 = vsub.s32 0, %v1995
        %v1997 = vrot.slane %v1979, %v1996
        %v1999 = vmul.f32 %v1992, %v1997
        %v2001 = vlaneseq
        %v2002 = vshrl.u32 %v2001, 7
        %v2003 = vsub.s32 0, %v2002
        %v2004 = vrot.slane %v1981, %v2003
        %v2006 = vadd.f32 %v1999, %v2004
        %v2007 = vpack.c.bf16 %v2006, %v2006
        %s2008 = scalar_lea.vmem [#allocation2], 192
        %v2009 = vld [vmem:[%s2008] sm:$0xff]
        %v2010 = vld [vmem:[%s2008 + $0x8] sm:$0xf]
        %v2011 = vld [vmem:[%s2008 + $0xc] sm:$0xff]
        %v2012 = vld [vmem:[%s2008 + $0x14] sm:$0xf]
        %v2013 = vld [vmem:[%s2008 + $0x18] sm:$0xff]
        %v2014 = vld [vmem:[%s2008 + $0x20] sm:$0xf]
        %v2015 = vld [vmem:[%s2008 + $0x24] sm:$0xff]
        %v2016 = vld [vmem:[%s2008 + $0x2c] sm:$0xf]
        %v2017 = vld [vmem:[%s2008 + $0x30] sm:$0xff]
        %v2018 = vld [vmem:[%s2008 + $0x38] sm:$0xf]
        %v2019 = vld [vmem:[%s2008 + $0x3c] sm:$0xff]
        %v2020 = vld [vmem:[%s2008 + $0x44] sm:$0xf]
        %v2021 = vld [vmem:[%s2008 + $0x48] sm:$0xff]
        %v2022 = vld [vmem:[%s2008 + $0x50] sm:$0xf]
        %v2023 = vld [vmem:[%s2008 + $0x54] sm:$0xff]
        %v2024 = vld [vmem:[%s2008 + $0x5c] sm:$0xf]
        %v2025 = vld [vmem:[%s2008 + $0x60] sm:$0xff]
        %v2026 = vld [vmem:[%s2008 + $0x68] sm:$0xf]
        %v2027 = vld [vmem:[%s2008 + $0x6c] sm:$0xff]
        %v2028 = vld [vmem:[%s2008 + $0x74] sm:$0xf]
        %v2029 = vld [vmem:[%s2008 + $0x78] sm:$0xff]
        %v2030 = vld [vmem:[%s2008 + $0x80] sm:$0xf]
        %v2031 = vld [vmem:[%s2008 + $0x84] sm:$0xff]
        %v2032 = vld [vmem:[%s2008 + $0x8c] sm:$0xf]
        %v2033 = vld [vmem:[%s2008 + $0x90] sm:$0xff]
        %v2034 = vld [vmem:[%s2008 + $0x98] sm:$0xf]
        %v2035 = vld [vmem:[%s2008 + $0x9c] sm:$0xff]
        %v2036 = vld [vmem:[%s2008 + $0xa4] sm:$0xf]
        %v2037 = vld [vmem:[%s2008 + $0xa8] sm:$0xff]
        %v2038 = vld [vmem:[%s2008 + $0xb0] sm:$0xf]
        %v2039 = vld [vmem:[%s2008 + $0xb4] sm:$0xff]
        %v2040 = vld [vmem:[%s2008 + $0xbc] sm:$0xf]
        %v2073 = vunpack.c.l.b16 %v2009
        %v2074 = vunpack.c.h.b16 %v2009
        %v2075 = vunpack.c.l.b16 %v2010
        %v2076 = vunpack.c.l.b16 %v2011
        %v2077 = vunpack.c.h.b16 %v2011
        %v2078 = vunpack.c.l.b16 %v2012
        %v2079 = vunpack.c.l.b16 %v2013
        %v2080 = vunpack.c.h.b16 %v2013
        %v2081 = vunpack.c.l.b16 %v2014
        %v2082 = vunpack.c.l.b16 %v2015
        %v2083 = vunpack.c.h.b16 %v2015
        %v2084 = vunpack.c.l.b16 %v2016
        %v2085 = vunpack.c.l.b16 %v2017
        %v2086 = vunpack.c.h.b16 %v2017
        %v2087 = vunpack.c.l.b16 %v2018
        %v2088 = vunpack.c.l.b16 %v2019
        %v2089 = vunpack.c.h.b16 %v2019
        %v2090 = vunpack.c.l.b16 %v2020
        %v2091 = vunpack.c.l.b16 %v2021
        %v2092 = vunpack.c.h.b16 %v2021
        %v2093 = vunpack.c.l.b16 %v2022
        %v2094 = vunpack.c.l.b16 %v2023
        %v2095 = vunpack.c.h.b16 %v2023
        %v2096 = vunpack.c.l.b16 %v2024
        %v2097 = vunpack.c.l.b16 %v2025
        %v2098 = vunpack.c.h.b16 %v2025
        %v2099 = vunpack.c.l.b16 %v2026
        %v2100 = vunpack.c.l.b16 %v2027
        %v2101 = vunpack.c.h.b16 %v2027
        %v2102 = vunpack.c.l.b16 %v2028
        %v2103 = vunpack.c.l.b16 %v2029
        %v2104 = vunpack.c.h.b16 %v2029
        %v2105 = vunpack.c.l.b16 %v2030
        %v2106 = vunpack.c.l.b16 %v2031
        %v2107 = vunpack.c.h.b16 %v2031
        %v2108 = vunpack.c.l.b16 %v2032
        %v2109 = vunpack.c.l.b16 %v2033
        %v2110 = vunpack.c.h.b16 %v2033
        %v2111 = vunpack.c.l.b16 %v2034
        %v2112 = vunpack.c.l.b16 %v2035
        %v2113 = vunpack.c.h.b16 %v2035
        %v2114 = vunpack.c.l.b16 %v2036
        %v2115 = vunpack.c.l.b16 %v2037
        %v2116 = vunpack.c.h.b16 %v2037
        %v2117 = vunpack.c.l.b16 %v2038
        %v2118 = vunpack.c.l.b16 %v2039
        %v2119 = vunpack.c.h.b16 %v2039
        %v2120 = vunpack.c.l.b16 %v2040
        %v2121 = vpack.c.b16 %v2076, %v2073
        %v2122 = vpack.c.b16 %v2077, %v2074
        %v2123 = vpack.c.b16 %v2078, %v2075
        %v2124 = vpack.c.b16 %v2082, %v2079
        %v2125 = vpack.c.b16 %v2083, %v2080
        %v2126 = vpack.c.b16 %v2084, %v2081
        %v2127 = vpack.c.b16 %v2088, %v2085
        %v2128 = vpack.c.b16 %v2089, %v2086
        %v2129 = vpack.c.b16 %v2090, %v2087
        %v2130 = vpack.c.b16 %v2094, %v2091
        %v2131 = vpack.c.b16 %v2095, %v2092
        %v2132 = vpack.c.b16 %v2096, %v2093
        %v2133 = vpack.c.b16 %v2100, %v2097
        %v2134 = vpack.c.b16 %v2101, %v2098
        %v2135 = vpack.c.b16 %v2102, %v2099
        %v2136 = vpack.c.b16 %v2106, %v2103
        %v2137 = vpack.c.b16 %v2107, %v2104
        %v2138 = vpack.c.b16 %v2108, %v2105
        %v2139 = vpack.c.b16 %v2112, %v2109
        %v2140 = vpack.c.b16 %v2113, %v2110
        %v2141 = vpack.c.b16 %v2114, %v2111
        %v2142 = vpack.c.b16 %v2118, %v2115
        %v2143 = vpack.c.b16 %v2119, %v2116
        %v2144 = vpack.c.b16 %v2120, %v2117
        %2169 = vmatprep.subr.bf16.mxu0 %v2122
        %2170 = vmatpush1.bf16.msra.mxu0 %v2121
        %2171 = vmatprep.subr.bf16.mxu0 %v2125
        %2172 = vmatpush1.bf16.msra.mxu0 %v2124
        %2173 = vmatprep.subr.bf16.mxu0 %v2128
        %2174 = vmatpush1.bf16.msra.mxu0 %v2127
        %2175 = vmatprep.subr.bf16.mxu0 %v2131
        %2176 = vmatpush1.bf16.msra.mxu0 %v2130
        %2177 = vmatprep.subr.bf16.mxu0 %v2134
        %2178 = vmatpush1.bf16.msra.mxu0 %v2133
        %2179 = vmatprep.subr.bf16.mxu0 %v2137
        %2180 = vmatpush1.bf16.msra.mxu0 %v2136
        %2181 = vmatprep.subr.bf16.mxu0 %v2140
        %2182 = vmatpush1.bf16.msra.mxu0 %v2139
        %2183 = vmatprep.subr.bf16.mxu0 %v2143
        %2184 = vmatpush1.bf16.msra.mxu0 %v2142
        %2185 = vmatprep.subr.bf16.mxu0 0
        %2186 = vmatpush1.bf16.msra.mxu0 0
        %2187 = vmatprep.subr.bf16.mxu0 0
        %2188 = vmatpush1.bf16.msra.mxu0 0
        %2189 = vmatprep.subr.bf16.mxu0 0
        %2190 = vmatpush1.bf16.msra.mxu0 0
        %2191 = vmatprep.subr.bf16.mxu0 0
        %2192 = vmatpush1.bf16.msra.mxu0 0
        %2193 = vmatprep.subr.bf16.mxu0 0
        %2194 = vmatpush1.bf16.msra.mxu0 0
        %2195 = vmatprep.subr.bf16.mxu0 0
        %2196 = vmatpush1.bf16.msra.mxu0 0
        %2197 = vmatprep.subr.bf16.mxu0 0
        %2198 = vmatpush1.bf16.msra.mxu0 0
        %2199 = vmatprep.subr.bf16.mxu0 0
        %2200 = vmatpush1.bf16.msra.mxu0 0
        %2201 = vmatprep.mubr.bf16.mxu0 0
        %2202 = vmatmul.mubr.bf16.gmra.mrb[0].mxu0 %v2007
        %v2203 = vpop.f32.mrb[0].mxu0
        %v2204 = vadd.f32 0.0, %v2203
        %v2205 = vpop.f32.mrb[0].mxu0
        %v2206 = vadd.f32 0.0, %v2205
        %v2207 = vpop.f32.mrb[0].mxu0
        %v2208 = vpop.f32.mrb[0].mxu0
        %2209 = vdwg.mxu0
        %2210 = vmatprep.subr.bf16.mxu0 0
        %2211 = vmatpush1.bf16.msra.mxu0 %v2123
        %2212 = vmatprep.subr.bf16.mxu0 0
        %2213 = vmatpush1.bf16.msra.mxu0 %v2126
        %2214 = vmatprep.subr.bf16.mxu0 0
        %2215 = vmatpush1.bf16.msra.mxu0 %v2129
        %2216 = vmatprep.subr.bf16.mxu0 0
        %2217 = vmatpush1.bf16.msra.mxu0 %v2132
        %2218 = vmatprep.subr.bf16.mxu0 0
        %2219 = vmatpush1.bf16.msra.mxu0 %v2135
        %2220 = vmatprep.subr.bf16.mxu0 0
        %2221 = vmatpush1.bf16.msra.mxu0 %v2138
        %2222 = vmatprep.subr.bf16.mxu0 0
        %2223 = vmatpush1.bf16.msra.mxu0 %v2141
        %2224 = vmatprep.subr.bf16.mxu0 0
        %2225 = vmatpush1.bf16.msra.mxu0 %v2144
        %2226 = vmatprep.subr.bf16.mxu0 0
        %2227 = vmatpush1.bf16.msra.mxu0 0
        %2228 = vmatprep.subr.bf16.mxu0 0
        %2229 = vmatpush1.bf16.msra.mxu0 0
        %2230 = vmatprep.subr.bf16.mxu0 0
        %2231 = vmatpush1.bf16.msra.mxu0 0
        %2232 = vmatprep.subr.bf16.mxu0 0
        %2233 = vmatpush1.bf16.msra.mxu0 0
        %2234 = vmatprep.subr.bf16.mxu0 0
        %2235 = vmatpush1.bf16.msra.mxu0 0
        %2236 = vmatprep.subr.bf16.mxu0 0
        %2237 = vmatpush1.bf16.msra.mxu0 0
        %2238 = vmatprep.subr.bf16.mxu0 0
        %2239 = vmatpush1.bf16.msra.mxu0 0
        %2240 = vmatprep.subr.bf16.mxu0 0
        %2241 = vmatpush1.bf16.msra.mxu0 0
        %2242 = vmatprep.mubr.bf16.mxu0 0
        %2243 = vmatmul.mubr.bf16.gmra.mrb[0].mxu0 %v2007
        %v2244 = vpop.f32.mrb[0].mxu0
        %v2245 = vadd.f32 0.0, %v2244
        %v2246 = vpop.f32.mrb[0].mxu0
        %v2247 = vpop.f32.mrb[0].mxu0
        %v2248 = vpop.f32.mrb[0].mxu0
        %2249 = vdwg.mxu0
        %2251 = vrot.lane.b32.xlu0 %v2204, 96
        %v2252 = vpop.permute.xlu0 %2251
        %2254 = vrot.lane.b32.xlu0 %v2204, 64
        %v2255 = vpop.permute.xlu0 %2254
        %2257 = vrot.lane.b32.xlu0 %v2204, 32
        %v2258 = vpop.permute.xlu0 %2257
        %2261 = vrot.lane.b32.xlu0 %v2206, 96
        %v2262 = vpop.permute.xlu0 %2261
        %2264 = vrot.lane.b32.xlu0 %v2206, 64
        %v2265 = vpop.permute.xlu0 %2264
        %2267 = vrot.lane.b32.xlu0 %v2206, 32
        %v2268 = vpop.permute.xlu0 %2267
        %2271 = vrot.lane.b32.xlu0 %v2245, 96
        %v2272 = vpop.permute.xlu0 %2271
        %2274 = vrot.lane.b32.xlu0 %v2245, 64
        %v2275 = vpop.permute.xlu0 %2274
        %2277 = vrot.lane.b32.xlu0 %v2245, 32
        %v2278 = vpop.permute.xlu0 %2277
        %v2280 = vpack.c.bf16 %v2204, %v2204
        %v2281 = vpack.c.bf16 %v2252, %v2252
        %v2282 = vpack.c.bf16 %v2255, %v2255
        %v2283 = vpack.c.bf16 %v2258, %v2258
        %v2284 = vpack.c.bf16 %v2206, %v2206
        %v2285 = vpack.c.bf16 %v2262, %v2262
        %v2286 = vpack.c.bf16 %v2265, %v2265
        %v2287 = vpack.c.bf16 %v2268, %v2268
        %v2289 = vsel %vm851, %v2280, 0
        %v2292 = vsel %vm851, %v2284, 0
        %2294 = vmatprep.subr.bf16.mxu0 0
        %2295 = vmatpush1.bf16.xpose.msra.mxu0 %v2292
        %2296 = vmatprep.subr.bf16.mxu0 0
        %2297 = vmatpush1.bf16.xpose.msra.mxu0 0
        %2298 = vmatprep.subr.bf16.mxu0 0
        %2299 = vmatpush1.bf16.xpose.msra.mxu0 0
        %2300 = vmatprep.subr.bf16.mxu0 0
        %2301 = vmatpush1.bf16.xpose.msra.mxu0 0
        %2302 = vmatprep.subr.bf16.mxu0 0
        %2303 = vmatpush1.bf16.xpose.msra.mxu0 0
        %2304 = vmatprep.subr.bf16.mxu0 0
        %2305 = vmatpush1.bf16.xpose.msra.mxu0 0
        %2306 = vmatprep.subr.bf16.mxu0 0
        %2307 = vmatpush1.bf16.xpose.msra.mxu0 0
        %2308 = vmatprep.subr.bf16.mxu0 0
        %2309 = vmatpush1.bf16.xpose.msra.mxu0 0
        %2310 = vmatprep.subr.bf16.mxu0 0
        %2311 = vmatpush1.bf16.xpose.msra.mxu0 0
        %2312 = vmatprep.subr.bf16.mxu0 0
        %2313 = vmatpush1.bf16.xpose.msra.mxu0 0
        %2314 = vmatprep.subr.bf16.mxu0 0
        %2315 = vmatpush1.bf16.xpose.msra.mxu0 0
        %2316 = vmatprep.subr.bf16.mxu0 0
        %2317 = vmatpush1.bf16.xpose.msra.mxu0 0
        %2318 = vmatprep.subr.bf16.mxu0 0
        %2319 = vmatpush1.bf16.xpose.msra.mxu0 0
        %2320 = vmatprep.subr.bf16.mxu0 0
        %2321 = vmatpush1.bf16.xpose.msra.mxu0 0
        %2322 = vmatprep.subr.bf16.mxu0 0
        %2323 = vmatpush1.bf16.xpose.msra.mxu0 0
        %2324 = vmatprep.subr.bf16.mxu0 0
        %2325 = vmatpush1.bf16.xpose.msra.mxu0 0
        %2326 = vmatprep.mubr.bf16.mxu0 0
        %2327 = vmatmul.mubr.bf16.gmra.mrb[0].mxu0 %v2289
        %v2328 = vpop.f32.mrb[0].mxu0
        %v2329 = vadd.f32 0.0, %v2328
        %v2330 = vpop.f32.mrb[0].mxu0
        %v2331 = vpop.f32.mrb[0].mxu0
        %v2332 = vpop.f32.mrb[0].mxu0
        %2333 = vdwg.mxu0
        %v2335 = vsel %vm851, %v2281, 0
        %v2338 = vsel %vm851, %v2285, 0
        %2340 = vmatprep.subr.bf16.mxu0 0
        %2341 = vmatpush1.bf16.xpose.msra.mxu0 %v2338
        %2342 = vmatprep.subr.bf16.mxu0 0
        %2343 = vmatpush1.bf16.xpose.msra.mxu0 0
        %2344 = vmatprep.subr.bf16.mxu0 0
        %2345 = vmatpush1.bf16.xpose.msra.mxu0 0
        %2346 = vmatprep.subr.bf16.mxu0 0
        %2347 = vmatpush1.bf16.xpose.msra.mxu0 0
        %2348 = vmatprep.subr.bf16.mxu0 0
        %2349 = vmatpush1.bf16.xpose.msra.mxu0 0
        %2350 = vmatprep.subr.bf16.mxu0 0
        %2351 = vmatpush1.bf16.xpose.msra.mxu0 0
        %2352 = vmatprep.subr.bf16.mxu0 0
        %2353 = vmatpush1.bf16.xpose.msra.mxu0 0
        %2354 = vmatprep.subr.bf16.mxu0 0
        %2355 = vmatpush1.bf16.xpose.msra.mxu0 0
        %2356 = vmatprep.subr.bf16.mxu0 0
        %2357 = vmatpush1.bf16.xpose.msra.mxu0 0
        %2358 = vmatprep.subr.bf16.mxu0 0
        %2359 = vmatpush1.bf16.xpose.msra.mxu0 0
        %2360 = vmatprep.subr.bf16.mxu0 0
        %2361 = vmatpush1.bf16.xpose.msra.mxu0 0
        %2362 = vmatprep.subr.bf16.mxu0 0
        %2363 = vmatpush1.bf16.xpose.msra.mxu0 0
        %2364 = vmatprep.subr.bf16.mxu0 0
        %2365 = vmatpush1.bf16.xpose.msra.mxu0 0
        %2366 = vmatprep.subr.bf16.mxu0 0
        %2367 = vmatpush1.bf16.xpose.msra.mxu0 0
        %2368 = vmatprep.subr.bf16.mxu0 0
        %2369 = vmatpush1.bf16.xpose.msra.mxu0 0
        %2370 = vmatprep.subr.bf16.mxu0 0
        %2371 = vmatpush1.bf16.xpose.msra.mxu0 0
        %2372 = vmatprep.mubr.bf16.mxu0 0
        %2373 = vmatmul.mubr.bf16.gmra.mrb[0].mxu0 %v2335
        %v2374 = vpop.f32.mrb[0].mxu0
        %v2375 = vadd.f32 0.0, %v2374
        %v2376 = vpop.f32.mrb[0].mxu0
        %v2377 = vpop.f32.mrb[0].mxu0
        %v2378 = vpop.f32.mrb[0].mxu0
        %2379 = vdwg.mxu0
        %v2381 = vsel %vm851, %v2282, 0
        %v2384 = vsel %vm851, %v2286, 0
        %2386 = vmatprep.subr.bf16.mxu0 0
        %2387 = vmatpush1.bf16.xpose.msra.mxu0 %v2384
        %2388 = vmatprep.subr.bf16.mxu0 0
        %2389 = vmatpush1.bf16.xpose.msra.mxu0 0
        %2390 = vmatprep.subr.bf16.mxu0 0
        %2391 = vmatpush1.bf16.xpose.msra.mxu0 0
        %2392 = vmatprep.subr.bf16.mxu0 0
        %2393 = vmatpush1.bf16.xpose.msra.mxu0 0
        %2394 = vmatprep.subr.bf16.mxu0 0
        %2395 = vmatpush1.bf16.xpose.msra.mxu0 0
        %2396 = vmatprep.subr.bf16.mxu0 0
        %2397 = vmatpush1.bf16.xpose.msra.mxu0 0
        %2398 = vmatprep.subr.bf16.mxu0 0
        %2399 = vmatpush1.bf16.xpose.msra.mxu0 0
        %2400 = vmatprep.subr.bf16.mxu0 0
        %2401 = vmatpush1.bf16.xpose.msra.mxu0 0
        %2402 = vmatprep.subr.bf16.mxu0 0
        %2403 = vmatpush1.bf16.xpose.msra.mxu0 0
        %2404 = vmatprep.subr.bf16.mxu0 0
        %2405 = vmatpush1.bf16.xpose.msra.mxu0 0
        %2406 = vmatprep.subr.bf16.mxu0 0
        %2407 = vmatpush1.bf16.xpose.msra.mxu0 0
        %2408 = vmatprep.subr.bf16.mxu0 0
        %2409 = vmatpush1.bf16.xpose.msra.mxu0 0
        %2410 = vmatprep.subr.bf16.mxu0 0
        %2411 = vmatpush1.bf16.xpose.msra.mxu0 0
        %2412 = vmatprep.subr.bf16.mxu0 0
        %2413 = vmatpush1.bf16.xpose.msra.mxu0 0
        %2414 = vmatprep.subr.bf16.mxu0 0
        %2415 = vmatpush1.bf16.xpose.msra.mxu0 0
        %2416 = vmatprep.subr.bf16.mxu0 0
        %2417 = vmatpush1.bf16.xpose.msra.mxu0 0
        %2418 = vmatprep.mubr.bf16.mxu0 0
        %2419 = vmatmul.mubr.bf16.gmra.mrb[0].mxu0 %v2381
        %v2420 = vpop.f32.mrb[0].mxu0
        %v2421 = vadd.f32 0.0, %v2420
        %v2422 = vpop.f32.mrb[0].mxu0
        %v2423 = vpop.f32.mrb[0].mxu0
        %v2424 = vpop.f32.mrb[0].mxu0
        %2425 = vdwg.mxu0
        %v2427 = vsel %vm851, %v2283, 0
        %v2430 = vsel %vm851, %v2287, 0
        %2432 = vmatprep.subr.bf16.mxu0 0
        %2433 = vmatpush1.bf16.xpose.msra.mxu0 %v2430
        %2434 = vmatprep.subr.bf16.mxu0 0
        %2435 = vmatpush1.bf16.xpose.msra.mxu0 0
        %2436 = vmatprep.subr.bf16.mxu0 0
        %2437 = vmatpush1.bf16.xpose.msra.mxu0 0
        %2438 = vmatprep.subr.bf16.mxu0 0
        %2439 = vmatpush1.bf16.xpose.msra.mxu0 0
        %2440 = vmatprep.subr.bf16.mxu0 0
        %2441 = vmatpush1.bf16.xpose.msra.mxu0 0
        %2442 = vmatprep.subr.bf16.mxu0 0
        %2443 = vmatpush1.bf16.xpose.msra.mxu0 0
        %2444 = vmatprep.subr.bf16.mxu0 0
        %2445 = vmatpush1.bf16.xpose.msra.mxu0 0
        %2446 = vmatprep.subr.bf16.mxu0 0
        %2447 = vmatpush1.bf16.xpose.msra.mxu0 0
        %2448 = vmatprep.subr.bf16.mxu0 0
        %2449 = vmatpush1.bf16.xpose.msra.mxu0 0
        %2450 = vmatprep.subr.bf16.mxu0 0
        %2451 = vmatpush1.bf16.xpose.msra.mxu0 0
        %2452 = vmatprep.subr.bf16.mxu0 0
        %2453 = vmatpush1.bf16.xpose.msra.mxu0 0
        %2454 = vmatprep.subr.bf16.mxu0 0
        %2455 = vmatpush1.bf16.xpose.msra.mxu0 0
        %2456 = vmatprep.subr.bf16.mxu0 0
        %2457 = vmatpush1.bf16.xpose.msra.mxu0 0
        %2458 = vmatprep.subr.bf16.mxu0 0
        %2459 = vmatpush1.bf16.xpose.msra.mxu0 0
        %2460 = vmatprep.subr.bf16.mxu0 0
        %2461 = vmatpush1.bf16.xpose.msra.mxu0 0
        %2462 = vmatprep.subr.bf16.mxu0 0
        %2463 = vmatpush1.bf16.xpose.msra.mxu0 0
        %2464 = vmatprep.mubr.bf16.mxu0 0
        %2465 = vmatmul.mubr.bf16.gmra.mrb[0].mxu0 %v2427
        %v2466 = vpop.f32.mrb[0].mxu0
        %v2467 = vadd.f32 0.0, %v2466
        %v2468 = vpop.f32.mrb[0].mxu0
        %v2469 = vpop.f32.mrb[0].mxu0
        %v2470 = vpop.f32.mrb[0].mxu0
        %2471 = vdwg.mxu0
        %v2472 = vmul.f32 %v2329, 0.17677669
        %v2473 = vmul.f32 %v2375, 0.17677669
        %v2474 = vmul.f32 %v2421, 0.17677669
        %v2475 = vmul.f32 %v2467, 0.17677669
        %v2476 = vsel %vm1041, %v2472, -1e+30
        %v2477 = vsel %vm1041, %v2473, -1e+30
        %v2478 = vsel %vm1041, %v2474, -1e+30
        %v2479 = vsel %vm1041, %v2475, -1e+30
        %v2480 = vsel %vm1046, %v2476, -inf
        %2481 = vmax.xlane.f32.xlu0 %v2480
        %v2482 = vpop.xlane.xlu0 %2481
        %v2483 = vsel %vm1046, %v2477, -inf
        %2484 = vmax.xlane.f32.xlu0 %v2483
        %v2485 = vpop.xlane.xlu0 %2484
        %v2486 = vsel %vm1046, %v2478, -inf
        %2487 = vmax.xlane.f32.xlu0 %v2486
        %v2488 = vpop.xlane.xlu0 %2487
        %v2489 = vsel %vm1046, %v2479, -inf
        %2490 = vmax.xlane.f32.xlu0 %v2489
        %v2491 = vpop.xlane.xlu0 %2490
        %v2492 = vsub.f32 %v2476, %v2482
        %v2493 = vsub.f32 %v2477, %v2485
        %v2494 = vsub.f32 %v2478, %v2488
        %v2495 = vsub.f32 %v2479, %v2491
        %v2496 = vmul.f32 %v2492, 1.442695
        %v2497 = vpow.pop %v2496
        %v2498 = vmul.f32 %v2493, 1.442695
        %v2499 = vpow.pop %v2498
        %v2500 = vmul.f32 %v2494, 1.442695
        %v2501 = vpow.pop %v2500
        %v2502 = vmul.f32 %v2495, 1.442695
        %v2503 = vpow.pop %v2502
        %v2504 = vsel %vm1046, %v2497, 0.0
        %2505 = vadd.xlane.f32.xlu0 %v2504
        %v2506 = vpop.xlane.xlu0 %2505
        %v2507 = vsel %vm1046, %v2499, 0.0
        %2508 = vadd.xlane.f32.xlu0 %v2507
        %v2509 = vpop.xlane.xlu0 %2508
        %v2510 = vsel %vm1046, %v2501, 0.0
        %2511 = vadd.xlane.f32.xlu0 %v2510
        %v2512 = vpop.xlane.xlu0 %2511
        %v2513 = vsel %vm1046, %v2503, 0.0
        %2514 = vadd.xlane.f32.xlu0 %v2513
        %v2515 = vpop.xlane.xlu0 %2514
        %v2516 = vrcp.pop %v2506
        %v2517 = vmul.f32 %v2497, %v2516
        %v2518 = vrcp.pop %v2509
        %v2519 = vmul.f32 %v2499, %v2518
        %v2520 = vrcp.pop %v2512
        %v2521 = vmul.f32 %v2501, %v2520
        %v2522 = vrcp.pop %v2515
        %v2523 = vmul.f32 %v2503, %v2522
        %v2524 = vpack.c.bf16 %v2517, %v2517
        %v2525 = vpack.c.bf16 %v2519, %v2519
        %v2526 = vpack.c.bf16 %v2521, %v2521
        %v2527 = vpack.c.bf16 %v2523, %v2523
        %v2528 = vpack.c.bf16 %v2245, %v2245
        %v2529 = vpack.c.bf16 %v2272, %v2272
        %v2530 = vpack.c.bf16 %v2275, %v2275
        %v2531 = vpack.c.bf16 %v2278, %v2278
        %v2533 = vsel %vm1046, %v2524, 0
        %v2536 = vsel %vm1102, %v2528, 0
        %2538 = vmatprep.subr.bf16.mxu0 0
        %2539 = vmatpush1.bf16.msra.mxu0 %v2536
        %2540 = vmatprep.subr.bf16.mxu0 0
        %2541 = vmatpush1.bf16.msra.mxu0 0
        %2542 = vmatprep.subr.bf16.mxu0 0
        %2543 = vmatpush1.bf16.msra.mxu0 0
        %2544 = vmatprep.subr.bf16.mxu0 0
        %2545 = vmatpush1.bf16.msra.mxu0 0
        %2546 = vmatprep.subr.bf16.mxu0 0
        %2547 = vmatpush1.bf16.msra.mxu0 0
        %2548 = vmatprep.subr.bf16.mxu0 0
        %2549 = vmatpush1.bf16.msra.mxu0 0
        %2550 = vmatprep.subr.bf16.mxu0 0
        %2551 = vmatpush1.bf16.msra.mxu0 0
        %2552 = vmatprep.subr.bf16.mxu0 0
        %2553 = vmatpush1.bf16.msra.mxu0 0
        %2554 = vmatprep.subr.bf16.mxu0 0
        %2555 = vmatpush1.bf16.msra.mxu0 0
        %2556 = vmatprep.subr.bf16.mxu0 0
        %2557 = vmatpush1.bf16.msra.mxu0 0
        %2558 = vmatprep.subr.bf16.mxu0 0
        %2559 = vmatpush1.bf16.msra.mxu0 0
        %2560 = vmatprep.subr.bf16.mxu0 0
        %2561 = vmatpush1.bf16.msra.mxu0 0
        %2562 = vmatprep.subr.bf16.mxu0 0
        %2563 = vmatpush1.bf16.msra.mxu0 0
        %2564 = vmatprep.subr.bf16.mxu0 0
        %2565 = vmatpush1.bf16.msra.mxu0 0
        %2566 = vmatprep.subr.bf16.mxu0 0
        %2567 = vmatpush1.bf16.msra.mxu0 0
        %2568 = vmatprep.subr.bf16.mxu0 0
        %2569 = vmatpush1.bf16.msra.mxu0 0
        %2570 = vmatprep.mubr.bf16.mxu0 0
        %2571 = vmatmul.mubr.bf16.gmra.mrb[0].mxu0 %v2533
        %v2572 = vpop.f32.mrb[0].mxu0
        %v2573 = vadd.f32 0.0, %v2572
        %v2574 = vpop.f32.mrb[0].mxu0
        %v2575 = vpop.f32.mrb[0].mxu0
        %v2576 = vpop.f32.mrb[0].mxu0
        %2577 = vdwg.mxu0
        %v2579 = vsel %vm1046, %v2525, 0
        %v2582 = vsel %vm1102, %v2529, 0
        %2584 = vmatprep.subr.bf16.mxu0 0
        %2585 = vmatpush1.bf16.msra.mxu0 %v2582
        %2586 = vmatprep.subr.bf16.mxu0 0
        %2587 = vmatpush1.bf16.msra.mxu0 0
        %2588 = vmatprep.subr.bf16.mxu0 0
        %2589 = vmatpush1.bf16.msra.mxu0 0
        %2590 = vmatprep.subr.bf16.mxu0 0
        %2591 = vmatpush1.bf16.msra.mxu0 0
        %2592 = vmatprep.subr.bf16.mxu0 0
        %2593 = vmatpush1.bf16.msra.mxu0 0
        %2594 = vmatprep.subr.bf16.mxu0 0
        %2595 = vmatpush1.bf16.msra.mxu0 0
        %2596 = vmatprep.subr.bf16.mxu0 0
        %2597 = vmatpush1.bf16.msra.mxu0 0
        %2598 = vmatprep.subr.bf16.mxu0 0
        %2599 = vmatpush1.bf16.msra.mxu0 0
        %2600 = vmatprep.subr.bf16.mxu0 0
        %2601 = vmatpush1.bf16.msra.mxu0 0
        %2602 = vmatprep.subr.bf16.mxu0 0
        %2603 = vmatpush1.bf16.msra.mxu0 0
        %2604 = vmatprep.subr.bf16.mxu0 0
        %2605 = vmatpush1.bf16.msra.mxu0 0
        %2606 = vmatprep.subr.bf16.mxu0 0
        %2607 = vmatpush1.bf16.msra.mxu0 0
        %2608 = vmatprep.subr.bf16.mxu0 0
        %2609 = vmatpush1.bf16.msra.mxu0 0
        %2610 = vmatprep.subr.bf16.mxu0 0
        %2611 = vmatpush1.bf16.msra.mxu0 0
        %2612 = vmatprep.subr.bf16.mxu0 0
        %2613 = vmatpush1.bf16.msra.mxu0 0
        %2614 = vmatprep.subr.bf16.mxu0 0
        %2615 = vmatpush1.bf16.msra.mxu0 0
        %2616 = vmatprep.mubr.bf16.mxu0 0
        %2617 = vmatmul.mubr.bf16.gmra.mrb[0].mxu0 %v2579
        %v2618 = vpop.f32.mrb[0].mxu0
        %v2619 = vadd.f32 0.0, %v2618
        %v2620 = vpop.f32.mrb[0].mxu0
        %v2621 = vpop.f32.mrb[0].mxu0
        %v2622 = vpop.f32.mrb[0].mxu0
        %2623 = vdwg.mxu0
        %v2625 = vsel %vm1046, %v2526, 0
        %v2628 = vsel %vm1102, %v2530, 0
        %2630 = vmatprep.subr.bf16.mxu0 0
        %2631 = vmatpush1.bf16.msra.mxu0 %v2628
        %2632 = vmatprep.subr.bf16.mxu0 0
        %2633 = vmatpush1.bf16.msra.mxu0 0
        %2634 = vmatprep.subr.bf16.mxu0 0
        %2635 = vmatpush1.bf16.msra.mxu0 0
        %2636 = vmatprep.subr.bf16.mxu0 0
        %2637 = vmatpush1.bf16.msra.mxu0 0
        %2638 = vmatprep.subr.bf16.mxu0 0
        %2639 = vmatpush1.bf16.msra.mxu0 0
        %2640 = vmatprep.subr.bf16.mxu0 0
        %2641 = vmatpush1.bf16.msra.mxu0 0
        %2642 = vmatprep.subr.bf16.mxu0 0
        %2643 = vmatpush1.bf16.msra.mxu0 0
        %2644 = vmatprep.subr.bf16.mxu0 0
        %2645 = vmatpush1.bf16.msra.mxu0 0
        %2646 = vmatprep.subr.bf16.mxu0 0
        %2647 = vmatpush1.bf16.msra.mxu0 0
        %2648 = vmatprep.subr.bf16.mxu0 0
        %2649 = vmatpush1.bf16.msra.mxu0 0
        %2650 = vmatprep.subr.bf16.mxu0 0
        %2651 = vmatpush1.bf16.msra.mxu0 0
        %2652 = vmatprep.subr.bf16.mxu0 0
        %2653 = vmatpush1.bf16.msra.mxu0 0
        %2654 = vmatprep.subr.bf16.mxu0 0
        %2655 = vmatpush1.bf16.msra.mxu0 0
        %2656 = vmatprep.subr.bf16.mxu0 0
        %2657 = vmatpush1.bf16.msra.mxu0 0
        %2658 = vmatprep.subr.bf16.mxu0 0
        %2659 = vmatpush1.bf16.msra.mxu0 0
        %2660 = vmatprep.subr.bf16.mxu0 0
        %2661 = vmatpush1.bf16.msra.mxu0 0
        %2662 = vmatprep.mubr.bf16.mxu0 0
        %2663 = vmatmul.mubr.bf16.gmra.mrb[0].mxu0 %v2625
        %v2664 = vpop.f32.mrb[0].mxu0
        %v2665 = vadd.f32 0.0, %v2664
        %v2666 = vpop.f32.mrb[0].mxu0
        %v2667 = vpop.f32.mrb[0].mxu0
        %v2668 = vpop.f32.mrb[0].mxu0
        %2669 = vdwg.mxu0
        %v2671 = vsel %vm1046, %v2527, 0
        %v2674 = vsel %vm1102, %v2531, 0
        %2676 = vmatprep.subr.bf16.mxu0 0
        %2677 = vmatpush1.bf16.msra.mxu0 %v2674
        %2678 = vmatprep.subr.bf16.mxu0 0
        %2679 = vmatpush1.bf16.msra.mxu0 0
        %2680 = vmatprep.subr.bf16.mxu0 0
        %2681 = vmatpush1.bf16.msra.mxu0 0
        %2682 = vmatprep.subr.bf16.mxu0 0
        %2683 = vmatpush1.bf16.msra.mxu0 0
        %2684 = vmatprep.subr.bf16.mxu0 0
        %2685 = vmatpush1.bf16.msra.mxu0 0
        %2686 = vmatprep.subr.bf16.mxu0 0
        %2687 = vmatpush1.bf16.msra.mxu0 0
        %2688 = vmatprep.subr.bf16.mxu0 0
        %2689 = vmatpush1.bf16.msra.mxu0 0
        %2690 = vmatprep.subr.bf16.mxu0 0
        %2691 = vmatpush1.bf16.msra.mxu0 0
        %2692 = vmatprep.subr.bf16.mxu0 0
        %2693 = vmatpush1.bf16.msra.mxu0 0
        %2694 = vmatprep.subr.bf16.mxu0 0
        %2695 = vmatpush1.bf16.msra.mxu0 0
        %2696 = vmatprep.subr.bf16.mxu0 0
        %2697 = vmatpush1.bf16.msra.mxu0 0
        %2698 = vmatprep.subr.bf16.mxu0 0
        %2699 = vmatpush1.bf16.msra.mxu0 0
        %2700 = vmatprep.subr.bf16.mxu0 0
        %2701 = vmatpush1.bf16.msra.mxu0 0
        %2702 = vmatprep.subr.bf16.mxu0 0
        %2703 = vmatpush1.bf16.msra.mxu0 0
        %2704 = vmatprep.subr.bf16.mxu0 0
        %2705 = vmatpush1.bf16.msra.mxu0 0
        %2706 = vmatprep.subr.bf16.mxu0 0
        %2707 = vmatpush1.bf16.msra.mxu0 0
        %2708 = vmatprep.mubr.bf16.mxu0 0
        %2709 = vmatmul.mubr.bf16.gmra.mrb[0].mxu0 %v2671
        %v2710 = vpop.f32.mrb[0].mxu0
        %v2711 = vadd.f32 0.0, %v2710
        %v2712 = vpop.f32.mrb[0].mxu0
        %v2713 = vpop.f32.mrb[0].mxu0
        %v2714 = vpop.f32.mrb[0].mxu0
        %2715 = vdwg.mxu0
        %2717 = vrot.lane.b32.xlu0 %v2619, 32
        %v2718 = vpop.permute.xlu0 %2717
        %2721 = vrot.lane.b32.xlu0 %v2665, 64
        %v2722 = vpop.permute.xlu0 %2721
        %2725 = vrot.lane.b32.xlu0 %v2711, 96
        %v2726 = vpop.permute.xlu0 %2725
        %v2728 = vsel %vm851, %v2573, %v2718
        %v2729 = vsel %vm1297, %v2728, %v2722
        %v2730 = vsel %vm1299, %v2729, %v2726
        %v2731 = vadd.f32 %v1977, %v2730
        %s2732 = scalar_lea.vmem %s5, 1
        %v2733 = vld [vmem:[%s2732] sm:$0x1]
        %s2734 = scalar_lea.vmem %s6, 1
        %v2735 = vld [vmem:[%s2734] sm:$0x1]
        %2736 = vadd.xlane.f32.xlu0 %v2731
        %v2737 = vpop.xlane.xlu0 %2736
        %v2738 = vmul.f32 %v2737, %v547
        %v2739 = vsub.f32 %v2731, %v2738
        %v2740 = vmul.f32 %v2739, %v2739
        %2741 = vadd.xlane.f32.xlu0 %v2740
        %v2742 = vpop.xlane.xlu0 %2741
        %v2743 = vmul.f32 %v2742, %v547
        %v2744 = vadd.f32 %v2743, 1e-05
        %v2745 = vrsqrt.pop %v2744
        %v2746 = vmul.f32 %v2739, %v2745
        %v2748 = vlaneseq
        %v2749 = vshrl.u32 %v2748, 7
        %v2750 = vsub.s32 0, %v2749
        %v2751 = vrot.slane %v2733, %v2750
        %v2753 = vmul.f32 %v2746, %v2751
        %v2755 = vlaneseq
        %v2756 = vshrl.u32 %v2755, 7
        %v2757 = vsub.s32 0, %v2756
        %v2758 = vrot.slane %v2735, %v2757
        %v2760 = vadd.f32 %v2753, %v2758
        %v2761 = vpack.c.bf16 %v2760, %v2760
        %s2762 = scalar_lea.vmem [#allocation5], 256
        %v2763 = vld [vmem:[%s2762] sm:$0xff]
        %v2764 = vld [vmem:[%s2762 + $0x8] sm:$0xff]
        %v2765 = vld [vmem:[%s2762 + $0x10] sm:$0xff]
        %v2766 = vld [vmem:[%s2762 + $0x18] sm:$0xff]
        %v2767 = vld [vmem:[%s2762 + $0x20] sm:$0xff]
        %v2768 = vld [vmem:[%s2762 + $0x28] sm:$0xff]
        %v2769 = vld [vmem:[%s2762 + $0x30] sm:$0xff]
        %v2770 = vld [vmem:[%s2762 + $0x38] sm:$0xff]
        %v2771 = vld [vmem:[%s2762 + $0x40] sm:$0xff]
        %v2772 = vld [vmem:[%s2762 + $0x48] sm:$0xff]
        %v2773 = vld [vmem:[%s2762 + $0x50] sm:$0xff]
        %v2774 = vld [vmem:[%s2762 + $0x58] sm:$0xff]
        %v2775 = vld [vmem:[%s2762 + $0x60] sm:$0xff]
        %v2776 = vld [vmem:[%s2762 + $0x68] sm:$0xff]
        %v2777 = vld [vmem:[%s2762 + $0x70] sm:$0xff]
        %v2778 = vld [vmem:[%s2762 + $0x78] sm:$0xff]
        %v2779 = vld [vmem:[%s2762 + $0x80] sm:$0xff]
        %v2780 = vld [vmem:[%s2762 + $0x88] sm:$0xff]
        %v2781 = vld [vmem:[%s2762 + $0x90] sm:$0xff]
        %v2782 = vld [vmem:[%s2762 + $0x98] sm:$0xff]
        %v2783 = vld [vmem:[%s2762 + $0xa0] sm:$0xff]
        %v2784 = vld [vmem:[%s2762 + $0xa8] sm:$0xff]
        %v2785 = vld [vmem:[%s2762 + $0xb0] sm:$0xff]
        %v2786 = vld [vmem:[%s2762 + $0xb8] sm:$0xff]
        %v2787 = vld [vmem:[%s2762 + $0xc0] sm:$0xff]
        %v2788 = vld [vmem:[%s2762 + $0xc8] sm:$0xff]
        %v2789 = vld [vmem:[%s2762 + $0xd0] sm:$0xff]
        %v2790 = vld [vmem:[%s2762 + $0xd8] sm:$0xff]
        %v2791 = vld [vmem:[%s2762 + $0xe0] sm:$0xff]
        %v2792 = vld [vmem:[%s2762 + $0xe8] sm:$0xff]
        %v2793 = vld [vmem:[%s2762 + $0xf0] sm:$0xff]
        %v2794 = vld [vmem:[%s2762 + $0xf8] sm:$0xff]
        %s2795 = scalar_lea.vmem %s8, 4
        %v2796 = vld [vmem:[%s2795] sm:$0xf]
        %v2798 = vlaneseq
        %v2799 = vshrl.u32 %v2798, 7
        %v2800 = vsub.s32 0, %v2799
        %v2801 = vrot.slane %v2796, %v2800
        %v2802 = vlaneseq
        %v2803 = vshrl.u32 %v2802, 7
        %v2804 = vsub.s32 1, %v2803
        %v2805 = vrot.slane %v2796, %v2804
        %v2806 = vlaneseq
        %v2807 = vshrl.u32 %v2806, 7
        %v2808 = vsub.s32 2, %v2807
        %v2809 = vrot.slane %v2796, %v2808
        %v2810 = vlaneseq
        %v2811 = vshrl.u32 %v2810, 7
        %v2812 = vsub.s32 3, %v2811
        %v2813 = vrot.slane %v2796, %v2812
        %v2850 = vunpack.c.l.b16 %v2763
        %v2851 = vunpack.c.h.b16 %v2763
        %v2852 = vunpack.c.l.b16 %v2764
        %v2853 = vunpack.c.h.b16 %v2764
        %v2854 = vunpack.c.l.b16 %v2765
        %v2855 = vunpack.c.h.b16 %v2765
        %v2856 = vunpack.c.l.b16 %v2766
        %v2857 = vunpack.c.h.b16 %v2766
        %v2858 = vunpack.c.l.b16 %v2767
        %v2859 = vunpack.c.h.b16 %v2767
        %v2860 = vunpack.c.l.b16 %v2768
        %v2861 = vunpack.c.h.b16 %v2768
        %v2862 = vunpack.c.l.b16 %v2769
        %v2863 = vunpack.c.h.b16 %v2769
        %v2864 = vunpack.c.l.b16 %v2770
        %v2865 = vunpack.c.h.b16 %v2770
        %v2866 = vunpack.c.l.b16 %v2771
        %v2867 = vunpack.c.h.b16 %v2771
        %v2868 = vunpack.c.l.b16 %v2772
        %v2869 = vunpack.c.h.b16 %v2772
        %v2870 = vunpack.c.l.b16 %v2773
        %v2871 = vunpack.c.h.b16 %v2773
        %v2872 = vunpack.c.l.b16 %v2774
        %v2873 = vunpack.c.h.b16 %v2774
        %v2874 = vunpack.c.l.b16 %v2775
        %v2875 = vunpack.c.h.b16 %v2775
        %v2876 = vunpack.c.l.b16 %v2776
        %v2877 = vunpack.c.h.b16 %v2776
        %v2878 = vunpack.c.l.b16 %v2777
        %v2879 = vunpack.c.h.b16 %v2777
        %v2880 = vunpack.c.l.b16 %v2778
        %v2881 = vunpack.c.h.b16 %v2778
        %v2882 = vunpack.c.l.b16 %v2779
        %v2883 = vunpack.c.h.b16 %v2779
        %v2884 = vunpack.c.l.b16 %v2780
        %v2885 = vunpack.c.h.b16 %v2780
        %v2886 = vunpack.c.l.b16 %v2781
        %v2887 = vunpack.c.h.b16 %v2781
        %v2888 = vunpack.c.l.b16 %v2782
        %v2889 = vunpack.c.h.b16 %v2782
        %v2890 = vunpack.c.l.b16 %v2783
        %v2891 = vunpack.c.h.b16 %v2783
        %v2892 = vunpack.c.l.b16 %v2784
        %v2893 = vunpack.c.h.b16 %v2784
        %v2894 = vunpack.c.l.b16 %v2785
        %v2895 = vunpack.c.h.b16 %v2785
        %v2896 = vunpack.c.l.b16 %v2786
        %v2897 = vunpack.c.h.b16 %v2786
        %v2898 = vunpack.c.l.b16 %v2787
        %v2899 = vunpack.c.h.b16 %v2787
        %v2900 = vunpack.c.l.b16 %v2788
        %v2901 = vunpack.c.h.b16 %v2788
        %v2902 = vunpack.c.l.b16 %v2789
        %v2903 = vunpack.c.h.b16 %v2789
        %v2904 = vunpack.c.l.b16 %v2790
        %v2905 = vunpack.c.h.b16 %v2790
        %v2906 = vunpack.c.l.b16 %v2791
        %v2907 = vunpack.c.h.b16 %v2791
        %v2908 = vunpack.c.l.b16 %v2792
        %v2909 = vunpack.c.h.b16 %v2792
        %v2910 = vunpack.c.l.b16 %v2793
        %v2911 = vunpack.c.h.b16 %v2793
        %v2912 = vunpack.c.l.b16 %v2794
        %v2913 = vunpack.c.h.b16 %v2794
        %v2914 = vpack.c.b16 %v2854, %v2850
        %v2915 = vpack.c.b16 %v2855, %v2851
        %v2916 = vpack.c.b16 %v2856, %v2852
        %v2917 = vpack.c.b16 %v2857, %v2853
        %v2918 = vpack.c.b16 %v2862, %v2858
        %v2919 = vpack.c.b16 %v2863, %v2859
        %v2920 = vpack.c.b16 %v2864, %v2860
        %v2921 = vpack.c.b16 %v2865, %v2861
        %v2922 = vpack.c.b16 %v2870, %v2866
        %v2923 = vpack.c.b16 %v2871, %v2867
        %v2924 = vpack.c.b16 %v2872, %v2868
        %v2925 = vpack.c.b16 %v2873, %v2869
        %v2926 = vpack.c.b16 %v2878, %v2874
        %v2927 = vpack.c.b16 %v2879, %v2875
        %v2928 = vpack.c.b16 %v2880, %v2876
        %v2929 = vpack.c.b16 %v2881, %v2877
        %v2930 = vpack.c.b16 %v2886, %v2882
        %v2931 = vpack.c.b16 %v2887, %v2883
        %v2932 = vpack.c.b16 %v2888, %v2884
        %v2933 = vpack.c.b16 %v2889, %v2885
        %v2934 = vpack.c.b16 %v2894, %v2890
        %v2935 = vpack.c.b16 %v2895, %v2891
        %v2936 = vpack.c.b16 %v2896, %v2892
        %v2937 = vpack.c.b16 %v2897, %v2893
        %v2938 = vpack.c.b16 %v2902, %v2898
        %v2939 = vpack.c.b16 %v2903, %v2899
        %v2940 = vpack.c.b16 %v2904, %v2900
        %v2941 = vpack.c.b16 %v2905, %v2901
        %v2942 = vpack.c.b16 %v2910, %v2906
        %v2943 = vpack.c.b16 %v2911, %v2907
        %v2944 = vpack.c.b16 %v2912, %v2908
        %v2945 = vpack.c.b16 %v2913, %v2909
        %2978 = vmatprep.subr.bf16.mxu0 %v2915
        %2979 = vmatpush1.bf16.msra.mxu0 %v2914
        %2980 = vmatprep.subr.bf16.mxu0 %v2919
        %2981 = vmatpush1.bf16.msra.mxu0 %v2918
        %2982 = vmatprep.subr.bf16.mxu0 %v2923
        %2983 = vmatpush1.bf16.msra.mxu0 %v2922
        %2984 = vmatprep.subr.bf16.mxu0 %v2927
        %2985 = vmatpush1.bf16.msra.mxu0 %v2926
        %2986 = vmatprep.subr.bf16.mxu0 %v2931
        %2987 = vmatpush1.bf16.msra.mxu0 %v2930
        %2988 = vmatprep.subr.bf16.mxu0 %v2935
        %2989 = vmatpush1.bf16.msra.mxu0 %v2934
        %2990 = vmatprep.subr.bf16.mxu0 %v2939
        %2991 = vmatpush1.bf16.msra.mxu0 %v2938
        %2992 = vmatprep.subr.bf16.mxu0 %v2943
        %2993 = vmatpush1.bf16.msra.mxu0 %v2942
        %2994 = vmatprep.subr.bf16.mxu0 0
        %2995 = vmatpush1.bf16.msra.mxu0 0
        %2996 = vmatprep.subr.bf16.mxu0 0
        %2997 = vmatpush1.bf16.msra.mxu0 0
        %2998 = vmatprep.subr.bf16.mxu0 0
        %2999 = vmatpush1.bf16.msra.mxu0 0
        %3000 = vmatprep.subr.bf16.mxu0 0
        %3001 = vmatpush1.bf16.msra.mxu0 0
        %3002 = vmatprep.subr.bf16.mxu0 0
        %3003 = vmatpush1.bf16.msra.mxu0 0
        %3004 = vmatprep.subr.bf16.mxu0 0
        %3005 = vmatpush1.bf16.msra.mxu0 0
        %3006 = vmatprep.subr.bf16.mxu0 0
        %3007 = vmatpush1.bf16.msra.mxu0 0
        %3008 = vmatprep.subr.bf16.mxu0 0
        %3009 = vmatpush1.bf16.msra.mxu0 0
        %3010 = vmatprep.mubr.bf16.mxu0 0
        %3011 = vmatmul.mubr.bf16.gmra.mrb[0].mxu0 %v2761
        %v3012 = vpop.f32.mrb[0].mxu0
        %v3013 = vadd.f32 %v2801, %v3012
        %v3014 = vpop.f32.mrb[0].mxu0
        %v3015 = vadd.f32 %v2805, %v3014
        %v3016 = vpop.f32.mrb[0].mxu0
        %v3017 = vpop.f32.mrb[0].mxu0
        %3018 = vdwg.mxu0
        %3019 = vmatprep.subr.bf16.mxu0 %v2917
        %3020 = vmatpush1.bf16.msra.mxu0 %v2916
        %3021 = vmatprep.subr.bf16.mxu0 %v2921
        %3022 = vmatpush1.bf16.msra.mxu0 %v2920
        %3023 = vmatprep.subr.bf16.mxu0 %v2925
        %3024 = vmatpush1.bf16.msra.mxu0 %v2924
        %3025 = vmatprep.subr.bf16.mxu0 %v2929
        %3026 = vmatpush1.bf16.msra.mxu0 %v2928
        %3027 = vmatprep.subr.bf16.mxu0 %v2933
        %3028 = vmatpush1.bf16.msra.mxu0 %v2932
        %3029 = vmatprep.subr.bf16.mxu0 %v2937
        %3030 = vmatpush1.bf16.msra.mxu0 %v2936
        %3031 = vmatprep.subr.bf16.mxu0 %v2941
        %3032 = vmatpush1.bf16.msra.mxu0 %v2940
        %3033 = vmatprep.subr.bf16.mxu0 %v2945
        %3034 = vmatpush1.bf16.msra.mxu0 %v2944
        %3035 = vmatprep.subr.bf16.mxu0 0
        %3036 = vmatpush1.bf16.msra.mxu0 0
        %3037 = vmatprep.subr.bf16.mxu0 0
        %3038 = vmatpush1.bf16.msra.mxu0 0
        %3039 = vmatprep.subr.bf16.mxu0 0
        %3040 = vmatpush1.bf16.msra.mxu0 0
        %3041 = vmatprep.subr.bf16.mxu0 0
        %3042 = vmatpush1.bf16.msra.mxu0 0
        %3043 = vmatprep.subr.bf16.mxu0 0
        %3044 = vmatpush1.bf16.msra.mxu0 0
        %3045 = vmatprep.subr.bf16.mxu0 0
        %3046 = vmatpush1.bf16.msra.mxu0 0
        %3047 = vmatprep.subr.bf16.mxu0 0
        %3048 = vmatpush1.bf16.msra.mxu0 0
        %3049 = vmatprep.subr.bf16.mxu0 0
        %3050 = vmatpush1.bf16.msra.mxu0 0
        %3051 = vmatprep.mubr.bf16.mxu0 0
        %3052 = vmatmul.mubr.bf16.gmra.mrb[0].mxu0 %v2761
        %v3053 = vpop.f32.mrb[0].mxu0
        %v3054 = vadd.f32 %v2809, %v3053
        %v3055 = vpop.f32.mrb[0].mxu0
        %v3056 = vadd.f32 %v2813, %v3055
        %v3057 = vpop.f32.mrb[0].mxu0
        %v3058 = vpop.f32.mrb[0].mxu0
        %3059 = vdwg.mxu0
        %v3060 = vmax.f32 %v3013, 0.0
        %v3061 = vmax.f32 %v3015, 0.0
        %v3062 = vmax.f32 %v3054, 0.0
        %v3063 = vmax.f32 %v3056, 0.0
        %v3064 = vpack.c.bf16 %v3060, %v3060
        %v3065 = vpack.c.bf16 %v3061, %v3061
        %v3066 = vpack.c.bf16 %v3062, %v3062
        %v3067 = vpack.c.bf16 %v3063, %v3063
        %s3068 = scalar_lea.vmem [#allocation7], 256
        %v3069 = vld [vmem:[%s3068] sm:$0xf]
        %v3070 = vld [vmem:[%s3068 + $0x4] sm:$0xf]
        %v3071 = vld [vmem:[%s3068 + $0x8] sm:$0xf]
        %v3072 = vld [vmem:[%s3068 + $0xc] sm:$0xf]
        %v3073 = vld [vmem:[%s3068 + $0x10] sm:$0xf]
        %v3074 = vld [vmem:[%s3068 + $0x14] sm:$0xf]
        %v3075 = vld [vmem:[%s3068 + $0x18] sm:$0xf]
        %v3076 = vld [vmem:[%s3068 + $0x1c] sm:$0xf]
        %v3077 = vld [vmem:[%s3068 + $0x20] sm:$0xf]
        %v3078 = vld [vmem:[%s3068 + $0x24] sm:$0xf]
        %v3079 = vld [vmem:[%s3068 + $0x28] sm:$0xf]
        %v3080 = vld [vmem:[%s3068 + $0x2c] sm:$0xf]
        %v3081 = vld [vmem:[%s3068 + $0x30] sm:$0xf]
        %v3082 = vld [vmem:[%s3068 + $0x34] sm:$0xf]
        %v3083 = vld [vmem:[%s3068 + $0x38] sm:$0xf]
        %v3084 = vld [vmem:[%s3068 + $0x3c] sm:$0xf]
        %v3085 = vld [vmem:[%s3068 + $0x40] sm:$0xf]
        %v3086 = vld [vmem:[%s3068 + $0x44] sm:$0xf]
        %v3087 = vld [vmem:[%s3068 + $0x48] sm:$0xf]
        %v3088 = vld [vmem:[%s3068 + $0x4c] sm:$0xf]
        %v3089 = vld [vmem:[%s3068 + $0x50] sm:$0xf]
        %v3090 = vld [vmem:[%s3068 + $0x54] sm:$0xf]
        %v3091 = vld [vmem:[%s3068 + $0x58] sm:$0xf]
        %v3092 = vld [vmem:[%s3068 + $0x5c] sm:$0xf]
        %v3093 = vld [vmem:[%s3068 + $0x60] sm:$0xf]
        %v3094 = vld [vmem:[%s3068 + $0x64] sm:$0xf]
        %v3095 = vld [vmem:[%s3068 + $0x68] sm:$0xf]
        %v3096 = vld [vmem:[%s3068 + $0x6c] sm:$0xf]
        %v3097 = vld [vmem:[%s3068 + $0x70] sm:$0xf]
        %v3098 = vld [vmem:[%s3068 + $0x74] sm:$0xf]
        %v3099 = vld [vmem:[%s3068 + $0x78] sm:$0xf]
        %v3100 = vld [vmem:[%s3068 + $0x7c] sm:$0xf]
        %v3101 = vld [vmem:[%s3068 + $0x80] sm:$0xf]
        %v3102 = vld [vmem:[%s3068 + $0x84] sm:$0xf]
        %v3103 = vld [vmem:[%s3068 + $0x88] sm:$0xf]
        %v3104 = vld [vmem:[%s3068 + $0x8c] sm:$0xf]
        %v3105 = vld [vmem:[%s3068 + $0x90] sm:$0xf]
        %v3106 = vld [vmem:[%s3068 + $0x94] sm:$0xf]
        %v3107 = vld [vmem:[%s3068 + $0x98] sm:$0xf]
        %v3108 = vld [vmem:[%s3068 + $0x9c] sm:$0xf]
        %v3109 = vld [vmem:[%s3068 + $0xa0] sm:$0xf]
        %v3110 = vld [vmem:[%s3068 + $0xa4] sm:$0xf]
        %v3111 = vld [vmem:[%s3068 + $0xa8] sm:$0xf]
        %v3112 = vld [vmem:[%s3068 + $0xac] sm:$0xf]
        %v3113 = vld [vmem:[%s3068 + $0xb0] sm:$0xf]
        %v3114 = vld [vmem:[%s3068 + $0xb4] sm:$0xf]
        %v3115 = vld [vmem:[%s3068 + $0xb8] sm:$0xf]
        %v3116 = vld [vmem:[%s3068 + $0xbc] sm:$0xf]
        %v3117 = vld [vmem:[%s3068 + $0xc0] sm:$0xf]
        %v3118 = vld [vmem:[%s3068 + $0xc4] sm:$0xf]
        %v3119 = vld [vmem:[%s3068 + $0xc8] sm:$0xf]
        %v3120 = vld [vmem:[%s3068 + $0xcc] sm:$0xf]
        %v3121 = vld [vmem:[%s3068 + $0xd0] sm:$0xf]
        %v3122 = vld [vmem:[%s3068 + $0xd4] sm:$0xf]
        %v3123 = vld [vmem:[%s3068 + $0xd8] sm:$0xf]
        %v3124 = vld [vmem:[%s3068 + $0xdc] sm:$0xf]
        %v3125 = vld [vmem:[%s3068 + $0xe0] sm:$0xf]
        %v3126 = vld [vmem:[%s3068 + $0xe4] sm:$0xf]
        %v3127 = vld [vmem:[%s3068 + $0xe8] sm:$0xf]
        %v3128 = vld [vmem:[%s3068 + $0xec] sm:$0xf]
        %v3129 = vld [vmem:[%s3068 + $0xf0] sm:$0xf]
        %v3130 = vld [vmem:[%s3068 + $0xf4] sm:$0xf]
        %v3131 = vld [vmem:[%s3068 + $0xf8] sm:$0xf]
        %v3132 = vld [vmem:[%s3068 + $0xfc] sm:$0xf]
        %s3133 = scalar_lea.vmem %s10, 1
        %v3134 = vld [vmem:[%s3133] sm:$0x1]
        %v3136 = vlaneseq
        %v3137 = vshrl.u32 %v3136, 7
        %v3138 = vsub.s32 0, %v3137
        %v3139 = vrot.slane %v3134, %v3138
        %v3205 = vunpack.c.l.b16 %v3069
        %v3206 = vunpack.c.l.b16 %v3070
        %v3207 = vunpack.c.l.b16 %v3071
        %v3208 = vunpack.c.l.b16 %v3072
        %v3209 = vunpack.c.l.b16 %v3073
        %v3210 = vunpack.c.l.b16 %v3074
        %v3211 = vunpack.c.l.b16 %v3075
        %v3212 = vunpack.c.l.b16 %v3076
        %v3213 = vunpack.c.l.b16 %v3077
        %v3214 = vunpack.c.l.b16 %v3078
        %v3215 = vunpack.c.l.b16 %v3079
        %v3216 = vunpack.c.l.b16 %v3080
        %v3217 = vunpack.c.l.b16 %v3081
        %v3218 = vunpack.c.l.b16 %v3082
        %v3219 = vunpack.c.l.b16 %v3083
        %v3220 = vunpack.c.l.b16 %v3084
        %v3221 = vunpack.c.l.b16 %v3085
        %v3222 = vunpack.c.l.b16 %v3086
        %v3223 = vunpack.c.l.b16 %v3087
        %v3224 = vunpack.c.l.b16 %v3088
        %v3225 = vunpack.c.l.b16 %v3089
        %v3226 = vunpack.c.l.b16 %v3090
        %v3227 = vunpack.c.l.b16 %v3091
        %v3228 = vunpack.c.l.b16 %v3092
        %v3229 = vunpack.c.l.b16 %v3093
        %v3230 = vunpack.c.l.b16 %v3094
        %v3231 = vunpack.c.l.b16 %v3095
        %v3232 = vunpack.c.l.b16 %v3096
        %v3233 = vunpack.c.l.b16 %v3097
        %v3234 = vunpack.c.l.b16 %v3098
        %v3235 = vunpack.c.l.b16 %v3099
        %v3236 = vunpack.c.l.b16 %v3100
        %v3237 = vunpack.c.l.b16 %v3101
        %v3238 = vunpack.c.l.b16 %v3102
        %v3239 = vunpack.c.l.b16 %v3103
        %v3240 = vunpack.c.l.b16 %v3104
        %v3241 = vunpack.c.l.b16 %v3105
        %v3242 = vunpack.c.l.b16 %v3106
        %v3243 = vunpack.c.l.b16 %v3107
        %v3244 = vunpack.c.l.b16 %v3108
        %v3245 = vunpack.c.l.b16 %v3109
        %v3246 = vunpack.c.l.b16 %v3110
        %v3247 = vunpack.c.l.b16 %v3111
        %v3248 = vunpack.c.l.b16 %v3112
        %v3249 = vunpack.c.l.b16 %v3113
        %v3250 = vunpack.c.l.b16 %v3114
        %v3251 = vunpack.c.l.b16 %v3115
        %v3252 = vunpack.c.l.b16 %v3116
        %v3253 = vunpack.c.l.b16 %v3117
        %v3254 = vunpack.c.l.b16 %v3118
        %v3255 = vunpack.c.l.b16 %v3119
        %v3256 = vunpack.c.l.b16 %v3120
        %v3257 = vunpack.c.l.b16 %v3121
        %v3258 = vunpack.c.l.b16 %v3122
        %v3259 = vunpack.c.l.b16 %v3123
        %v3260 = vunpack.c.l.b16 %v3124
        %v3261 = vunpack.c.l.b16 %v3125
        %v3262 = vunpack.c.l.b16 %v3126
        %v3263 = vunpack.c.l.b16 %v3127
        %v3264 = vunpack.c.l.b16 %v3128
        %v3265 = vunpack.c.l.b16 %v3129
        %v3266 = vunpack.c.l.b16 %v3130
        %v3267 = vunpack.c.l.b16 %v3131
        %v3268 = vunpack.c.l.b16 %v3132
        %v3269 = vpack.c.b16 %v3206, %v3205
        %v3270 = vpack.c.b16 %v3208, %v3207
        %v3271 = vpack.c.b16 %v3210, %v3209
        %v3272 = vpack.c.b16 %v3212, %v3211
        %v3273 = vpack.c.b16 %v3214, %v3213
        %v3274 = vpack.c.b16 %v3216, %v3215
        %v3275 = vpack.c.b16 %v3218, %v3217
        %v3276 = vpack.c.b16 %v3220, %v3219
        %v3277 = vpack.c.b16 %v3222, %v3221
        %v3278 = vpack.c.b16 %v3224, %v3223
        %v3279 = vpack.c.b16 %v3226, %v3225
        %v3280 = vpack.c.b16 %v3228, %v3227
        %v3281 = vpack.c.b16 %v3230, %v3229
        %v3282 = vpack.c.b16 %v3232, %v3231
        %v3283 = vpack.c.b16 %v3234, %v3233
        %v3284 = vpack.c.b16 %v3236, %v3235
        %v3285 = vpack.c.b16 %v3238, %v3237
        %v3286 = vpack.c.b16 %v3240, %v3239
        %v3287 = vpack.c.b16 %v3242, %v3241
        %v3288 = vpack.c.b16 %v3244, %v3243
        %v3289 = vpack.c.b16 %v3246, %v3245
        %v3290 = vpack.c.b16 %v3248, %v3247
        %v3291 = vpack.c.b16 %v3250, %v3249
        %v3292 = vpack.c.b16 %v3252, %v3251
        %v3293 = vpack.c.b16 %v3254, %v3253
        %v3294 = vpack.c.b16 %v3256, %v3255
        %v3295 = vpack.c.b16 %v3258, %v3257
        %v3296 = vpack.c.b16 %v3260, %v3259
        %v3297 = vpack.c.b16 %v3262, %v3261
        %v3298 = vpack.c.b16 %v3264, %v3263
        %v3299 = vpack.c.b16 %v3266, %v3265
        %v3300 = vpack.c.b16 %v3268, %v3267
        %3333 = vmatprep.subr.bf16.mxu0 0
        %3334 = vmatpush1.bf16.msra.mxu0 %v3269
        %3335 = vmatprep.subr.bf16.mxu0 0
        %3336 = vmatpush1.bf16.msra.mxu0 %v3270
        %3337 = vmatprep.subr.bf16.mxu0 0
        %3338 = vmatpush1.bf16.msra.mxu0 %v3271
        %3339 = vmatprep.subr.bf16.mxu0 0
        %3340 = vmatpush1.bf16.msra.mxu0 %v3272
        %3341 = vmatprep.subr.bf16.mxu0 0
        %3342 = vmatpush1.bf16.msra.mxu0 %v3273
        %3343 = vmatprep.subr.bf16.mxu0 0
        %3344 = vmatpush1.bf16.msra.mxu0 %v3274
        %3345 = vmatprep.subr.bf16.mxu0 0
        %3346 = vmatpush1.bf16.msra.mxu0 %v3275
        %3347 = vmatprep.subr.bf16.mxu0 0
        %3348 = vmatpush1.bf16.msra.mxu0 %v3276
        %3349 = vmatprep.subr.bf16.mxu0 0
        %3350 = vmatpush1.bf16.msra.mxu0 %v3277
        %3351 = vmatprep.subr.bf16.mxu0 0
        %3352 = vmatpush1.bf16.msra.mxu0 %v3278
        %3353 = vmatprep.subr.bf16.mxu0 0
        %3354 = vmatpush1.bf16.msra.mxu0 %v3279
        %3355 = vmatprep.subr.bf16.mxu0 0
        %3356 = vmatpush1.bf16.msra.mxu0 %v3280
        %3357 = vmatprep.subr.bf16.mxu0 0
        %3358 = vmatpush1.bf16.msra.mxu0 %v3281
        %3359 = vmatprep.subr.bf16.mxu0 0
        %3360 = vmatpush1.bf16.msra.mxu0 %v3282
        %3361 = vmatprep.subr.bf16.mxu0 0
        %3362 = vmatpush1.bf16.msra.mxu0 %v3283
        %3363 = vmatprep.subr.bf16.mxu0 0
        %3364 = vmatpush1.bf16.msra.mxu0 %v3284
        %3365 = vmatprep.mubr.bf16.mxu0 %v3065
        %3366 = vmatmul.mubr.bf16.gmra.mrb[0].mxu0 %v3064
        %v3367 = vpop.f32.mrb[0].mxu0
        %v3368 = vadd.f32 %v3139, %v3367
        %v3369 = vpop.f32.mrb[0].mxu0
        %v3370 = vpop.f32.mrb[0].mxu0
        %v3371 = vpop.f32.mrb[0].mxu0
        %3372 = vdwg.mxu0
        %3373 = vmatprep.subr.bf16.mxu0 0
        %3374 = vmatpush1.bf16.msra.mxu0 %v3285
        %3375 = vmatprep.subr.bf16.mxu0 0
        %3376 = vmatpush1.bf16.msra.mxu0 %v3286
        %3377 = vmatprep.subr.bf16.mxu0 0
        %3378 = vmatpush1.bf16.msra.mxu0 %v3287
        %3379 = vmatprep.subr.bf16.mxu0 0
        %3380 = vmatpush1.bf16.msra.mxu0 %v3288
        %3381 = vmatprep.subr.bf16.mxu0 0
        %3382 = vmatpush1.bf16.msra.mxu0 %v3289
        %3383 = vmatprep.subr.bf16.mxu0 0
        %3384 = vmatpush1.bf16.msra.mxu0 %v3290
        %3385 = vmatprep.subr.bf16.mxu0 0
        %3386 = vmatpush1.bf16.msra.mxu0 %v3291
        %3387 = vmatprep.subr.bf16.mxu0 0
        %3388 = vmatpush1.bf16.msra.mxu0 %v3292
        %3389 = vmatprep.subr.bf16.mxu0 0
        %3390 = vmatpush1.bf16.msra.mxu0 %v3293
        %3391 = vmatprep.subr.bf16.mxu0 0
        %3392 = vmatpush1.bf16.msra.mxu0 %v3294
        %3393 = vmatprep.subr.bf16.mxu0 0
        %3394 = vmatpush1.bf16.msra.mxu0 %v3295
        %3395 = vmatprep.subr.bf16.mxu0 0
        %3396 = vmatpush1.bf16.msra.mxu0 %v3296
        %3397 = vmatprep.subr.bf16.mxu0 0
        %3398 = vmatpush1.bf16.msra.mxu0 %v3297
        %3399 = vmatprep.subr.bf16.mxu0 0
        %3400 = vmatpush1.bf16.msra.mxu0 %v3298
        %3401 = vmatprep.subr.bf16.mxu0 0
        %3402 = vmatpush1.bf16.msra.mxu0 %v3299
        %3403 = vmatprep.subr.bf16.mxu0 0
        %3404 = vmatpush1.bf16.msra.mxu0 %v3300
        %3405 = vmatprep.mubr.bf16.mxu0 %v3067
        %3406 = vmatmul.mubr.bf16.gmra.mrb[0].mxu0 %v3066
        %v3407 = vpop.f32.mrb[0].mxu0
        %v3408 = vadd.f32 %v3368, %v3407
        %v3409 = vpop.f32.mrb[0].mxu0
        %v3410 = vpop.f32.mrb[0].mxu0
        %v3411 = vpop.f32.mrb[0].mxu0
        %3412 = vdwg.mxu0
        %v3413 = vadd.f32 %v2731, %v3408
        %v3414 = vld [vmem:[%s11] sm:$0x1]
        %v3415 = vld [vmem:[%s12] sm:$0x1]
        %3416 = vadd.xlane.f32.xlu0 %v3413
        %v3417 = vpop.xlane.xlu0 %3416
        %v3418 = vmul.f32 %v3417, %v547
        %v3419 = vsub.f32 %v3413, %v3418
        %v3420 = vmul.f32 %v3419, %v3419
        %3421 = vadd.xlane.f32.xlu0 %v3420
        %v3422 = vpop.xlane.xlu0 %3421
        %v3423 = vmul.f32 %v3422, %v547
        %v3424 = vadd.f32 %v3423, 1e-05
        %v3425 = vrsqrt.pop %v3424
        %v3426 = vmul.f32 %v3419, %v3425
        %v3428 = vlaneseq
        %v3429 = vshrl.u32 %v3428, 7
        %v3430 = vsub.s32 0, %v3429
        %v3431 = vrot.slane %v3414, %v3430
        %v3433 = vmul.f32 %v3426, %v3431
        %v3435 = vlaneseq
        %v3436 = vshrl.u32 %v3435, 7
        %v3437 = vsub.s32 0, %v3436
        %v3438 = vrot.slane %v3415, %v3437
        %v3440 = vadd.f32 %v3433, %v3438
        %v3441 = vpack.c.bf16 %v3440, %v3440
        %v3442 = vld [vmem:[%s13] sm:$0xf]
        %v3443 = vld [vmem:[%s13 + $0x4] sm:$0xf]
        %v3444 = vld [vmem:[%s13 + $0x8] sm:$0xf]
        %v3445 = vld [vmem:[%s13 + $0xc] sm:$0xf]
        %v3446 = vld [vmem:[%s13 + $0x10] sm:$0xf]
        %v3447 = vld [vmem:[%s13 + $0x14] sm:$0xf]
        %v3448 = vld [vmem:[%s13 + $0x18] sm:$0xf]
        %v3449 = vld [vmem:[%s13 + $0x1c] sm:$0xf]
        %v3450 = vld [vmem:[%s13 + $0x20] sm:$0xf]
        %v3451 = vld [vmem:[%s13 + $0x24] sm:$0xf]
        %v3452 = vld [vmem:[%s13 + $0x28] sm:$0xf]
        %v3453 = vld [vmem:[%s13 + $0x2c] sm:$0xf]
        %v3454 = vld [vmem:[%s13 + $0x30] sm:$0xf]
        %v3455 = vld [vmem:[%s13 + $0x34] sm:$0xf]
        %v3456 = vld [vmem:[%s13 + $0x38] sm:$0xf]
        %v3457 = vld [vmem:[%s13 + $0x3c] sm:$0xf]
        %v3458 = vld [vmem:[%s14] sm:$0x1]
        %v3460 = vlaneseq
        %v3461 = vshrl.u32 %v3460, 7
        %v3462 = vsub.s32 0, %v3461
        %v3463 = vrot.slane %v3458, %v3462
        %v3481 = vunpack.c.l.b16 %v3442
        %v3482 = vunpack.c.l.b16 %v3443
        %v3483 = vunpack.c.l.b16 %v3444
        %v3484 = vunpack.c.l.b16 %v3445
        %v3485 = vunpack.c.l.b16 %v3446
        %v3486 = vunpack.c.l.b16 %v3447
        %v3487 = vunpack.c.l.b16 %v3448
        %v3488 = vunpack.c.l.b16 %v3449
        %v3489 = vunpack.c.l.b16 %v3450
        %v3490 = vunpack.c.l.b16 %v3451
        %v3491 = vunpack.c.l.b16 %v3452
        %v3492 = vunpack.c.l.b16 %v3453
        %v3493 = vunpack.c.l.b16 %v3454
        %v3494 = vunpack.c.l.b16 %v3455
        %v3495 = vunpack.c.l.b16 %v3456
        %v3496 = vunpack.c.l.b16 %v3457
        %v3497 = vpack.c.b16 %v3482, %v3481
        %v3498 = vpack.c.b16 %v3484, %v3483
        %v3499 = vpack.c.b16 %v3486, %v3485
        %v3500 = vpack.c.b16 %v3488, %v3487
        %v3501 = vpack.c.b16 %v3490, %v3489
        %v3502 = vpack.c.b16 %v3492, %v3491
        %v3503 = vpack.c.b16 %v3494, %v3493
        %v3504 = vpack.c.b16 %v3496, %v3495
        %3513 = vmatprep.subr.bf16.mxu0 0
        %3514 = vmatpush1.bf16.msra.mxu0 %v3497
        %3515 = vmatprep.subr.bf16.mxu0 0
        %3516 = vmatpush1.bf16.msra.mxu0 %v3498
        %3517 = vmatprep.subr.bf16.mxu0 0
        %3518 = vmatpush1.bf16.msra.mxu0 %v3499
        %3519 = vmatprep.subr.bf16.mxu0 0
        %3520 = vmatpush1.bf16.msra.mxu0 %v3500
        %3521 = vmatprep.subr.bf16.mxu0 0
        %3522 = vmatpush1.bf16.msra.mxu0 %v3501
        %3523 = vmatprep.subr.bf16.mxu0 0
        %3524 = vmatpush1.bf16.msra.mxu0 %v3502
        %3525 = vmatprep.subr.bf16.mxu0 0
        %3526 = vmatpush1.bf16.msra.mxu0 %v3503
        %3527 = vmatprep.subr.bf16.mxu0 0
        %3528 = vmatpush1.bf16.msra.mxu0 %v3504
        %3529 = vmatprep.subr.bf16.mxu0 0
        %3530 = vmatpush1.bf16.msra.mxu0 0
        %3531 = vmatprep.subr.bf16.mxu0 0
        %3532 = vmatpush1.bf16.msra.mxu0 0
        %3533 = vmatprep.subr.bf16.mxu0 0
        %3534 = vmatpush1.bf16.msra.mxu0 0
        %3535 = vmatprep.subr.bf16.mxu0 0
        %3536 = vmatpush1.bf16.msra.mxu0 0
        %3537 = vmatprep.subr.bf16.mxu0 0
        %3538 = vmatpush1.bf16.msra.mxu0 0
        %3539 = vmatprep.subr.bf16.mxu0 0
        %3540 = vmatpush1.bf16.msra.mxu0 0
        %3541 = vmatprep.subr.bf16.mxu0 0
        %3542 = vmatpush1.bf16.msra.mxu0 0
        %3543 = vmatprep.subr.bf16.mxu0 0
        %3544 = vmatpush1.bf16.msra.mxu0 0
        %3545 = vmatprep.mubr.bf16.mxu0 0
        %3546 = vmatmul.mubr.bf16.gmra.mrb[0].mxu0 %v3441
        %v3547 = vpop.f32.mrb[0].mxu0
        %v3548 = vadd.f32 %v3463, %v3547
        %v3549 = vpop.f32.mrb[0].mxu0
        %v3550 = vpop.f32.mrb[0].mxu0
        %v3551 = vpop.f32.mrb[0].mxu0
        %3552 = vdwg.mxu0
        %3553 = vst [vmem:[%s529] sm:$0xff] %v3548
        %s3554 = sand.u32 %s359, 1
        %s3555 = scalar_lea.sflag [#allocation4], %s3554
        %s3556 = sand.u32 %s359, 1
        %s3557 = smul.addr %s3556, 8
        %s3558 = scalar_lea.vmem [#allocation8], %s3557
        // Predicated region
        $region93: #{xpt_forward.1} parent=79 // pred_check
          %p3559 = pneg %p369
        $region94: #{xpt_forward.1} parent=79 // pred_check_branch
          %3561 = sbr.rel (%p3559) target = $region96
        $region95: #{xpt_forward.1} parent=79 // pred_region
          %s3563 = ssub.s32 128, 128
          %3564 = vsyncadd %s3555, %s3563
          %s3565 = smul.addr %s31, 128
          %s3566 = scalar_lea.hbm %s15, %s3565
          %s3568 = sshll.u32 %s3558, 4
          %s3569 = int_to_ptr.vmem [resolvable:$true] %s3568
          %3571 = dma.vmem_to_hbm [thread:$0]  %s3569, 128, %s3566, %s3555
        $region96: #{xpt_forward.1} parent=79 // pred_fallthru
          _
      $region80: #{xpt_forward.1} parent=5 // pred_fallthru
        _
      %p3572 = scmp.le.s32.totalorder 2, %s26
      // Predicated region
      $region97: #{xpt_forward.1} parent=5 // pred_check
        %p3573 = pneg %p3572
      $region98: #{xpt_forward.1} parent=5 // pred_check_branch
        %3575 = sbr.rel (%p3573) target = $region100
      $region99: #{xpt_forward.1} parent=5 // pred_region
        %s3576 = ssub.s32 %s26, 2
        // Predicated region
        $region101: #{xpt_forward.1} parent=99 // pred_check
          %p3577 = pneg %p375
        $region102: #{xpt_forward.1} parent=99 // pred_check_branch
          %3579 = sbr.rel (%p3577) target = $region104
        $region103: #{xpt_forward.1} parent=99 // pred_region
          %s3580 = sand.u32 %s360, 1
          %s3581 = scalar_lea.sflag [#allocation4], %s3580
          %s3582 = sand.u32 %s360, 1
          %s3583 = smul.addr %s3582, 8
          %s3584 = scalar_lea.vmem [#allocation8], %s3583
          %3585 = dma.done %s3581, 128
        $region104: #{xpt_forward.1} parent=99 // pred_fallthru
          _
      $region100: #{xpt_forward.1} parent=5 // pred_fallthru
        _
    $region6: #{xpt_forward.1} parent=1 // loop_footer
      %s30 = sadd.s32 1, %s26
    $region7: #{xpt_forward.1} parent=1 // loop_footer_branch
      %25 = sbr.rel target = $region3
    $region8: #{xpt_forward.1} parent=1 // loop_exit
      _
    %3586 = vsyncpa [#allocation3], 1
    %s3587 = scalar_lea.sflag [#allocation3], 1
    %3588 = vsyncpa %s3587, 1
    %3589 = vsyncpa [#allocation6], 1
    %3590 = vsyncpa [#allocation4], 1
    %s3591 = scalar_lea.sflag [#allocation4], 1
    %3592 = vsyncpa %s3591, 1

</llo_original>
